<compile_context>
chip_gen: v6e
topology: v6e:2x2x1
jax: 0.10.0
libtpu: 0.0.40
codegen_flags: <defaults>
</compile_context>

<pallas_src>
import functools

import jax
import jax.numpy as jnp
from jax.experimental import pallas as pl
from jax.experimental.pallas import tpu as pltpu

KERNEL_SHAPE = 3                  # module default; F.pad(..., (2, 0)) assumes it
_KC = KERNEL_SHAPE - 1            # causal-context length
_SQRT_2_OVER_PI = 0.7978845608028654
_LN_EPS = 1e-5


def _gelu_tanh(x):
  # F.gelu(x, approximate='tanh')
  return 0.5 * x * (1.0 + jnp.tanh(_SQRT_2_OVER_PI * (x + 0.044715 * x * x * x)))


def _device_kind():
  try:
    return jax.devices()[0].device_kind.lower()
  except Exception:
    return ""


def _blockspec_supports_pipeline_mode():
  try:
    pl.BlockSpec((8, 128), lambda i: (0, 0), pipeline_mode=pl.Buffered(1))
    return True
  except Exception:
    return False


_HAS_PIPELINE_MODE = _blockspec_supports_pipeline_mode()


def _make_kernel(t_valid, ew_dtype):
  """t_valid: number of real (unpadded) frames; ew_dtype: gelu/elementwise dtype."""

  def kernel(
      # inputs (per-batch-block)
      x_ref, cc1_ref, cc2_ref,
      # parameters (full, single-buffered; conv2 already folded with group pool)
      ln_w_ref, w1_ref, b1_ref, w2_ref, b2_ref,
      ln1_w_ref, up_w_ref, up_b_ref, down_w_ref, down_b_ref,
      # outputs (per-batch-block)
      out_ref, ncc_ref,
      # bf16 scratch: [causal_context ; activations] cat buffers
      cat1_ref, cat2_ref,
  ):
    bblk, T, C = x_ref.shape
    C4 = 4 * C
    M = bblk * T

    x3 = x_ref[...].astype(jnp.float32)                 # (bblk, T, C)
    x = x3.reshape(M, C)

    # ---- layer_norm (elementwise_affine=True, bias=False), stats in f32 ----
    mean = jnp.mean(x, axis=-1, keepdims=True)
    var = jnp.mean((x - mean) ** 2, axis=-1, keepdims=True)
    xn = (x - mean) * jax.lax.rsqrt(var + _LN_EPS) * ln_w_ref[...]
    xn_bf = xn.astype(jnp.bfloat16)                     # cast once for MXU/scratch

    # ---- process_step1: causal Conv1d(C -> 4C, k=3), only the kept T rows ----
    cat1_ref[:, :_KC, :] = cc1_ref[...].astype(jnp.bfloat16)
    cat1_ref[:, _KC:, :] = xn_bf.reshape(bblk, T, C)
    # last tap straight from the in-register value; earlier taps from scratch
    h = jnp.dot(xn_bf, w1_ref[KERNEL_SHAPE - 1],
                preferred_element_type=jnp.float32)
    for k in range(KERNEL_SHAPE - 1):
      h += jnp.dot(cat1_ref[:, k:k + T, :].reshape(M, C),
                   w1_ref[k], preferred_element_type=jnp.float32)
    h = _gelu_tanh((h + b1_ref[...]).astype(ew_dtype))  # (M, 4C)
    h_bf = h.astype(jnp.bfloat16)

    # ---- process_step2: causal Conv1d(4C -> 4C) with the group pool folded ----
    cat2_ref[:, :_KC, :] = cc2_ref[...].astype(jnp.bfloat16)
    cat2_ref[:, _KC:, :] = h_bf.reshape(bblk, T, C4)
    y = jnp.dot(h_bf, w2_ref[KERNEL_SHAPE - 1],
                preferred_element_type=jnp.float32)
    for k in range(KERNEL_SHAPE - 1):
      y += jnp.dot(cat2_ref[:, k:k + T, :].reshape(M, C4),
                   w2_ref[k], preferred_element_type=jnp.float32)
    y = y + b2_ref[...] + x                             # + to_skip   (M, C), f32

    # ---- new causal context: last KC *valid* frames of [LN(x) | gelu(conv1)] ----
    t0, t1 = t_valid - _KC, t_valid
    ncc_ref[:, :, :C] = xn.reshape(bblk, T, C)[:, t0:t1, :].astype(ncc_ref.dtype)
    ncc_ref[:, :, C:] = h.reshape(bblk, T, C4)[:, t0:t1, :].astype(ncc_ref.dtype)

    # ---- layer_norm_1 + ConvChannelsMixer + residual ----
    mean1 = jnp.mean(y, axis=-1, keepdims=True)
    var1 = jnp.mean((y - mean1) ** 2, axis=-1, keepdims=True)
    yn = (y - mean1) * jax.lax.rsqrt(var1 + _LN_EPS) * ln1_w_ref[...]
    u = _gelu_tanh((jnp.dot(yn.astype(jnp.bfloat16), up_w_ref[...],
                            preferred_element_type=jnp.float32)
                    + up_b_ref[...]).astype(ew_dtype))
    d = jnp.dot(u.astype(jnp.bfloat16), down_w_ref[...],
                preferred_element_type=jnp.float32) + down_b_ref[...]
    out_ref[...] = (d + y).reshape(bblk, T, C).astype(out_ref.dtype)

  return kernel


def pips_conv_block(x, cc1, cc2, params, *, target_rows=512,
                    single_buffer_weights=True, bf16_elementwise=None):
  """x: (B,T,C), cc1: (B,2,C), cc2: (B,2,4C) -> ((B,T,C), (B,2,5C))."""
  B, T, C = x.shape
  C4 = 4 * C
  assert T >= _KC, "need at least kernel_shape-1 frames"
  ln_w, w1, b1, w2, b2, ln1_w, up_w, up_b, down_w, down_b = params

  kind = _device_kind()
  if bf16_elementwise is None:
    # bf16 VPU/EUP exist on v6e/v7x; v5e (and unknown chips) stay f32.
    bf16_elementwise = ("v6" in kind) or ("v7" in kind)
  ew_dtype = jnp.bfloat16 if bf16_elementwise else jnp.float32

  # Fold x.view(..., -1, 4).sum(-1) into the second conv (exactly linear).
  gp = (jnp.arange(C4)[:, None] // 4 == jnp.arange(C)[None, :]).astype(jnp.float32)
  w2f = jnp.einsum('kco,oj->kcj', w2.astype(jnp.float32), gp)      # (K, 4C, C)
  b2f = b2.astype(jnp.float32) @ gp                                # (1, C)

  # Conv / mixer weights in bf16 (f32 accumulation inside the kernel).
  w1b = w1.astype(jnp.bfloat16)
  w2b = w2f.astype(jnp.bfloat16)
  up_wb = up_w.astype(jnp.bfloat16)
  down_wb = down_w.astype(jnp.bfloat16)
  ln_wf = ln_w.astype(jnp.float32)
  ln1_wf = ln1_w.astype(jnp.float32)
  b1f = b1.astype(jnp.float32)
  up_bf = up_b.astype(jnp.float32)
  down_bf = down_b.astype(jnp.float32)

  # ---- pad T to a multiple of 8 so all (bblk,T,C)<->(M,C) reshapes are free ----
  T_pad = -(-T // 8) * 8
  if T_pad != T:
    x = jnp.pad(x, ((0, 0), (0, T_pad - T), (0, 0)))

  # ---- batch packing: pad B so bblk*T_pad ~ target_rows regardless of B ----
  cap = max(1, target_rows // T_pad)                # batch elems per grid step
  num_steps = max(1, -(-B // cap))
  if B > 1:
    num_steps = max(num_steps, 2)                   # >=2 steps -> both v7x TCs
  bblk = -(-B // num_steps)
  Bp = num_steps * bblk
  if Bp != B:
    x = jnp.pad(x, ((0, Bp - B), (0, 0), (0, 0)))
    cc1 = jnp.pad(cc1, ((0, Bp - B), (0, 0), (0, 0)))
    cc2 = jnp.pad(cc2, ((0, Bp - B), (0, 0), (0, 0)))
  grid = (Bp // bblk,)
  M = bblk * T_pad

  use_buffered = single_buffer_weights and _HAS_PIPELINE_MODE

  def batch_spec(trailing):
    return pl.BlockSpec((bblk,) + trailing, lambda b: (b, 0, 0))

  def weight_spec(shape):
    idx = lambda b, _n=len(shape): (0,) * _n
    if use_buffered:
      # constant index_map -> fetched once; no need for a second buffer.
      return pl.BlockSpec(shape, idx, pipeline_mode=pl.Buffered(1))
    return pl.BlockSpec(shape, idx)

  # ---- per-generation VMEM budget (weights + double-buffered blocks + scratch) ----
  wbuf = 1 if use_buffered else 2
  bf16_w_elems = (KERNEL_SHAPE * C * C4 + KERNEL_SHAPE * C4 * C + C * C4 + C4 * C)
  f32_w_elems = 4 * C + 2 * C4                        # gammas + biases
  weight_bytes = wbuf * (2 * bf16_w_elems + 4 * f32_w_elems)
  blk_elems = bblk * (2 * T_pad * C + _KC * C + _KC * C4 + _KC * 5 * C)
  act_bytes = 2 * 4 * blk_elems                       # in/out blocks, double-buffered
  scratch_bytes = 2 * bblk * (T_pad + _KC) * (C + C4)  # bf16 cat buffers
  temp_bytes = 6 * 4 * M * C4                          # headroom for h/u/y temporaries
  need = weight_bytes + act_bytes + scratch_bytes + temp_bytes + (4 << 20)
  vmem_cap = (48 << 20) if "v7" in kind else (100 << 20)
  vmem_limit = int(min(max(need, 32 << 20), vmem_cap))

  kernel = _make_kernel(T, ew_dtype)

  out, ncc = pl.pallas_call(
      kernel,
      out_shape=(
          jax.ShapeDtypeStruct((Bp, T_pad, C), x.dtype),
          jax.ShapeDtypeStruct((Bp, _KC, 5 * C), x.dtype),
      ),
      grid_spec=pltpu.PrefetchScalarGridSpec(
          num_scalar_prefetch=0,
          grid=grid,
          in_specs=[
              batch_spec((T_pad, C)),                  # x
              batch_spec((_KC, C)),                    # causal_context_1
              batch_spec((_KC, C4)),                   # causal_context_2
              weight_spec((1, C)),                     # layer_norm gamma (f32)
              weight_spec((KERNEL_SHAPE, C, C4)),      # mlp1_up   (K,Cin,Cout) bf16
              weight_spec((1, C4)),                    # mlp1_up bias (f32)
              weight_spec((KERNEL_SHAPE, C4, C)),      # mlp1_up_1 folded w/ pool, bf16
              weight_spec((1, C)),                     # folded bias (f32)
              weight_spec((1, C)),                     # layer_norm_1 gamma (f32)
              weight_spec((C, C4)),                    # mlp2_up bf16
              weight_spec((1, C4)),                    # mlp2_up bias (f32)
              weight_spec((C4, C)),                    # mlp2_down bf16
              weight_spec((1, C)),                     # mlp2_down bias (f32)
          ],
          out_specs=[
              batch_spec((T_pad, C)),
              batch_spec((_KC, 5 * C)),
          ],
          scratch_shapes=[
              pltpu.VMEM((bblk, T_pad + _KC, C), jnp.bfloat16),
              pltpu.VMEM((bblk, T_pad + _KC, C4), jnp.bfloat16),
          ],
      ),
      compiler_params=pltpu.CompilerParams(
          dimension_semantics=("parallel",),
          vmem_limit_bytes=vmem_limit),
  )(x, cc1, cc2, ln_wf, w1b, b1f, w2b, b2f, ln1_wf, up_wb, up_bf, down_wb, down_bf)

  if Bp != B or T_pad != T:
    out = out[:B, :T]
    ncc = ncc[:B]
  return out, ncc


def _reference(x, cc1, cc2, params):
  """Pure-JAX (f32) mirror of the PyTorch forward (causal-conv config)."""
  ln_w, w1, b1, w2, b2, ln1_w, up_w, up_b, down_w, down_b = params
  B, T, C = x.shape

  def ln(v, w):
    m = v.mean(-1, keepdims=True)
    s = ((v - m) ** 2).mean(-1, keepdims=True)
    return (v - m) / jnp.sqrt(s + _LN_EPS) * w

  xn = ln(x, ln_w[0])
  cat1 = jnp.concatenate([cc1, xn], axis=1)                   # (B, T+2, C)
  ncc_a = cat1[:, -_KC:, :]
  p1 = jnp.pad(cat1, ((0, 0), (2, 0), (0, 0)))                # (B, T+4, C)
  h = sum(jnp.einsum('blc,cd->bld', p1[:, k:k + T + 2, :], w1[k])
          for k in range(KERNEL_SHAPE)) + b1[0]
  h = _gelu_tanh(h)
  cat2 = jnp.concatenate([cc2, h[:, 2:, :]], axis=1)          # (B, T+2, 4C)
  ncc_b = cat2[:, -_KC:, :]
  p2 = jnp.pad(cat2, ((0, 0), (2, 0), (0, 0)))
  g = sum(jnp.einsum('blc,cd->bld', p2[:, k:k + T + 2, :], w2[k])
          for k in range(KERNEL_SHAPE)) + b2[0]
  g = g[:, 2:, :]
  g = g.reshape(B, T, C, 4).sum(-1)
  y = g + x
  yn = ln(y, ln1_w[0])
  u = _gelu_tanh(yn @ up_w + up_b[0])
  d = u @ down_w + down_b[0]
  return d + y, jnp.concatenate([ncc_a, ncc_b], axis=-1)


def _make_params(key, C):
  C4 = 4 * C
  ks = jax.random.split(key, 10)
  n = lambda k, shape, s=0.1: (s * jax.random.normal(k, shape)).astype(jnp.float32)
  ln_w = (1.0 + n(ks[0], (1, C))).astype(jnp.float32)          # layer_norm gamma
  w1 = n(ks[1], (KERNEL_SHAPE, C, C4))                         # mlp1_up
  b1 = n(ks[2], (1, C4))
  w2 = n(ks[3], (KERNEL_SHAPE, C4, C4))                        # mlp1_up_1
  b2 = n(ks[4], (1, C4))
  ln1_w = (1.0 + n(ks[5], (1, C))).astype(jnp.float32)         # layer_norm_1 gamma
  up_w = n(ks[6], (C, C4))                                     # mlp2_up
  up_b = n(ks[7], (1, C4))
  down_w = n(ks[8], (C4, C))                                   # mlp2_down
  down_b = n(ks[9], (1, C))
  return (ln_w, w1, b1, w2, b2, ln1_w, up_w, up_b, down_w, down_b)


if __name__ == "__main__":
  B, T, C = 2, 8, 16
  C4 = 4 * C

  key = jax.random.PRNGKey(0)
  kx, k1, k2, kp = jax.random.split(key, 4)
  x = jax.random.normal(kx, (B, T, C), dtype=jnp.float32)
  causal_context_1 = jax.random.normal(k1, (B, _KC, C), dtype=jnp.float32)
  causal_context_2 = jax.random.normal(k2, (B, _KC, C4), dtype=jnp.float32)
  params = _make_params(kp, C)

  try:
    fn = jax.jit(pips_conv_block)
    out, new_ctx = fn(x, causal_context_1, causal_context_2, params)
    out = jax.block_until_ready(out)
    new_ctx = jax.block_until_ready(new_ctx)
  except Exception:
    # Conservative fallback (double-buffered weights, f32 elementwise) in case a
    # backend rejects Buffered(1) or bf16 elementwise lowering.
    fn = jax.jit(functools.partial(pips_conv_block,
                                   single_buffer_weights=False,
                                   bf16_elementwise=False))
    out, new_ctx = fn(x, causal_context_1, causal_context_2, params)
    out = jax.block_until_ready(out)
    new_ctx = jax.block_until_ready(new_ctx)

  ref_out, ref_ctx = _reference(x, causal_context_1, causal_context_2, params)
  assert out.shape == (B, T, C) and new_ctx.shape == (B, _KC, 5 * C)
  # bf16 weights / matmul inputs (and bf16 gelu on v6e/v7x) vs. pure-f32 reference.
  assert jnp.allclose(out, ref_out, rtol=2e-2, atol=6e-2), (
      float(jnp.max(jnp.abs(out - ref_out))))
  assert jnp.allclose(new_ctx, ref_ctx, rtol=2e-2, atol=3e-2), (
      float(jnp.max(jnp.abs(new_ctx - ref_ctx))))

  print("KERNEL_OK")
</pallas_src>

<mosaic_0001>
module attributes {stable_mosaic.version = 11 : i64} {
  func.func @kernel(%arg0: i32, %arg1: memref<1x8x16xf32, #tpu.memory_space<vmem>>, %arg2: memref<1x2x16xf32, #tpu.memory_space<vmem>>, %arg3: memref<1x2x64xf32, #tpu.memory_space<vmem>>, %arg4: memref<1x16xf32, #tpu.memory_space<vmem>>, %arg5: memref<3x16x64xbf16, #tpu.memory_space<vmem>>, %arg6: memref<1x64xf32, #tpu.memory_space<vmem>>, %arg7: memref<3x64x16xbf16, #tpu.memory_space<vmem>>, %arg8: memref<1x16xf32, #tpu.memory_space<vmem>>, %arg9: memref<1x16xf32, #tpu.memory_space<vmem>>, %arg10: memref<16x64xbf16, #tpu.memory_space<vmem>>, %arg11: memref<1x64xf32, #tpu.memory_space<vmem>>, %arg12: memref<64x16xbf16, #tpu.memory_space<vmem>>, %arg13: memref<1x16xf32, #tpu.memory_space<vmem>>, %arg14: memref<1x8x16xf32, #tpu.memory_space<vmem>>, %arg15: memref<1x2x80xf32, #tpu.memory_space<vmem>>, %arg16: memref<1x10x16xbf16, #tpu.memory_space<vmem>>, %arg17: memref<1x10x64xbf16, #tpu.memory_space<vmem>>) attributes {dimension_semantics = [#tpu.dimension_semantics<parallel>], iteration_bounds = array<i64: 2>, scalar_prefetch = 0 : i64, scratch_operands = 2 : i64, tpu.core_type = #tpu.core_type<tc>, window_params = [{transform_indices = @transform_0, window_bounds = array<i64: 1, 8, 16>}, {transform_indices = @transform_1, window_bounds = array<i64: 1, 2, 16>}, {transform_indices = @transform_2, window_bounds = array<i64: 1, 2, 64>}, {pipeline_mode = #tpu.pipeline_mode<synchronous>, transform_indices = @transform_3, window_bounds = array<i64: 1, 16>}, {pipeline_mode = #tpu.pipeline_mode<synchronous>, transform_indices = @transform_4, window_bounds = array<i64: 3, 16, 64>}, {pipeline_mode = #tpu.pipeline_mode<synchronous>, transform_indices = @transform_5, window_bounds = array<i64: 1, 64>}, {pipeline_mode = #tpu.pipeline_mode<synchronous>, transform_indices = @transform_6, window_bounds = array<i64: 3, 64, 16>}, {pipeline_mode = #tpu.pipeline_mode<synchronous>, transform_indices = @transform_7, window_bounds = array<i64: 1, 16>}, {pipeline_mode = #tpu.pipeline_mode<synchronous>, transform_indices = @transform_8, window_bounds = array<i64: 1, 16>}, {pipeline_mode = #tpu.pipeline_mode<synchronous>, transform_indices = @transform_9, window_bounds = array<i64: 16, 64>}, {pipeline_mode = #tpu.pipeline_mode<synchronous>, transform_indices = @transform_10, window_bounds = array<i64: 1, 64>}, {pipeline_mode = #tpu.pipeline_mode<synchronous>, transform_indices = @transform_11, window_bounds = array<i64: 64, 16>}, {pipeline_mode = #tpu.pipeline_mode<synchronous>, transform_indices = @transform_12, window_bounds = array<i64: 1, 16>}, {transform_indices = @transform_13, window_bounds = array<i64: 1, 8, 16>}, {transform_indices = @transform_14, window_bounds = array<i64: 1, 2, 80>}]} {
    %c0 = arith.constant 0 : index
    %c0_0 = arith.constant 0 : index
    %c0_1 = arith.constant 0 : index
    %0 = vector.load %arg1[%c0, %c0_0, %c0_1] : memref<1x8x16xf32, #tpu.memory_space<vmem>>, vector<1x8x16xf32>
    %1 = vector.shape_cast %0 : vector<1x8x16xf32> to vector<8x16xf32>
    %cst = arith.constant dense<0.000000e+00> : vector<8xf32>
    %2 = vector.multi_reduction <add>, %1, %cst [1] : vector<8x16xf32> to vector<8xf32>
    %3 = vector.shape_cast %2 : vector<8xf32> to vector<8x1xf32>
    %cst_2 = arith.constant 1.600000e+01 : f32
    %4 = vector.broadcast %cst_2 : f32 to vector<8x1xf32>
    %5 = arith.divf %3, %4 : vector<8x1xf32>
    %6 = vector.broadcast %5 : vector<8x1xf32> to vector<8x16xf32>
    %7 = arith.subf %1, %6 : vector<8x16xf32>
    %8 = arith.mulf %7, %7 : vector<8x16xf32>
    %cst_3 = arith.constant dense<0.000000e+00> : vector<8xf32>
    %9 = vector.multi_reduction <add>, %8, %cst_3 [1] : vector<8x16xf32> to vector<8xf32>
    %10 = vector.shape_cast %9 : vector<8xf32> to vector<8x1xf32>
    %cst_4 = arith.constant 1.600000e+01 : f32
    %11 = vector.broadcast %cst_4 : f32 to vector<8x1xf32>
    %12 = arith.divf %10, %11 : vector<8x1xf32>
    %13 = vector.broadcast %5 : vector<8x1xf32> to vector<8x16xf32>
    %14 = arith.subf %1, %13 : vector<8x16xf32>
    %cst_5 = arith.constant 9.99999974E-6 : f32
    %15 = vector.broadcast %cst_5 : f32 to vector<8x1xf32>
    %16 = arith.addf %12, %15 : vector<8x1xf32>
    %17 = math.rsqrt %16 : vector<8x1xf32>
    %18 = vector.broadcast %17 : vector<8x1xf32> to vector<8x16xf32>
    %19 = arith.mulf %14, %18 : vector<8x16xf32>
    %c0_6 = arith.constant 0 : index
    %c0_7 = arith.constant 0 : index
    %20 = vector.load %arg4[%c0_6, %c0_7] : memref<1x16xf32, #tpu.memory_space<vmem>>, vector<1x16xf32>
    %21 = vector.broadcast %20 : vector<1x16xf32> to vector<8x16xf32>
    %22 = arith.mulf %19, %21 : vector<8x16xf32>
    %23 = arith.truncf %22 : vector<8x16xf32> to vector<8x16xbf16>
    %c0_8 = arith.constant 0 : index
    %c0_9 = arith.constant 0 : index
    %c0_10 = arith.constant 0 : index
    %24 = vector.load %arg2[%c0_8, %c0_9, %c0_10] : memref<1x2x16xf32, #tpu.memory_space<vmem>>, vector<1x2x16xf32>
    %25 = arith.truncf %24 : vector<1x2x16xf32> to vector<1x2x16xbf16>
    %c0_11 = arith.constant 0 : index
    %c0_12 = arith.constant 0 : index
    %c0_13 = arith.constant 0 : index
    %26 = vector.load %arg16[%c0_11, %c0_12, %c0_13] : memref<1x10x16xbf16, #tpu.memory_space<vmem>>, vector<1x2x16xbf16>
    tpu.vector_store %arg16[%c0_11, %c0_12, %c0_13], %25 {strides = array<i32>} : memref<1x10x16xbf16, #tpu.memory_space<vmem>>, vector<1x2x16xbf16>,
    %27 = vector.shape_cast %23 : vector<8x16xbf16> to vector<1x8x16xbf16>
    %c0_14 = arith.constant 0 : index
    %c2 = arith.constant 2 : index
    %c0_15 = arith.constant 0 : index
    %28 = vector.load %arg16[%c0_14, %c2, %c0_15] : memref<1x10x16xbf16, #tpu.memory_space<vmem>>, vector<1x8x16xbf16>
    tpu.vector_store %arg16[%c0_14, %c2, %c0_15], %27 {strides = array<i32>} : memref<1x10x16xbf16, #tpu.memory_space<vmem>>, vector<1x8x16xbf16>,
    %c2_16 = arith.constant 2 : index
    %c0_17 = arith.constant 0 : index
    %c0_18 = arith.constant 0 : index
    %29 = vector.load %arg5[%c2_16, %c0_17, %c0_18] : memref<3x16x64xbf16, #tpu.memory_space<vmem>>, vector<1x16x64xbf16>
    %30 = vector.shape_cast %29 : vector<1x16x64xbf16> to vector<16x64xbf16>
    %cst_19 = arith.constant dense<0.000000e+00> : vector<8x64xf32>
    %31 = tpu.matmul %23, %30, %cst_19 {dimension_numbers = #tpu.dot_dimension_numbers<[1], [0], [0], [1], [0, 0, 1, 1], [], []>} : vector<8x16xbf16>, vector<16x64xbf16>, vector<8x64xf32> -> vector<8x64xf32>
    %c0_20 = arith.constant 0 : index
    %c0_21 = arith.constant 0 : index
    %c0_22 = arith.constant 0 : index
    %32 = vector.load %arg16[%c0_20, %c0_21, %c0_22] : memref<1x10x16xbf16, #tpu.memory_space<vmem>>, vector<1x8x16xbf16>
    %33 = vector.shape_cast %32 : vector<1x8x16xbf16> to vector<8x16xbf16>
    %c0_23 = arith.constant 0 : index
    %c0_24 = arith.constant 0 : index
    %c0_25 = arith.constant 0 : index
    %34 = vector.load %arg5[%c0_23, %c0_24, %c0_25] : memref<3x16x64xbf16, #tpu.memory_space<vmem>>, vector<1x16x64xbf16>
    %35 = vector.shape_cast %34 : vector<1x16x64xbf16> to vector<16x64xbf16>
    %cst_26 = arith.constant dense<0.000000e+00> : vector<8x64xf32>
    %36 = tpu.matmul %33, %35, %cst_26 {dimension_numbers = #tpu.dot_dimension_numbers<[1], [0], [0], [1], [0, 0, 1, 1], [], []>} : vector<8x16xbf16>, vector<16x64xbf16>, vector<8x64xf32> -> vector<8x64xf32>
    %37 = arith.addf %31, %36 : vector<8x64xf32>
    %c0_27 = arith.constant 0 : index
    %c1 = arith.constant 1 : index
    %c0_28 = arith.constant 0 : index
    %38 = vector.load %arg16[%c0_27, %c1, %c0_28] : memref<1x10x16xbf16, #tpu.memory_space<vmem>>, vector<1x8x16xbf16>
    %39 = vector.shape_cast %38 : vector<1x8x16xbf16> to vector<8x16xbf16>
    %c1_29 = arith.constant 1 : index
    %c0_30 = arith.constant 0 : index
    %c0_31 = arith.constant 0 : index
    %40 = vector.load %arg5[%c1_29, %c0_30, %c0_31] : memref<3x16x64xbf16, #tpu.memory_space<vmem>>, vector<1x16x64xbf16>
    %41 = vector.shape_cast %40 : vector<1x16x64xbf16> to vector<16x64xbf16>
    %cst_32 = arith.constant dense<0.000000e+00> : vector<8x64xf32>
    %42 = tpu.matmul %39, %41, %cst_32 {dimension_numbers = #tpu.dot_dimension_numbers<[1], [0], [0], [1], [0, 0, 1, 1], [], []>} : vector<8x16xbf16>, vector<16x64xbf16>, vector<8x64xf32> -> vector<8x64xf32>
    %43 = arith.addf %37, %42 : vector<8x64xf32>
    %c0_33 = arith.constant 0 : index
    %c0_34 = arith.constant 0 : index
    %44 = vector.load %arg6[%c0_33, %c0_34] : memref<1x64xf32, #tpu.memory_space<vmem>>, vector<1x64xf32>
    %45 = vector.broadcast %44 : vector<1x64xf32> to vector<8x64xf32>
    %46 = arith.addf %43, %45 : vector<8x64xf32>
    %cst_35 = arith.constant 5.000000e-01 : f32
    %47 = vector.broadcast %cst_35 : f32 to vector<8x64xf32>
    %48 = arith.mulf %47, %46 : vector<8x64xf32>
    %cst_36 = arith.constant 4.471500e-02 : f32
    %49 = vector.broadcast %cst_36 : f32 to vector<8x64xf32>
    %50 = arith.mulf %49, %46 : vector<8x64xf32>
    %51 = arith.mulf %50, %46 : vector<8x64xf32>
    %52 = arith.mulf %51, %46 : vector<8x64xf32>
    %53 = arith.addf %46, %52 : vector<8x64xf32>
    %cst_37 = arith.constant 0.797884583 : f32
    %54 = vector.broadcast %cst_37 : f32 to vector<8x64xf32>
    %55 = arith.mulf %54, %53 : vector<8x64xf32>
    %56 = math.tanh %55 : vector<8x64xf32>
    %cst_38 = arith.constant 1.000000e+00 : f32
    %57 = vector.broadcast %cst_38 : f32 to vector<8x64xf32>
    %58 = arith.addf %57, %56 : vector<8x64xf32>
    %59 = arith.mulf %48, %58 : vector<8x64xf32>
    %60 = arith.truncf %59 : vector<8x64xf32> to vector<8x64xbf16>
    %c0_39 = arith.constant 0 : index
    %c0_40 = arith.constant 0 : index
    %c0_41 = arith.constant 0 : index
    %61 = vector.load %arg3[%c0_39, %c0_40, %c0_41] : memref<1x2x64xf32, #tpu.memory_space<vmem>>, vector<1x2x64xf32>
    %62 = arith.truncf %61 : vector<1x2x64xf32> to vector<1x2x64xbf16>
    %c0_42 = arith.constant 0 : index
    %c0_43 = arith.constant 0 : index
    %c0_44 = arith.constant 0 : index
    %63 = vector.load %arg17[%c0_42, %c0_43, %c0_44] : memref<1x10x64xbf16, #tpu.memory_space<vmem>>, vector<1x2x64xbf16>
    tpu.vector_store %arg17[%c0_42, %c0_43, %c0_44], %62 {strides = array<i32>} : memref<1x10x64xbf16, #tpu.memory_space<vmem>>, vector<1x2x64xbf16>,
    %64 = vector.shape_cast %60 : vector<8x64xbf16> to vector<1x8x64xbf16>
    %c0_45 = arith.constant 0 : index
    %c2_46 = arith.constant 2 : index
    %c0_47 = arith.constant 0 : index
    %65 = vector.load %arg17[%c0_45, %c2_46, %c0_47] : memref<1x10x64xbf16, #tpu.memory_space<vmem>>, vector<1x8x64xbf16>
    tpu.vector_store %arg17[%c0_45, %c2_46, %c0_47], %64 {strides = array<i32>} : memref<1x10x64xbf16, #tpu.memory_space<vmem>>, vector<1x8x64xbf16>,
    %c2_48 = arith.constant 2 : index
    %c0_49 = arith.constant 0 : index
    %c0_50 = arith.constant 0 : index
    %66 = vector.load %arg7[%c2_48, %c0_49, %c0_50] : memref<3x64x16xbf16, #tpu.memory_space<vmem>>, vector<1x64x16xbf16>
    %67 = vector.shape_cast %66 : vector<1x64x16xbf16> to vector<64x16xbf16>
    %cst_51 = arith.constant dense<0.000000e+00> : vector<8x16xf32>
    %68 = tpu.matmul %60, %67, %cst_51 {dimension_numbers = #tpu.dot_dimension_numbers<[1], [0], [0], [1], [0, 0, 1, 1], [], []>} : vector<8x64xbf16>, vector<64x16xbf16>, vector<8x16xf32> -> vector<8x16xf32>
    %c0_52 = arith.constant 0 : index
    %c0_53 = arith.constant 0 : index
    %c0_54 = arith.constant 0 : index
    %69 = vector.load %arg17[%c0_52, %c0_53, %c0_54] : memref<1x10x64xbf16, #tpu.memory_space<vmem>>, vector<1x8x64xbf16>
    %70 = vector.shape_cast %69 : vector<1x8x64xbf16> to vector<8x64xbf16>
    %c0_55 = arith.constant 0 : index
    %c0_56 = arith.constant 0 : index
    %c0_57 = arith.constant 0 : index
    %71 = vector.load %arg7[%c0_55, %c0_56, %c0_57] : memref<3x64x16xbf16, #tpu.memory_space<vmem>>, vector<1x64x16xbf16>
    %72 = vector.shape_cast %71 : vector<1x64x16xbf16> to vector<64x16xbf16>
    %cst_58 = arith.constant dense<0.000000e+00> : vector<8x16xf32>
    %73 = tpu.matmul %70, %72, %cst_58 {dimension_numbers = #tpu.dot_dimension_numbers<[1], [0], [0], [1], [0, 0, 1, 1], [], []>} : vector<8x64xbf16>, vector<64x16xbf16>, vector<8x16xf32> -> vector<8x16xf32>
    %74 = arith.addf %68, %73 : vector<8x16xf32>
    %c0_59 = arith.constant 0 : index
    %c1_60 = arith.constant 1 : index
    %c0_61 = arith.constant 0 : index
    %75 = vector.load %arg17[%c0_59, %c1_60, %c0_61] : memref<1x10x64xbf16, #tpu.memory_space<vmem>>, vector<1x8x64xbf16>
    %76 = vector.shape_cast %75 : vector<1x8x64xbf16> to vector<8x64xbf16>
    %c1_62 = arith.constant 1 : index
    %c0_63 = arith.constant 0 : index
    %c0_64 = arith.constant 0 : index
    %77 = vector.load %arg7[%c1_62, %c0_63, %c0_64] : memref<3x64x16xbf16, #tpu.memory_space<vmem>>, vector<1x64x16xbf16>
    %78 = vector.shape_cast %77 : vector<1x64x16xbf16> to vector<64x16xbf16>
    %cst_65 = arith.constant dense<0.000000e+00> : vector<8x16xf32>
    %79 = tpu.matmul %76, %78, %cst_65 {dimension_numbers = #tpu.dot_dimension_numbers<[1], [0], [0], [1], [0, 0, 1, 1], [], []>} : vector<8x64xbf16>, vector<64x16xbf16>, vector<8x16xf32> -> vector<8x16xf32>
    %80 = arith.addf %74, %79 : vector<8x16xf32>
    %c0_66 = arith.constant 0 : index
    %c0_67 = arith.constant 0 : index
    %81 = vector.load %arg8[%c0_66, %c0_67] : memref<1x16xf32, #tpu.memory_space<vmem>>, vector<1x16xf32>
    %82 = vector.broadcast %81 : vector<1x16xf32> to vector<8x16xf32>
    %83 = arith.addf %80, %82 : vector<8x16xf32>
    %84 = arith.addf %83, %1 : vector<8x16xf32>
    %85 = vector.shape_cast %22 : vector<8x16xf32> to vector<1x8x16xf32>
    %86 = vector.extract_strided_slice %85 {offsets = [0, 6, 0], sizes = [1, 2, 16], strides = [1, 1, 1]} : vector<1x8x16xf32> to vector<1x2x16xf32>
    %c0_68 = arith.constant 0 : index
    %c0_69 = arith.constant 0 : index
    %c0_70 = arith.constant 0 : index
    %87 = vector.load %arg15[%c0_68, %c0_69, %c0_70] : memref<1x2x80xf32, #tpu.memory_space<vmem>>, vector<1x2x16xf32>
    tpu.vector_store %arg15[%c0_68, %c0_69, %c0_70], %86 {strides = array<i32>} : memref<1x2x80xf32, #tpu.memory_space<vmem>>, vector<1x2x16xf32>,
    %88 = vector.shape_cast %59 : vector<8x64xf32> to vector<1x8x64xf32>
    %89 = vector.extract_strided_slice %88 {offsets = [0, 6, 0], sizes = [1, 2, 64], strides = [1, 1, 1]} : vector<1x8x64xf32> to vector<1x2x64xf32>
    %c0_71 = arith.constant 0 : index
    %c0_72 = arith.constant 0 : index
    %c16 = arith.constant 16 : index
    %90 = vector.load %arg15[%c0_71, %c0_72, %c16] : memref<1x2x80xf32, #tpu.memory_space<vmem>>, vector<1x2x64xf32>
    tpu.vector_store %arg15[%c0_71, %c0_72, %c16], %89 {strides = array<i32>} : memref<1x2x80xf32, #tpu.memory_space<vmem>>, vector<1x2x64xf32>,
    %cst_73 = arith.constant dense<0.000000e+00> : vector<8xf32>
    %91 = vector.multi_reduction <add>, %84, %cst_73 [1] : vector<8x16xf32> to vector<8xf32>
    %92 = vector.shape_cast %91 : vector<8xf32> to vector<8x1xf32>
    %cst_74 = arith.constant 1.600000e+01 : f32
    %93 = vector.broadcast %cst_74 : f32 to vector<8x1xf32>
    %94 = arith.divf %92, %93 : vector<8x1xf32>
    %95 = vector.broadcast %94 : vector<8x1xf32> to vector<8x16xf32>
    %96 = arith.subf %84, %95 : vector<8x16xf32>
    %97 = arith.mulf %96, %96 : vector<8x16xf32>
    %cst_75 = arith.constant dense<0.000000e+00> : vector<8xf32>
    %98 = vector.multi_reduction <add>, %97, %cst_75 [1] : vector<8x16xf32> to vector<8xf32>
    %99 = vector.shape_cast %98 : vector<8xf32> to vector<8x1xf32>
    %cst_76 = arith.constant 1.600000e+01 : f32
    %100 = vector.broadcast %cst_76 : f32 to vector<8x1xf32>
    %101 = arith.divf %99, %100 : vector<8x1xf32>
    %102 = vector.broadcast %94 : vector<8x1xf32> to vector<8x16xf32>
    %103 = arith.subf %84, %102 : vector<8x16xf32>
    %cst_77 = arith.constant 9.99999974E-6 : f32
    %104 = vector.broadcast %cst_77 : f32 to vector<8x1xf32>
    %105 = arith.addf %101, %104 : vector<8x1xf32>
    %106 = math.rsqrt %105 : vector<8x1xf32>
    %107 = vector.broadcast %106 : vector<8x1xf32> to vector<8x16xf32>
    %108 = arith.mulf %103, %107 : vector<8x16xf32>
    %c0_78 = arith.constant 0 : index
    %c0_79 = arith.constant 0 : index
    %109 = vector.load %arg9[%c0_78, %c0_79] : memref<1x16xf32, #tpu.memory_space<vmem>>, vector<1x16xf32>
    %110 = vector.broadcast %109 : vector<1x16xf32> to vector<8x16xf32>
    %111 = arith.mulf %108, %110 : vector<8x16xf32>
    %112 = arith.truncf %111 : vector<8x16xf32> to vector<8x16xbf16>
    %c0_80 = arith.constant 0 : index
    %c0_81 = arith.constant 0 : index
    %113 = vector.load %arg10[%c0_80, %c0_81] : memref<16x64xbf16, #tpu.memory_space<vmem>>, vector<16x64xbf16>
    %cst_82 = arith.constant dense<0.000000e+00> : vector<8x64xf32>
    %114 = tpu.matmul %112, %113, %cst_82 {dimension_numbers = #tpu.dot_dimension_numbers<[1], [0], [0], [1], [0, 0, 1, 1], [], []>} : vector<8x16xbf16>, vector<16x64xbf16>, vector<8x64xf32> -> vector<8x64xf32>
    %c0_83 = arith.constant 0 : index
    %c0_84 = arith.constant 0 : index
    %115 = vector.load %arg11[%c0_83, %c0_84] : memref<1x64xf32, #tpu.memory_space<vmem>>, vector<1x64xf32>
    %116 = vector.broadcast %115 : vector<1x64xf32> to vector<8x64xf32>
    %117 = arith.addf %114, %116 : vector<8x64xf32>
    %cst_85 = arith.constant 5.000000e-01 : f32
    %118 = vector.broadcast %cst_85 : f32 to vector<8x64xf32>
    %119 = arith.mulf %118, %117 : vector<8x64xf32>
    %cst_86 = arith.constant 4.471500e-02 : f32
    %120 = vector.broadcast %cst_86 : f32 to vector<8x64xf32>
    %121 = arith.mulf %120, %117 : vector<8x64xf32>
    %122 = arith.mulf %121, %117 : vector<8x64xf32>
    %123 = arith.mulf %122, %117 : vector<8x64xf32>
    %124 = arith.addf %117, %123 : vector<8x64xf32>
    %cst_87 = arith.constant 0.797884583 : f32
    %125 = vector.broadcast %cst_87 : f32 to vector<8x64xf32>
    %126 = arith.mulf %125, %124 : vector<8x64xf32>
    %127 = math.tanh %126 : vector<8x64xf32>
    %cst_88 = arith.constant 1.000000e+00 : f32
    %128 = vector.broadcast %cst_88 : f32 to vector<8x64xf32>
    %129 = arith.addf %128, %127 : vector<8x64xf32>
    %130 = arith.mulf %119, %129 : vector<8x64xf32>
    %131 = arith.truncf %130 : vector<8x64xf32> to vector<8x64xbf16>
    %c0_89 = arith.constant 0 : index
    %c0_90 = arith.constant 0 : index
    %132 = vector.load %arg12[%c0_89, %c0_90] : memref<64x16xbf16, #tpu.memory_space<vmem>>, vector<64x16xbf16>
    %cst_91 = arith.constant dense<0.000000e+00> : vector<8x16xf32>
    %133 = tpu.matmul %131, %132, %cst_91 {dimension_numbers = #tpu.dot_dimension_numbers<[1], [0], [0], [1], [0, 0, 1, 1], [], []>} : vector<8x64xbf16>, vector<64x16xbf16>, vector<8x16xf32> -> vector<8x16xf32>
    %c0_92 = arith.constant 0 : index
    %c0_93 = arith.constant 0 : index
    %134 = vector.load %arg13[%c0_92, %c0_93] : memref<1x16xf32, #tpu.memory_space<vmem>>, vector<1x16xf32>
    %135 = vector.broadcast %134 : vector<1x16xf32> to vector<8x16xf32>
    %136 = arith.addf %133, %135 : vector<8x16xf32>
    %137 = arith.addf %136, %84 : vector<8x16xf32>
    %138 = vector.shape_cast %137 : vector<8x16xf32> to vector<1x8x16xf32>
    %c0_94 = arith.constant 0 : index
    %c0_95 = arith.constant 0 : index
    %c0_96 = arith.constant 0 : index
    %139 = vector.load %arg14[%c0_94, %c0_95, %c0_96] : memref<1x8x16xf32, #tpu.memory_space<vmem>>, vector<1x8x16xf32>
    tpu.vector_store %arg14[%c0_94, %c0_95, %c0_96], %138 {strides = array<i32>} : memref<1x8x16xf32, #tpu.memory_space<vmem>>, vector<1x8x16xf32>,
    return
  }
  func.func @transform_0(%arg0: i32) -> (i32, i32, i32) {
    %c0_i32 = arith.constant 0 : i32
    %c0_i32_0 = arith.constant 0 : i32
    %c0_i32_1 = arith.constant 0 : i32
    return %arg0, %c0_i32, %c0_i32_0 : i32, i32, i32
  }
  func.func @transform_1(%arg0: i32) -> (i32, i32, i32) {
    %c0_i32 = arith.constant 0 : i32
    %c0_i32_0 = arith.constant 0 : i32
    %c0_i32_1 = arith.constant 0 : i32
    return %arg0, %c0_i32, %c0_i32_0 : i32, i32, i32
  }
  func.func @transform_2(%arg0: i32) -> (i32, i32, i32) {
    %c0_i32 = arith.constant 0 : i32
    %c0_i32_0 = arith.constant 0 : i32
    %c0_i32_1 = arith.constant 0 : i32
    return %arg0, %c0_i32, %c0_i32_0 : i32, i32, i32
  }
  func.func @transform_3(%arg0: i32) -> (i32, i32) {
    %c0_i32 = arith.constant 0 : i32
    %c0_i32_0 = arith.constant 0 : i32
    %c0_i32_1 = arith.constant 0 : i32
    return %c0_i32, %c0_i32_0 : i32, i32
  }
  func.func @transform_4(%arg0: i32) -> (i32, i32, i32) {
    %c0_i32 = arith.constant 0 : i32
    %c0_i32_0 = arith.constant 0 : i32
    %c0_i32_1 = arith.constant 0 : i32
    %c0_i32_2 = arith.constant 0 : i32
    return %c0_i32, %c0_i32_0, %c0_i32_1 : i32, i32, i32
  }
  func.func @transform_5(%arg0: i32) -> (i32, i32) {
    %c0_i32 = arith.constant 0 : i32
    %c0_i32_0 = arith.constant 0 : i32
    %c0_i32_1 = arith.constant 0 : i32
    return %c0_i32, %c0_i32_0 : i32, i32
  }
  func.func @transform_6(%arg0: i32) -> (i32, i32, i32) {
    %c0_i32 = arith.constant 0 : i32
    %c0_i32_0 = arith.constant 0 : i32
    %c0_i32_1 = arith.constant 0 : i32
    %c0_i32_2 = arith.constant 0 : i32
    return %c0_i32, %c0_i32_0, %c0_i32_1 : i32, i32, i32
  }
  func.func @transform_7(%arg0: i32) -> (i32, i32) {
    %c0_i32 = arith.constant 0 : i32
    %c0_i32_0 = arith.constant 0 : i32
    %c0_i32_1 = arith.constant 0 : i32
    return %c0_i32, %c0_i32_0 : i32, i32
  }
  func.func @transform_8(%arg0: i32) -> (i32, i32) {
    %c0_i32 = arith.constant 0 : i32
    %c0_i32_0 = arith.constant 0 : i32
    %c0_i32_1 = arith.constant 0 : i32
    return %c0_i32, %c0_i32_0 : i32, i32
  }
  func.func @transform_9(%arg0: i32) -> (i32, i32) {
    %c0_i32 = arith.constant 0 : i32
    %c0_i32_0 = arith.constant 0 : i32
    %c0_i32_1 = arith.constant 0 : i32
    return %c0_i32, %c0_i32_0 : i32, i32
  }
  func.func @transform_10(%arg0: i32) -> (i32, i32) {
    %c0_i32 = arith.constant 0 : i32
    %c0_i32_0 = arith.constant 0 : i32
    %c0_i32_1 = arith.constant 0 : i32
    return %c0_i32, %c0_i32_0 : i32, i32
  }
  func.func @transform_11(%arg0: i32) -> (i32, i32) {
    %c0_i32 = arith.constant 0 : i32
    %c0_i32_0 = arith.constant 0 : i32
    %c0_i32_1 = arith.constant 0 : i32
    return %c0_i32, %c0_i32_0 : i32, i32
  }
  func.func @transform_12(%arg0: i32) -> (i32, i32) {
    %c0_i32 = arith.constant 0 : i32
    %c0_i32_0 = arith.constant 0 : i32
    %c0_i32_1 = arith.constant 0 : i32
    return %c0_i32, %c0_i32_0 : i32, i32
  }
  func.func @transform_13(%arg0: i32) -> (i32, i32, i32) {
    %c0_i32 = arith.constant 0 : i32
    %c0_i32_0 = arith.constant 0 : i32
    %c0_i32_1 = arith.constant 0 : i32
    return %arg0, %c0_i32, %c0_i32_0 : i32, i32, i32
  }
  func.func @transform_14(%arg0: i32) -> (i32, i32, i32) {
    %c0_i32 = arith.constant 0 : i32
    %c0_i32_0 = arith.constant 0 : i32
    %c0_i32_1 = arith.constant 0 : i32
    return %arg0, %c0_i32, %c0_i32_0 : i32, i32, i32
  }
}

module attributes {stable_mosaic.version = 11 : i64} {
  func.func @kernel(%arg0: i32, %arg1: memref<1x8x16xf32, #tpu.memory_space<vmem>>, %arg2: memref<1x2x16xf32, #tpu.memory_space<vmem>>, %arg3: memref<1x2x64xf32, #tpu.memory_space<vmem>>, %arg4: memref<1x16xf32, #tpu.memory_space<vmem>>, %arg5: memref<3x16x64xbf16, #tpu.memory_space<vmem>>, %arg6: memref<1x64xf32, #tpu.memory_space<vmem>>, %arg7: memref<3x64x16xbf16, #tpu.memory_space<vmem>>, %arg8: memref<1x16xf32, #tpu.memory_space<vmem>>, %arg9: memref<1x16xf32, #tpu.memory_space<vmem>>, %arg10: memref<16x64xbf16, #tpu.memory_space<vmem>>, %arg11: memref<1x64xf32, #tpu.memory_space<vmem>>, %arg12: memref<64x16xbf16, #tpu.memory_space<vmem>>, %arg13: memref<1x16xf32, #tpu.memory_space<vmem>>, %arg14: memref<1x8x16xf32, #tpu.memory_space<vmem>>, %arg15: memref<1x2x80xf32, #tpu.memory_space<vmem>>, %arg16: memref<1x10x16xbf16, #tpu.memory_space<vmem>>, %arg17: memref<1x10x64xbf16, #tpu.memory_space<vmem>>) attributes {dimension_semantics = [#tpu.dimension_semantics<parallel>], iteration_bounds = array<i64: 2>, scalar_prefetch = 0 : i64, scratch_operands = 2 : i64, tpu.core_type = #tpu.core_type<tc>, window_params = [{transform_indices = @transform_0, window_bounds = array<i64: 1, 8, 16>}, {transform_indices = @transform_1, window_bounds = array<i64: 1, 2, 16>}, {transform_indices = @transform_2, window_bounds = array<i64: 1, 2, 64>}, {pipeline_mode = #tpu.pipeline_mode<synchronous>, transform_indices = @transform_3, window_bounds = array<i64: 1, 16>}, {pipeline_mode = #tpu.pipeline_mode<synchronous>, transform_indices = @transform_4, window_bounds = array<i64: 3, 16, 64>}, {pipeline_mode = #tpu.pipeline_mode<synchronous>, transform_indices = @transform_5, window_bounds = array<i64: 1, 64>}, {pipeline_mode = #tpu.pipeline_mode<synchronous>, transform_indices = @transform_6, window_bounds = array<i64: 3, 64, 16>}, {pipeline_mode = #tpu.pipeline_mode<synchronous>, transform_indices = @transform_7, window_bounds = array<i64: 1, 16>}, {pipeline_mode = #tpu.pipeline_mode<synchronous>, transform_indices = @transform_8, window_bounds = array<i64: 1, 16>}, {pipeline_mode = #tpu.pipeline_mode<synchronous>, transform_indices = @transform_9, window_bounds = array<i64: 16, 64>}, {pipeline_mode = #tpu.pipeline_mode<synchronous>, transform_indices = @transform_10, window_bounds = array<i64: 1, 64>}, {pipeline_mode = #tpu.pipeline_mode<synchronous>, transform_indices = @transform_11, window_bounds = array<i64: 64, 16>}, {pipeline_mode = #tpu.pipeline_mode<synchronous>, transform_indices = @transform_12, window_bounds = array<i64: 1, 16>}, {transform_indices = @transform_13, window_bounds = array<i64: 1, 8, 16>}, {transform_indices = @transform_14, window_bounds = array<i64: 1, 2, 80>}]} {
    %c0 = arith.constant 0 : index
    %c0_0 = arith.constant 0 : index
    %c0_1 = arith.constant 0 : index
    %0 = vector.load %arg1[%c0, %c0_0, %c0_1] : memref<1x8x16xf32, #tpu.memory_space<vmem>>, vector<1x8x16xf32>
    %1 = vector.shape_cast %0 : vector<1x8x16xf32> to vector<8x16xf32>
    %cst = arith.constant dense<0.000000e+00> : vector<8xf32>
    %2 = vector.multi_reduction <add>, %1, %cst [1] : vector<8x16xf32> to vector<8xf32>
    %3 = vector.shape_cast %2 : vector<8xf32> to vector<8x1xf32>
    %cst_2 = arith.constant 1.600000e+01 : f32
    %4 = vector.broadcast %cst_2 : f32 to vector<8x1xf32>
    %5 = arith.divf %3, %4 : vector<8x1xf32>
    %6 = vector.broadcast %5 : vector<8x1xf32> to vector<8x16xf32>
    %7 = arith.subf %1, %6 : vector<8x16xf32>
    %8 = arith.mulf %7, %7 : vector<8x16xf32>
    %cst_3 = arith.constant dense<0.000000e+00> : vector<8xf32>
    %9 = vector.multi_reduction <add>, %8, %cst_3 [1] : vector<8x16xf32> to vector<8xf32>
    %10 = vector.shape_cast %9 : vector<8xf32> to vector<8x1xf32>
    %cst_4 = arith.constant 1.600000e+01 : f32
    %11 = vector.broadcast %cst_4 : f32 to vector<8x1xf32>
    %12 = arith.divf %10, %11 : vector<8x1xf32>
    %13 = vector.broadcast %5 : vector<8x1xf32> to vector<8x16xf32>
    %14 = arith.subf %1, %13 : vector<8x16xf32>
    %cst_5 = arith.constant 9.99999974E-6 : f32
    %15 = vector.broadcast %cst_5 : f32 to vector<8x1xf32>
    %16 = arith.addf %12, %15 : vector<8x1xf32>
    %17 = math.rsqrt %16 : vector<8x1xf32>
    %18 = vector.broadcast %17 : vector<8x1xf32> to vector<8x16xf32>
    %19 = arith.mulf %14, %18 : vector<8x16xf32>
    %c0_6 = arith.constant 0 : index
    %c0_7 = arith.constant 0 : index
    %20 = vector.load %arg4[%c0_6, %c0_7] : memref<1x16xf32, #tpu.memory_space<vmem>>, vector<1x16xf32>
    %21 = vector.broadcast %20 : vector<1x16xf32> to vector<8x16xf32>
    %22 = arith.mulf %19, %21 : vector<8x16xf32>
    %23 = arith.truncf %22 : vector<8x16xf32> to vector<8x16xbf16>
    %c0_8 = arith.constant 0 : index
    %c0_9 = arith.constant 0 : index
    %c0_10 = arith.constant 0 : index
    %24 = vector.load %arg2[%c0_8, %c0_9, %c0_10] : memref<1x2x16xf32, #tpu.memory_space<vmem>>, vector<1x2x16xf32>
    %25 = arith.truncf %24 : vector<1x2x16xf32> to vector<1x2x16xbf16>
    %c0_11 = arith.constant 0 : index
    %c0_12 = arith.constant 0 : index
    %c0_13 = arith.constant 0 : index
    %26 = vector.load %arg16[%c0_11, %c0_12, %c0_13] : memref<1x10x16xbf16, #tpu.memory_space<vmem>>, vector<1x2x16xbf16>
    tpu.vector_store %arg16[%c0_11, %c0_12, %c0_13], %25 {strides = array<i32>} : memref<1x10x16xbf16, #tpu.memory_space<vmem>>, vector<1x2x16xbf16>,
    %27 = vector.shape_cast %23 : vector<8x16xbf16> to vector<1x8x16xbf16>
    %c0_14 = arith.constant 0 : index
    %c2 = arith.constant 2 : index
    %c0_15 = arith.constant 0 : index
    %28 = vector.load %arg16[%c0_14, %c2, %c0_15] : memref<1x10x16xbf16, #tpu.memory_space<vmem>>, vector<1x8x16xbf16>
    tpu.vector_store %arg16[%c0_14, %c2, %c0_15], %27 {strides = array<i32>} : memref<1x10x16xbf16, #tpu.memory_space<vmem>>, vector<1x8x16xbf16>,
    %c2_16 = arith.constant 2 : index
    %c0_17 = arith.constant 0 : index
    %c0_18 = arith.constant 0 : index
    %29 = vector.load %arg5[%c2_16, %c0_17, %c0_18] : memref<3x16x64xbf16, #tpu.memory_space<vmem>>, vector<1x16x64xbf16>
    %30 = vector.shape_cast %29 : vector<1x16x64xbf16> to vector<16x64xbf16>
    %cst_19 = arith.constant dense<0.000000e+00> : vector<8x64xf32>
    %31 = tpu.matmul %23, %30, %cst_19 {dimension_numbers = #tpu.dot_dimension_numbers<[1], [0], [0], [1], [0, 0, 1, 1], [], []>} : vector<8x16xbf16>, vector<16x64xbf16>, vector<8x64xf32> -> vector<8x64xf32>
    %c0_20 = arith.constant 0 : index
    %c0_21 = arith.constant 0 : index
    %c0_22 = arith.constant 0 : index
    %32 = vector.load %arg16[%c0_20, %c0_21, %c0_22] : memref<1x10x16xbf16, #tpu.memory_space<vmem>>, vector<1x8x16xbf16>
    %33 = vector.shape_cast %32 : vector<1x8x16xbf16> to vector<8x16xbf16>
    %c0_23 = arith.constant 0 : index
    %c0_24 = arith.constant 0 : index
    %c0_25 = arith.constant 0 : index
    %34 = vector.load %arg5[%c0_23, %c0_24, %c0_25] : memref<3x16x64xbf16, #tpu.memory_space<vmem>>, vector<1x16x64xbf16>
    %35 = vector.shape_cast %34 : vector<1x16x64xbf16> to vector<16x64xbf16>
    %cst_26 = arith.constant dense<0.000000e+00> : vector<8x64xf32>
    %36 = tpu.matmul %33, %35, %cst_26 {dimension_numbers = #tpu.dot_dimension_numbers<[1], [0], [0], [1], [0, 0, 1, 1], [], []>} : vector<8x16xbf16>, vector<16x64xbf16>, vector<8x64xf32> -> vector<8x64xf32>
    %37 = arith.addf %31, %36 : vector<8x64xf32>
    %c0_27 = arith.constant 0 : index
    %c1 = arith.constant 1 : index
    %c0_28 = arith.constant 0 : index
    %38 = vector.load %arg16[%c0_27, %c1, %c0_28] : memref<1x10x16xbf16, #tpu.memory_space<vmem>>, vector<1x8x16xbf16>
    %39 = vector.shape_cast %38 : vector<1x8x16xbf16> to vector<8x16xbf16>
    %c1_29 = arith.constant 1 : index
    %c0_30 = arith.constant 0 : index
    %c0_31 = arith.constant 0 : index
    %40 = vector.load %arg5[%c1_29, %c0_30, %c0_31] : memref<3x16x64xbf16, #tpu.memory_space<vmem>>, vector<1x16x64xbf16>
    %41 = vector.shape_cast %40 : vector<1x16x64xbf16> to vector<16x64xbf16>
    %cst_32 = arith.constant dense<0.000000e+00> : vector<8x64xf32>
    %42 = tpu.matmul %39, %41, %cst_32 {dimension_numbers = #tpu.dot_dimension_numbers<[1], [0], [0], [1], [0, 0, 1, 1], [], []>} : vector<8x16xbf16>, vector<16x64xbf16>, vector<8x64xf32> -> vector<8x64xf32>
    %43 = arith.addf %37, %42 : vector<8x64xf32>
    %c0_33 = arith.constant 0 : index
    %c0_34 = arith.constant 0 : index
    %44 = vector.load %arg6[%c0_33, %c0_34] : memref<1x64xf32, #tpu.memory_space<vmem>>, vector<1x64xf32>
    %45 = vector.broadcast %44 : vector<1x64xf32> to vector<8x64xf32>
    %46 = arith.addf %43, %45 : vector<8x64xf32>
    %cst_35 = arith.constant 5.000000e-01 : f32
    %47 = vector.broadcast %cst_35 : f32 to vector<8x64xf32>
    %48 = arith.mulf %47, %46 : vector<8x64xf32>
    %cst_36 = arith.constant 4.471500e-02 : f32
    %49 = vector.broadcast %cst_36 : f32 to vector<8x64xf32>
    %50 = arith.mulf %49, %46 : vector<8x64xf32>
    %51 = arith.mulf %50, %46 : vector<8x64xf32>
    %52 = arith.mulf %51, %46 : vector<8x64xf32>
    %53 = arith.addf %46, %52 : vector<8x64xf32>
    %cst_37 = arith.constant 0.797884583 : f32
    %54 = vector.broadcast %cst_37 : f32 to vector<8x64xf32>
    %55 = arith.mulf %54, %53 : vector<8x64xf32>
    %56 = math.tanh %55 : vector<8x64xf32>
    %cst_38 = arith.constant 1.000000e+00 : f32
    %57 = vector.broadcast %cst_38 : f32 to vector<8x64xf32>
    %58 = arith.addf %57, %56 : vector<8x64xf32>
    %59 = arith.mulf %48, %58 : vector<8x64xf32>
    %60 = arith.truncf %59 : vector<8x64xf32> to vector<8x64xbf16>
    %c0_39 = arith.constant 0 : index
    %c0_40 = arith.constant 0 : index
    %c0_41 = arith.constant 0 : index
    %61 = vector.load %arg3[%c0_39, %c0_40, %c0_41] : memref<1x2x64xf32, #tpu.memory_space<vmem>>, vector<1x2x64xf32>
    %62 = arith.truncf %61 : vector<1x2x64xf32> to vector<1x2x64xbf16>
    %c0_42 = arith.constant 0 : index
    %c0_43 = arith.constant 0 : index
    %c0_44 = arith.constant 0 : index
    %63 = vector.load %arg17[%c0_42, %c0_43, %c0_44] : memref<1x10x64xbf16, #tpu.memory_space<vmem>>, vector<1x2x64xbf16>
    tpu.vector_store %arg17[%c0_42, %c0_43, %c0_44], %62 {strides = array<i32>} : memref<1x10x64xbf16, #tpu.memory_space<vmem>>, vector<1x2x64xbf16>,
    %64 = vector.shape_cast %60 : vector<8x64xbf16> to vector<1x8x64xbf16>
    %c0_45 = arith.constant 0 : index
    %c2_46 = arith.constant 2 : index
    %c0_47 = arith.constant 0 : index
    %65 = vector.load %arg17[%c0_45, %c2_46, %c0_47] : memref<1x10x64xbf16, #tpu.memory_space<vmem>>, vector<1x8x64xbf16>
    tpu.vector_store %arg17[%c0_45, %c2_46, %c0_47], %64 {strides = array<i32>} : memref<1x10x64xbf16, #tpu.memory_space<vmem>>, vector<1x8x64xbf16>,
    %c2_48 = arith.constant 2 : index
    %c0_49 = arith.constant 0 : index
    %c0_50 = arith.constant 0 : index
    %66 = vector.load %arg7[%c2_48, %c0_49, %c0_50] : memref<3x64x16xbf16, #tpu.memory_space<vmem>>, vector<1x64x16xbf16>
    %67 = vector.shape_cast %66 : vector<1x64x16xbf16> to vector<64x16xbf16>
    %cst_51 = arith.constant dense<0.000000e+00> : vector<8x16xf32>
    %68 = tpu.matmul %60, %67, %cst_51 {dimension_numbers = #tpu.dot_dimension_numbers<[1], [0], [0], [1], [0, 0, 1, 1], [], []>} : vector<8x64xbf16>, vector<64x16xbf16>, vector<8x16xf32> -> vector<8x16xf32>
    %c0_52 = arith.constant 0 : index
    %c0_53 = arith.constant 0 : index
    %c0_54 = arith.constant 0 : index
    %69 = vector.load %arg17[%c0_52, %c0_53, %c0_54] : memref<1x10x64xbf16, #tpu.memory_space<vmem>>, vector<1x8x64xbf16>
    %70 = vector.shape_cast %69 : vector<1x8x64xbf16> to vector<8x64xbf16>
    %c0_55 = arith.constant 0 : index
    %c0_56 = arith.constant 0 : index
    %c0_57 = arith.constant 0 : index
    %71 = vector.load %arg7[%c0_55, %c0_56, %c0_57] : memref<3x64x16xbf16, #tpu.memory_space<vmem>>, vector<1x64x16xbf16>
    %72 = vector.shape_cast %71 : vector<1x64x16xbf16> to vector<64x16xbf16>
    %cst_58 = arith.constant dense<0.000000e+00> : vector<8x16xf32>
    %73 = tpu.matmul %70, %72, %cst_58 {dimension_numbers = #tpu.dot_dimension_numbers<[1], [0], [0], [1], [0, 0, 1, 1], [], []>} : vector<8x64xbf16>, vector<64x16xbf16>, vector<8x16xf32> -> vector<8x16xf32>
    %74 = arith.addf %68, %73 : vector<8x16xf32>
    %c0_59 = arith.constant 0 : index
    %c1_60 = arith.constant 1 : index
    %c0_61 = arith.constant 0 : index
    %75 = vector.load %arg17[%c0_59, %c1_60, %c0_61] : memref<1x10x64xbf16, #tpu.memory_space<vmem>>, vector<1x8x64xbf16>
    %76 = vector.shape_cast %75 : vector<1x8x64xbf16> to vector<8x64xbf16>
    %c1_62 = arith.constant 1 : index
    %c0_63 = arith.constant 0 : index
    %c0_64 = arith.constant 0 : index
    %77 = vector.load %arg7[%c1_62, %c0_63, %c0_64] : memref<3x64x16xbf16, #tpu.memory_space<vmem>>, vector<1x64x16xbf16>
    %78 = vector.shape_cast %77 : vector<1x64x16xbf16> to vector<64x16xbf16>
    %cst_65 = arith.constant dense<0.000000e+00> : vector<8x16xf32>
    %79 = tpu.matmul %76, %78, %cst_65 {dimension_numbers = #tpu.dot_dimension_numbers<[1], [0], [0], [1], [0, 0, 1, 1], [], []>} : vector<8x64xbf16>, vector<64x16xbf16>, vector<8x16xf32> -> vector<8x16xf32>
    %80 = arith.addf %74, %79 : vector<8x16xf32>
    %c0_66 = arith.constant 0 : index
    %c0_67 = arith.constant 0 : index
    %81 = vector.load %arg8[%c0_66, %c0_67] : memref<1x16xf32, #tpu.memory_space<vmem>>, vector<1x16xf32>
    %82 = vector.broadcast %81 : vector<1x16xf32> to vector<8x16xf32>
    %83 = arith.addf %80, %82 : vector<8x16xf32>
    %84 = arith.addf %83, %1 : vector<8x16xf32>
    %85 = vector.shape_cast %22 : vector<8x16xf32> to vector<1x8x16xf32>
    %86 = vector.extract_strided_slice %85 {offsets = [0, 6, 0], sizes = [1, 2, 16], strides = [1, 1, 1]} : vector<1x8x16xf32> to vector<1x2x16xf32>
    %c0_68 = arith.constant 0 : index
    %c0_69 = arith.constant 0 : index
    %c0_70 = arith.constant 0 : index
    %87 = vector.load %arg15[%c0_68, %c0_69, %c0_70] : memref<1x2x80xf32, #tpu.memory_space<vmem>>, vector<1x2x16xf32>
    tpu.vector_store %arg15[%c0_68, %c0_69, %c0_70], %86 {strides = array<i32>} : memref<1x2x80xf32, #tpu.memory_space<vmem>>, vector<1x2x16xf32>,
    %88 = vector.shape_cast %59 : vector<8x64xf32> to vector<1x8x64xf32>
    %89 = vector.extract_strided_slice %88 {offsets = [0, 6, 0], sizes = [1, 2, 64], strides = [1, 1, 1]} : vector<1x8x64xf32> to vector<1x2x64xf32>
    %c0_71 = arith.constant 0 : index
    %c0_72 = arith.constant 0 : index
    %c16 = arith.constant 16 : index
    %90 = vector.load %arg15[%c0_71, %c0_72, %c16] : memref<1x2x80xf32, #tpu.memory_space<vmem>>, vector<1x2x64xf32>
    tpu.vector_store %arg15[%c0_71, %c0_72, %c16], %89 {strides = array<i32>} : memref<1x2x80xf32, #tpu.memory_space<vmem>>, vector<1x2x64xf32>,
    %cst_73 = arith.constant dense<0.000000e+00> : vector<8xf32>
    %91 = vector.multi_reduction <add>, %84, %cst_73 [1] : vector<8x16xf32> to vector<8xf32>
    %92 = vector.shape_cast %91 : vector<8xf32> to vector<8x1xf32>
    %cst_74 = arith.constant 1.600000e+01 : f32
    %93 = vector.broadcast %cst_74 : f32 to vector<8x1xf32>
    %94 = arith.divf %92, %93 : vector<8x1xf32>
    %95 = vector.broadcast %94 : vector<8x1xf32> to vector<8x16xf32>
    %96 = arith.subf %84, %95 : vector<8x16xf32>
    %97 = arith.mulf %96, %96 : vector<8x16xf32>
    %cst_75 = arith.constant dense<0.000000e+00> : vector<8xf32>
    %98 = vector.multi_reduction <add>, %97, %cst_75 [1] : vector<8x16xf32> to vector<8xf32>
    %99 = vector.shape_cast %98 : vector<8xf32> to vector<8x1xf32>
    %cst_76 = arith.constant 1.600000e+01 : f32
    %100 = vector.broadcast %cst_76 : f32 to vector<8x1xf32>
    %101 = arith.divf %99, %100 : vector<8x1xf32>
    %102 = vector.broadcast %94 : vector<8x1xf32> to vector<8x16xf32>
    %103 = arith.subf %84, %102 : vector<8x16xf32>
    %cst_77 = arith.constant 9.99999974E-6 : f32
    %104 = vector.broadcast %cst_77 : f32 to vector<8x1xf32>
    %105 = arith.addf %101, %104 : vector<8x1xf32>
    %106 = math.rsqrt %105 : vector<8x1xf32>
    %107 = vector.broadcast %106 : vector<8x1xf32> to vector<8x16xf32>
    %108 = arith.mulf %103, %107 : vector<8x16xf32>
    %c0_78 = arith.constant 0 : index
    %c0_79 = arith.constant 0 : index
    %109 = vector.load %arg9[%c0_78, %c0_79] : memref<1x16xf32, #tpu.memory_space<vmem>>, vector<1x16xf32>
    %110 = vector.broadcast %109 : vector<1x16xf32> to vector<8x16xf32>
    %111 = arith.mulf %108, %110 : vector<8x16xf32>
    %112 = arith.truncf %111 : vector<8x16xf32> to vector<8x16xbf16>
    %c0_80 = arith.constant 0 : index
    %c0_81 = arith.constant 0 : index
    %113 = vector.load %arg10[%c0_80, %c0_81] : memref<16x64xbf16, #tpu.memory_space<vmem>>, vector<16x64xbf16>
    %cst_82 = arith.constant dense<0.000000e+00> : vector<8x64xf32>
    %114 = tpu.matmul %112, %113, %cst_82 {dimension_numbers = #tpu.dot_dimension_numbers<[1], [0], [0], [1], [0, 0, 1, 1], [], []>} : vector<8x16xbf16>, vector<16x64xbf16>, vector<8x64xf32> -> vector<8x64xf32>
    %c0_83 = arith.constant 0 : index
    %c0_84 = arith.constant 0 : index
    %115 = vector.load %arg11[%c0_83, %c0_84] : memref<1x64xf32, #tpu.memory_space<vmem>>, vector<1x64xf32>
    %116 = vector.broadcast %115 : vector<1x64xf32> to vector<8x64xf32>
    %117 = arith.addf %114, %116 : vector<8x64xf32>
    %cst_85 = arith.constant 5.000000e-01 : f32
    %118 = vector.broadcast %cst_85 : f32 to vector<8x64xf32>
    %119 = arith.mulf %118, %117 : vector<8x64xf32>
    %cst_86 = arith.constant 4.471500e-02 : f32
    %120 = vector.broadcast %cst_86 : f32 to vector<8x64xf32>
    %121 = arith.mulf %120, %117 : vector<8x64xf32>
    %122 = arith.mulf %121, %117 : vector<8x64xf32>
    %123 = arith.mulf %122, %117 : vector<8x64xf32>
    %124 = arith.addf %117, %123 : vector<8x64xf32>
    %cst_87 = arith.constant 0.797884583 : f32
    %125 = vector.broadcast %cst_87 : f32 to vector<8x64xf32>
    %126 = arith.mulf %125, %124 : vector<8x64xf32>
    %127 = math.tanh %126 : vector<8x64xf32>
    %cst_88 = arith.constant 1.000000e+00 : f32
    %128 = vector.broadcast %cst_88 : f32 to vector<8x64xf32>
    %129 = arith.addf %128, %127 : vector<8x64xf32>
    %130 = arith.mulf %119, %129 : vector<8x64xf32>
    %131 = arith.truncf %130 : vector<8x64xf32> to vector<8x64xbf16>
    %c0_89 = arith.constant 0 : index
    %c0_90 = arith.constant 0 : index
    %132 = vector.load %arg12[%c0_89, %c0_90] : memref<64x16xbf16, #tpu.memory_space<vmem>>, vector<64x16xbf16>
    %cst_91 = arith.constant dense<0.000000e+00> : vector<8x16xf32>
    %133 = tpu.matmul %131, %132, %cst_91 {dimension_numbers = #tpu.dot_dimension_numbers<[1], [0], [0], [1], [0, 0, 1, 1], [], []>} : vector<8x64xbf16>, vector<64x16xbf16>, vector<8x16xf32> -> vector<8x16xf32>
    %c0_92 = arith.constant 0 : index
    %c0_93 = arith.constant 0 : index
    %134 = vector.load %arg13[%c0_92, %c0_93] : memref<1x16xf32, #tpu.memory_space<vmem>>, vector<1x16xf32>
    %135 = vector.broadcast %134 : vector<1x16xf32> to vector<8x16xf32>
    %136 = arith.addf %133, %135 : vector<8x16xf32>
    %137 = arith.addf %136, %84 : vector<8x16xf32>
    %138 = vector.shape_cast %137 : vector<8x16xf32> to vector<1x8x16xf32>
    %c0_94 = arith.constant 0 : index
    %c0_95 = arith.constant 0 : index
    %c0_96 = arith.constant 0 : index
    %139 = vector.load %arg14[%c0_94, %c0_95, %c0_96] : memref<1x8x16xf32, #tpu.memory_space<vmem>>, vector<1x8x16xf32>
    tpu.vector_store %arg14[%c0_94, %c0_95, %c0_96], %138 {strides = array<i32>} : memref<1x8x16xf32, #tpu.memory_space<vmem>>, vector<1x8x16xf32>,
    return
  }
  func.func @transform_0(%arg0: i32) -> (i32, i32, i32) {
    %c0_i32 = arith.constant 0 : i32
    %c0_i32_0 = arith.constant 0 : i32
    %c0_i32_1 = arith.constant 0 : i32
    return %arg0, %c0_i32, %c0_i32_0 : i32, i32, i32
  }
  func.func @transform_1(%arg0: i32) -> (i32, i32, i32) {
    %c0_i32 = arith.constant 0 : i32
    %c0_i32_0 = arith.constant 0 : i32
    %c0_i32_1 = arith.constant 0 : i32
    return %arg0, %c0_i32, %c0_i32_0 : i32, i32, i32
  }
  func.func @transform_2(%arg0: i32) -> (i32, i32, i32) {
    %c0_i32 = arith.constant 0 : i32
    %c0_i32_0 = arith.constant 0 : i32
    %c0_i32_1 = arith.constant 0 : i32
    return %arg0, %c0_i32, %c0_i32_0 : i32, i32, i32
  }
  func.func @transform_3(%arg0: i32) -> (i32, i32) {
    %c0_i32 = arith.constant 0 : i32
    %c0_i32_0 = arith.constant 0 : i32
    %c0_i32_1 = arith.constant 0 : i32
    return %c0_i32, %c0_i32_0 : i32, i32
  }
  func.func @transform_4(%arg0: i32) -> (i32, i32, i32) {
    %c0_i32 = arith.constant 0 : i32
    %c0_i32_0 = arith.constant 0 : i32
    %c0_i32_1 = arith.constant 0 : i32
    %c0_i32_2 = arith.constant 0 : i32
    return %c0_i32, %c0_i32_0, %c0_i32_1 : i32, i32, i32
  }
  func.func @transform_5(%arg0: i32) -> (i32, i32) {
    %c0_i32 = arith.constant 0 : i32
    %c0_i32_0 = arith.constant 0 : i32
    %c0_i32_1 = arith.constant 0 : i32
    return %c0_i32, %c0_i32_0 : i32, i32
  }
  func.func @transform_6(%arg0: i32) -> (i32, i32, i32) {
    %c0_i32 = arith.constant 0 : i32
    %c0_i32_0 = arith.constant 0 : i32
    %c0_i32_1 = arith.constant 0 : i32
    %c0_i32_2 = arith.constant 0 : i32
    return %c0_i32, %c0_i32_0, %c0_i32_1 : i32, i32, i32
  }
  func.func @transform_7(%arg0: i32) -> (i32, i32) {
    %c0_i32 = arith.constant 0 : i32
    %c0_i32_0 = arith.constant 0 : i32
    %c0_i32_1 = arith.constant 0 : i32
    return %c0_i32, %c0_i32_0 : i32, i32
  }
  func.func @transform_8(%arg0: i32) -> (i32, i32) {
    %c0_i32 = arith.constant 0 : i32
    %c0_i32_0 = arith.constant 0 : i32
    %c0_i32_1 = arith.constant 0 : i32
    return %c0_i32, %c0_i32_0 : i32, i32
  }
  func.func @transform_9(%arg0: i32) -> (i32, i32) {
    %c0_i32 = arith.constant 0 : i32
    %c0_i32_0 = arith.constant 0 : i32
    %c0_i32_1 = arith.constant 0 : i32
    return %c0_i32, %c0_i32_0 : i32, i32
  }
  func.func @transform_10(%arg0: i32) -> (i32, i32) {
    %c0_i32 = arith.constant 0 : i32
    %c0_i32_0 = arith.constant 0 : i32
    %c0_i32_1 = arith.constant 0 : i32
    return %c0_i32, %c0_i32_0 : i32, i32
  }
  func.func @transform_11(%arg0: i32) -> (i32, i32) {
    %c0_i32 = arith.constant 0 : i32
    %c0_i32_0 = arith.constant 0 : i32
    %c0_i32_1 = arith.constant 0 : i32
    return %c0_i32, %c0_i32_0 : i32, i32
  }
  func.func @transform_12(%arg0: i32) -> (i32, i32) {
    %c0_i32 = arith.constant 0 : i32
    %c0_i32_0 = arith.constant 0 : i32
    %c0_i32_1 = arith.constant 0 : i32
    return %c0_i32, %c0_i32_0 : i32, i32
  }
  func.func @transform_13(%arg0: i32) -> (i32, i32, i32) {
    %c0_i32 = arith.constant 0 : i32
    %c0_i32_0 = arith.constant 0 : i32
    %c0_i32_1 = arith.constant 0 : i32
    return %arg0, %c0_i32, %c0_i32_0 : i32, i32, i32
  }
  func.func @transform_14(%arg0: i32) -> (i32, i32, i32) {
    %c0_i32 = arith.constant 0 : i32
    %c0_i32_0 = arith.constant 0 : i32
    %c0_i32_1 = arith.constant 0 : i32
    return %arg0, %c0_i32, %c0_i32_0 : i32, i32, i32
  }
}

</mosaic_0001>

<llo_original>
// kernel: pips_conv_block.1
$region0: #{pips_conv_block.1}
  #allocation0 [shape = 'u32[]', space=smem, size = 0x4, offset = 0x4, fixed_abs, tag = 'smem constant byte address 0x4 - core index']
  #allocation1 [shape = 'u32[144,128]{1,0:T(1,128)}', space=vmem, size = 0x12000, scoped, tag = 'internal scratch']
  #allocation2 [shape = 'bf16[1,10,16]{2,1,0:T(8,128)(2,1)}', space=vmem, size = 0x1000, scoped, tag = 'scratch operand']
  #allocation3 [shape = 'bf16[1,10,64]{2,1,0:T(8,128)(2,1)}', space=vmem, size = 0x1000, scoped, tag = 'scratch operand']
  %s0 = inlined_call_operand.vmem [shape: f32[2,8,16], index: 0, kind: input, shape index: {}]
  %s1 = inlined_call_operand.vmem [shape: f32[2,2,16], index: 1, kind: input, shape index: {}]
  %s2 = inlined_call_operand.vmem [shape: f32[2,2,64], index: 2, kind: input, shape index: {}]
  %s3 = inlined_call_operand.vmem [shape: f32[1,16], index: 3, kind: input, shape index: {}]
  %s4 = inlined_call_operand.vmem [shape: bf16[3,16,64], index: 4, kind: input, shape index: {}]
  %s5 = inlined_call_operand.vmem [shape: f32[1,64], index: 5, kind: input, shape index: {}]
  %s6 = inlined_call_operand.vmem [shape: bf16[3,64,16], index: 6, kind: input, shape index: {}]
  %s7 = inlined_call_operand.vmem [shape: f32[1,16], index: 7, kind: input, shape index: {}]
  %s8 = inlined_call_operand.vmem [shape: f32[1,16], index: 8, kind: input, shape index: {}]
  %s9 = inlined_call_operand.vmem [shape: bf16[16,64], index: 9, kind: input, shape index: {}]
  %s10 = inlined_call_operand.vmem [shape: f32[1,64], index: 10, kind: input, shape index: {}]
  %s11 = inlined_call_operand.vmem [shape: bf16[64,16], index: 11, kind: input, shape index: {}]
  %s12 = inlined_call_operand.vmem [shape: f32[1,16], index: 12, kind: input, shape index: {}]
  %s13 = inlined_call_operand.hbm [shape: f32[2,8,16], index: 13, kind: output, shape index: {0}]
  %s14 = inlined_call_operand.hbm [shape: f32[2,2,80], index: 14, kind: output, shape index: {1}]
  %15 = xla_tuple %s13, %s14
  %s16 = sld [smem:[#allocation0]]
  $region93: #{pips_conv_block.1} parent=0
    _
  %s18 = ssub.s32 1, %s16
  %s19 = scalar_select 0, %s18, %s16
  $region1: #{pips_conv_block.1} parent=0
    #allocation4 [shape = 'u8[8192]{0}', space=vmem, size = 0x2000, scoped, tag = 'output window, operand 0']
    #allocation5 [shape = 's32[2]{0}', space=sflag, size = 0x8, scoped, tag = 'scoped memory for pips_conv_block.1']
    #allocation6 [shape = 'u8[2048]{0}', space=vmem, size = 0x800, scoped, tag = 'output window, operand 1']
    #allocation7 [shape = 's32[2]{0}', space=sflag, size = 0x8, scoped, tag = 'scoped memory for pips_conv_block.1']
    %20 = vsyncpa [#allocation5], 0
    %s21 = scalar_lea.sflag [#allocation5], 1
    %22 = vsyncpa %s21, 0
    %23 = vsyncpa [#allocation7], 0
    %s24 = scalar_lea.sflag [#allocation7], 1
    %25 = vsyncpa %s24, 0
    loop: start=0, step=1, limit=4
    $region2: #{pips_conv_block.1} parent=1 // loop_pre_header
      _
    $region3: #{pips_conv_block.1} parent=1 // loop_header
      %s27 = sphi 0, %s31
      %p28 = scmp.ge.s32.totalorder %s27, 4
      %s37 = sphi 0, %s39
      %s40 = sphi 0, %s37
      %s41 = sphi 0, %s40
      %s57 = sphi 0, %s41
      %s63 = sphi 0, %s65
      %s66 = sphi 0, %s63
      %s67 = sphi 0, %s66
      %s83 = sphi 0, %s67
      %s89 = sphi 0, %s91
      %s92 = sphi 0, %s89
      %s93 = sphi 0, %s92
      %s109 = sphi 0, %s93
      %s113 = sphi 0, %s113
      %s115 = sphi 0, %s113
      %s116 = sphi 0, %s115
      %s130 = sphi 0, %s116
      %s134 = sphi 0, %s134
      %s136 = sphi 0, %s134
      %s137 = sphi 0, %s136
      %s151 = sphi 0, %s137
      %s155 = sphi 0, %s155
      %s157 = sphi 0, %s155
      %s158 = sphi 0, %s157
      %s172 = sphi 0, %s158
      %s176 = sphi 0, %s176
      %s178 = sphi 0, %s176
      %s179 = sphi 0, %s178
      %s193 = sphi 0, %s179
      %s197 = sphi 0, %s197
      %s199 = sphi 0, %s197
      %s200 = sphi 0, %s199
      %s214 = sphi 0, %s200
      %s218 = sphi 0, %s218
      %s220 = sphi 0, %s218
      %s221 = sphi 0, %s220
      %s235 = sphi 0, %s221
      %s239 = sphi 0, %s239
      %s241 = sphi 0, %s239
      %s242 = sphi 0, %s241
      %s256 = sphi 0, %s242
      %s260 = sphi 0, %s260
      %s262 = sphi 0, %s260
      %s263 = sphi 0, %s262
      %s277 = sphi 0, %s263
      %s281 = sphi 0, %s281
      %s283 = sphi 0, %s281
      %s284 = sphi 0, %s283
      %s298 = sphi 0, %s284
      %s302 = sphi 0, %s302
      %s304 = sphi 0, %s302
      %s305 = sphi 0, %s304
      %s319 = sphi 0, %s305
      %s325 = sphi 0, %s327
      %s328 = sphi 0, %s325
      %s329 = sphi 0, %s328
      %s345 = sphi 0, %s329
      %s351 = sphi 0, %s353
      %s354 = sphi 0, %s351
      %s355 = sphi 0, %s354
      %s371 = sphi 0, %s355
    $region4: #{pips_conv_block.1} parent=1 // loop_header_branch
      %30 = sbr.rel (%p28) target = $region8
    $region5: #{pips_conv_block.1} parent=1 // loop_body
      %s32 = ssub.s32 %s27, 1
      %s33 = ssub.s32 %s27, 2
      %s34 = sadd.s32 %s27, 1
      %s35 = ssub.s32 %s27, %s34
      %p36 = scmp.eq.s32.totalorder %s35, 0
      %s38 = sadd.s32 %s37, 1
      %s39 = scalar_select %p36, %s37, %s38
      %p42 = pneg %p36
      %p43 = scmp.eq.s32.totalorder %s27, 1
      %p44 = por %p42, %p43
      %p45 = scmp.ne.s32.totalorder %s37, %s40
      %p46 = scmp.eq.s32.totalorder %s27, 0
      %p47 = por %p45, %p46
      %p48 = scmp.ne.s32.totalorder %s37, %s40
      %p49 = scmp.eq.s32.totalorder %s32, 1
      %p50 = por %p48, %p49
      %p51 = scmp.ne.s32.totalorder %s40, %s41
      %p52 = scmp.eq.s32.totalorder %s32, 0
      %p53 = por %p51, %p52
      %p54 = scmp.ne.s32.totalorder %s40, %s41
      %p55 = scmp.eq.s32.totalorder %s33, 1
      %p56 = por %p54, %p55
      %p58 = scmp.ne.s32.totalorder %s41, %s57
      %p59 = scmp.eq.s32.totalorder %s33, 0
      %p60 = por %p58, %p59
      %s61 = ssub.s32 %s27, %s34
      %p62 = scmp.eq.s32.totalorder %s61, 0
      %s64 = sadd.s32 %s63, 1
      %s65 = scalar_select %p62, %s63, %s64
      %p68 = pneg %p62
      %p69 = scmp.eq.s32.totalorder %s27, 1
      %p70 = por %p68, %p69
      %p71 = scmp.ne.s32.totalorder %s63, %s66
      %p72 = scmp.eq.s32.totalorder %s27, 0
      %p73 = por %p71, %p72
      %p74 = scmp.ne.s32.totalorder %s63, %s66
      %p75 = scmp.eq.s32.totalorder %s32, 1
      %p76 = por %p74, %p75
      %p77 = scmp.ne.s32.totalorder %s66, %s67
      %p78 = scmp.eq.s32.totalorder %s32, 0
      %p79 = por %p77, %p78
      %p80 = scmp.ne.s32.totalorder %s66, %s67
      %p81 = scmp.eq.s32.totalorder %s33, 1
      %p82 = por %p80, %p81
      %p84 = scmp.ne.s32.totalorder %s67, %s83
      %p85 = scmp.eq.s32.totalorder %s33, 0
      %p86 = por %p84, %p85
      %s87 = ssub.s32 %s27, %s34
      %p88 = scmp.eq.s32.totalorder %s87, 0
      %s90 = sadd.s32 %s89, 1
      %s91 = scalar_select %p88, %s89, %s90
      %p94 = pneg %p88
      %p95 = scmp.eq.s32.totalorder %s27, 1
      %p96 = por %p94, %p95
      %p97 = scmp.ne.s32.totalorder %s89, %s92
      %p98 = scmp.eq.s32.totalorder %s27, 0
      %p99 = por %p97, %p98
      %p100 = scmp.ne.s32.totalorder %s89, %s92
      %p101 = scmp.eq.s32.totalorder %s32, 1
      %p102 = por %p100, %p101
      %p103 = scmp.ne.s32.totalorder %s92, %s93
      %p104 = scmp.eq.s32.totalorder %s32, 0
      %p105 = por %p103, %p104
      %p106 = scmp.ne.s32.totalorder %s92, %s93
      %p107 = scmp.eq.s32.totalorder %s33, 1
      %p108 = por %p106, %p107
      %p110 = scmp.ne.s32.totalorder %s93, %s109
      %p111 = scmp.eq.s32.totalorder %s33, 0
      %p112 = por %p110, %p111
      %s114 = sadd.s32 %s113, 1
      %p117 = scmp.eq.s32.totalorder %s27, 1
      %p118 = scmp.ne.s32.totalorder %s113, %s115
      %p119 = scmp.eq.s32.totalorder %s27, 0
      %p120 = por %p118, %p119
      %p121 = scmp.ne.s32.totalorder %s113, %s115
      %p122 = scmp.eq.s32.totalorder %s32, 1
      %p123 = por %p121, %p122
      %p124 = scmp.ne.s32.totalorder %s115, %s116
      %p125 = scmp.eq.s32.totalorder %s32, 0
      %p126 = por %p124, %p125
      %p127 = scmp.ne.s32.totalorder %s115, %s116
      %p128 = scmp.eq.s32.totalorder %s33, 1
      %p129 = por %p127, %p128
      %p131 = scmp.ne.s32.totalorder %s116, %s130
      %p132 = scmp.eq.s32.totalorder %s33, 0
      %p133 = por %p131, %p132
      %s135 = sadd.s32 %s134, 1
      %p138 = scmp.eq.s32.totalorder %s27, 1
      %p139 = scmp.ne.s32.totalorder %s134, %s136
      %p140 = scmp.eq.s32.totalorder %s27, 0
      %p141 = por %p139, %p140
      %p142 = scmp.ne.s32.totalorder %s134, %s136
      %p143 = scmp.eq.s32.totalorder %s32, 1
      %p144 = por %p142, %p143
      %p145 = scmp.ne.s32.totalorder %s136, %s137
      %p146 = scmp.eq.s32.totalorder %s32, 0
      %p147 = por %p145, %p146
      %p148 = scmp.ne.s32.totalorder %s136, %s137
      %p149 = scmp.eq.s32.totalorder %s33, 1
      %p150 = por %p148, %p149
      %p152 = scmp.ne.s32.totalorder %s137, %s151
      %p153 = scmp.eq.s32.totalorder %s33, 0
      %p154 = por %p152, %p153
      %s156 = sadd.s32 %s155, 1
      %p159 = scmp.eq.s32.totalorder %s27, 1
      %p160 = scmp.ne.s32.totalorder %s155, %s157
      %p161 = scmp.eq.s32.totalorder %s27, 0
      %p162 = por %p160, %p161
      %p163 = scmp.ne.s32.totalorder %s155, %s157
      %p164 = scmp.eq.s32.totalorder %s32, 1
      %p165 = por %p163, %p164
      %p166 = scmp.ne.s32.totalorder %s157, %s158
      %p167 = scmp.eq.s32.totalorder %s32, 0
      %p168 = por %p166, %p167
      %p169 = scmp.ne.s32.totalorder %s157, %s158
      %p170 = scmp.eq.s32.totalorder %s33, 1
      %p171 = por %p169, %p170
      %p173 = scmp.ne.s32.totalorder %s158, %s172
      %p174 = scmp.eq.s32.totalorder %s33, 0
      %p175 = por %p173, %p174
      %s177 = sadd.s32 %s176, 1
      %p180 = scmp.eq.s32.totalorder %s27, 1
      %p181 = scmp.ne.s32.totalorder %s176, %s178
      %p182 = scmp.eq.s32.totalorder %s27, 0
      %p183 = por %p181, %p182
      %p184 = scmp.ne.s32.totalorder %s176, %s178
      %p185 = scmp.eq.s32.totalorder %s32, 1
      %p186 = por %p184, %p185
      %p187 = scmp.ne.s32.totalorder %s178, %s179
      %p188 = scmp.eq.s32.totalorder %s32, 0
      %p189 = por %p187, %p188
      %p190 = scmp.ne.s32.totalorder %s178, %s179
      %p191 = scmp.eq.s32.totalorder %s33, 1
      %p192 = por %p190, %p191
      %p194 = scmp.ne.s32.totalorder %s179, %s193
      %p195 = scmp.eq.s32.totalorder %s33, 0
      %p196 = por %p194, %p195
      %s198 = sadd.s32 %s197, 1
      %p201 = scmp.eq.s32.totalorder %s27, 1
      %p202 = scmp.ne.s32.totalorder %s197, %s199
      %p203 = scmp.eq.s32.totalorder %s27, 0
      %p204 = por %p202, %p203
      %p205 = scmp.ne.s32.totalorder %s197, %s199
      %p206 = scmp.eq.s32.totalorder %s32, 1
      %p207 = por %p205, %p206
      %p208 = scmp.ne.s32.totalorder %s199, %s200
      %p209 = scmp.eq.s32.totalorder %s32, 0
      %p210 = por %p208, %p209
      %p211 = scmp.ne.s32.totalorder %s199, %s200
      %p212 = scmp.eq.s32.totalorder %s33, 1
      %p213 = por %p211, %p212
      %p215 = scmp.ne.s32.totalorder %s200, %s214
      %p216 = scmp.eq.s32.totalorder %s33, 0
      %p217 = por %p215, %p216
      %s219 = sadd.s32 %s218, 1
      %p222 = scmp.eq.s32.totalorder %s27, 1
      %p223 = scmp.ne.s32.totalorder %s218, %s220
      %p224 = scmp.eq.s32.totalorder %s27, 0
      %p225 = por %p223, %p224
      %p226 = scmp.ne.s32.totalorder %s218, %s220
      %p227 = scmp.eq.s32.totalorder %s32, 1
      %p228 = por %p226, %p227
      %p229 = scmp.ne.s32.totalorder %s220, %s221
      %p230 = scmp.eq.s32.totalorder %s32, 0
      %p231 = por %p229, %p230
      %p232 = scmp.ne.s32.totalorder %s220, %s221
      %p233 = scmp.eq.s32.totalorder %s33, 1
      %p234 = por %p232, %p233
      %p236 = scmp.ne.s32.totalorder %s221, %s235
      %p237 = scmp.eq.s32.totalorder %s33, 0
      %p238 = por %p236, %p237
      %s240 = sadd.s32 %s239, 1
      %p243 = scmp.eq.s32.totalorder %s27, 1
      %p244 = scmp.ne.s32.totalorder %s239, %s241
      %p245 = scmp.eq.s32.totalorder %s27, 0
      %p246 = por %p244, %p245
      %p247 = scmp.ne.s32.totalorder %s239, %s241
      %p248 = scmp.eq.s32.totalorder %s32, 1
      %p249 = por %p247, %p248
      %p250 = scmp.ne.s32.totalorder %s241, %s242
      %p251 = scmp.eq.s32.totalorder %s32, 0
      %p252 = por %p250, %p251
      %p253 = scmp.ne.s32.totalorder %s241, %s242
      %p254 = scmp.eq.s32.totalorder %s33, 1
      %p255 = por %p253, %p254
      %p257 = scmp.ne.s32.totalorder %s242, %s256
      %p258 = scmp.eq.s32.totalorder %s33, 0
      %p259 = por %p257, %p258
      %s261 = sadd.s32 %s260, 1
      %p264 = scmp.eq.s32.totalorder %s27, 1
      %p265 = scmp.ne.s32.totalorder %s260, %s262
      %p266 = scmp.eq.s32.totalorder %s27, 0
      %p267 = por %p265, %p266
      %p268 = scmp.ne.s32.totalorder %s260, %s262
      %p269 = scmp.eq.s32.totalorder %s32, 1
      %p270 = por %p268, %p269
      %p271 = scmp.ne.s32.totalorder %s262, %s263
      %p272 = scmp.eq.s32.totalorder %s32, 0
      %p273 = por %p271, %p272
      %p274 = scmp.ne.s32.totalorder %s262, %s263
      %p275 = scmp.eq.s32.totalorder %s33, 1
      %p276 = por %p274, %p275
      %p278 = scmp.ne.s32.totalorder %s263, %s277
      %p279 = scmp.eq.s32.totalorder %s33, 0
      %p280 = por %p278, %p279
      %s282 = sadd.s32 %s281, 1
      %p285 = scmp.eq.s32.totalorder %s27, 1
      %p286 = scmp.ne.s32.totalorder %s281, %s283
      %p287 = scmp.eq.s32.totalorder %s27, 0
      %p288 = por %p286, %p287
      %p289 = scmp.ne.s32.totalorder %s281, %s283
      %p290 = scmp.eq.s32.totalorder %s32, 1
      %p291 = por %p289, %p290
      %p292 = scmp.ne.s32.totalorder %s283, %s284
      %p293 = scmp.eq.s32.totalorder %s32, 0
      %p294 = por %p292, %p293
      %p295 = scmp.ne.s32.totalorder %s283, %s284
      %p296 = scmp.eq.s32.totalorder %s33, 1
      %p297 = por %p295, %p296
      %p299 = scmp.ne.s32.totalorder %s284, %s298
      %p300 = scmp.eq.s32.totalorder %s33, 0
      %p301 = por %p299, %p300
      %s303 = sadd.s32 %s302, 1
      %p306 = scmp.eq.s32.totalorder %s27, 1
      %p307 = scmp.ne.s32.totalorder %s302, %s304
      %p308 = scmp.eq.s32.totalorder %s27, 0
      %p309 = por %p307, %p308
      %p310 = scmp.ne.s32.totalorder %s302, %s304
      %p311 = scmp.eq.s32.totalorder %s32, 1
      %p312 = por %p310, %p311
      %p313 = scmp.ne.s32.totalorder %s304, %s305
      %p314 = scmp.eq.s32.totalorder %s32, 0
      %p315 = por %p313, %p314
      %p316 = scmp.ne.s32.totalorder %s304, %s305
      %p317 = scmp.eq.s32.totalorder %s33, 1
      %p318 = por %p316, %p317
      %p320 = scmp.ne.s32.totalorder %s305, %s319
      %p321 = scmp.eq.s32.totalorder %s33, 0
      %p322 = por %p320, %p321
      %s323 = ssub.s32 %s27, %s34
      %p324 = scmp.eq.s32.totalorder %s323, 0
      %s326 = sadd.s32 %s325, 1
      %s327 = scalar_select %p324, %s325, %s326
      %p330 = pneg %p324
      %p331 = scmp.eq.s32.totalorder %s27, 1
      %p332 = por %p330, %p331
      %p333 = scmp.ne.s32.totalorder %s325, %s328
      %p334 = scmp.eq.s32.totalorder %s27, 0
      %p335 = por %p333, %p334
      %p336 = scmp.ne.s32.totalorder %s325, %s328
      %p337 = scmp.eq.s32.totalorder %s32, 1
      %p338 = por %p336, %p337
      %p339 = scmp.ne.s32.totalorder %s328, %s329
      %p340 = scmp.eq.s32.totalorder %s32, 0
      %p341 = por %p339, %p340
      %p342 = scmp.ne.s32.totalorder %s328, %s329
      %p343 = scmp.eq.s32.totalorder %s33, 1
      %p344 = por %p342, %p343
      %p346 = scmp.ne.s32.totalorder %s329, %s345
      %p347 = scmp.eq.s32.totalorder %s33, 0
      %p348 = por %p346, %p347
      %s349 = ssub.s32 %s27, %s34
      %p350 = scmp.eq.s32.totalorder %s349, 0
      %s352 = sadd.s32 %s351, 1
      %s353 = scalar_select %p350, %s351, %s352
      %p356 = pneg %p350
      %p357 = scmp.eq.s32.totalorder %s27, 1
      %p358 = por %p356, %p357
      %p359 = scmp.ne.s32.totalorder %s351, %s354
      %p360 = scmp.eq.s32.totalorder %s27, 0
      %p361 = por %p359, %p360
      %p362 = scmp.ne.s32.totalorder %s351, %s354
      %p363 = scmp.eq.s32.totalorder %s32, 1
      %p364 = por %p362, %p363
      %p365 = scmp.ne.s32.totalorder %s354, %s355
      %p366 = scmp.eq.s32.totalorder %s32, 0
      %p367 = por %p365, %p366
      %p368 = scmp.ne.s32.totalorder %s354, %s355
      %p369 = scmp.eq.s32.totalorder %s33, 1
      %p370 = por %p368, %p369
      %p372 = scmp.ne.s32.totalorder %s355, %s371
      %p373 = scmp.eq.s32.totalorder %s33, 0
      %p374 = por %p372, %p373
      %p375 = scmp.le.s32.totalorder 1, %s27
      %p376 = scmp.lt.s32.totalorder %s27, 3
      %p377 = pnand %p375, %p376
      %p378 = pneg %p377
      // Predicated region
      $region9: #{pips_conv_block.1} parent=5 // pred_check
        _
      $region10: #{pips_conv_block.1} parent=5 // pred_check_branch
        %380 = sbr.rel (%p377) target = $region12
      $region11: #{pips_conv_block.1} parent=5 // pred_region
        %s381 = ssub.s32 %s27, 1
        // Predicated region
        $region13: #{pips_conv_block.1} parent=11 // pred_check
          %p382 = pneg %p126
        $region14: #{pips_conv_block.1} parent=11 // pred_check_branch
          %384 = sbr.rel (%p382) target = $region16
        $region15: #{pips_conv_block.1} parent=11 // pred_region
          _
        $region16: #{pips_conv_block.1} parent=11 // pred_fallthru
          _
        // Predicated region
        $region17: #{pips_conv_block.1} parent=11 // pred_check
          %p385 = pneg %p147
        $region18: #{pips_conv_block.1} parent=11 // pred_check_branch
          %387 = sbr.rel (%p385) target = $region20
        $region19: #{pips_conv_block.1} parent=11 // pred_region
          _
        $region20: #{pips_conv_block.1} parent=11 // pred_fallthru
          _
        // Predicated region
        $region21: #{pips_conv_block.1} parent=11 // pred_check
          %p388 = pneg %p168
        $region22: #{pips_conv_block.1} parent=11 // pred_check_branch
          %390 = sbr.rel (%p388) target = $region24
        $region23: #{pips_conv_block.1} parent=11 // pred_region
          _
        $region24: #{pips_conv_block.1} parent=11 // pred_fallthru
          _
        // Predicated region
        $region25: #{pips_conv_block.1} parent=11 // pred_check
          %p391 = pneg %p189
        $region26: #{pips_conv_block.1} parent=11 // pred_check_branch
          %393 = sbr.rel (%p391) target = $region28
        $region27: #{pips_conv_block.1} parent=11 // pred_region
          _
        $region28: #{pips_conv_block.1} parent=11 // pred_fallthru
          _
        // Predicated region
        $region29: #{pips_conv_block.1} parent=11 // pred_check
          %p394 = pneg %p210
        $region30: #{pips_conv_block.1} parent=11 // pred_check_branch
          %396 = sbr.rel (%p394) target = $region32
        $region31: #{pips_conv_block.1} parent=11 // pred_region
          _
        $region32: #{pips_conv_block.1} parent=11 // pred_fallthru
          _
        // Predicated region
        $region33: #{pips_conv_block.1} parent=11 // pred_check
          %p397 = pneg %p231
        $region34: #{pips_conv_block.1} parent=11 // pred_check_branch
          %399 = sbr.rel (%p397) target = $region36
        $region35: #{pips_conv_block.1} parent=11 // pred_region
          _
        $region36: #{pips_conv_block.1} parent=11 // pred_fallthru
          _
        // Predicated region
        $region37: #{pips_conv_block.1} parent=11 // pred_check
          %p400 = pneg %p252
        $region38: #{pips_conv_block.1} parent=11 // pred_check_branch
          %402 = sbr.rel (%p400) target = $region40
        $region39: #{pips_conv_block.1} parent=11 // pred_region
          _
        $region40: #{pips_conv_block.1} parent=11 // pred_fallthru
          _
        // Predicated region
        $region41: #{pips_conv_block.1} parent=11 // pred_check
          %p403 = pneg %p273
        $region42: #{pips_conv_block.1} parent=11 // pred_check_branch
          %405 = sbr.rel (%p403) target = $region44
        $region43: #{pips_conv_block.1} parent=11 // pred_region
          _
        $region44: #{pips_conv_block.1} parent=11 // pred_fallthru
          _
        // Predicated region
        $region45: #{pips_conv_block.1} parent=11 // pred_check
          %p406 = pneg %p294
        $region46: #{pips_conv_block.1} parent=11 // pred_check_branch
          %408 = sbr.rel (%p406) target = $region48
        $region47: #{pips_conv_block.1} parent=11 // pred_region
          _
        $region48: #{pips_conv_block.1} parent=11 // pred_fallthru
          _
        // Predicated region
        $region49: #{pips_conv_block.1} parent=11 // pred_check
          %p409 = pneg %p315
        $region50: #{pips_conv_block.1} parent=11 // pred_check_branch
          %411 = sbr.rel (%p409) target = $region52
        $region51: #{pips_conv_block.1} parent=11 // pred_region
          _
        $region52: #{pips_conv_block.1} parent=11 // pred_fallthru
          _
      $region12: #{pips_conv_block.1} parent=5 // pred_fallthru
        _
      %p412 = scmp.lt.s32.totalorder %s27, 2
      // Predicated region
      $region53: #{pips_conv_block.1} parent=5 // pred_check
        %p413 = pneg %p412
      $region54: #{pips_conv_block.1} parent=5 // pred_check_branch
        %415 = sbr.rel (%p413) target = $region56
      $region55: #{pips_conv_block.1} parent=5 // pred_region
        // Predicated region
        $region57: #{pips_conv_block.1} parent=55 // pred_check
          %p416 = pneg %p47
        $region58: #{pips_conv_block.1} parent=55 // pred_check_branch
          %418 = sbr.rel (%p416) target = $region60
        $region59: #{pips_conv_block.1} parent=55 // pred_region
          %p419 = scmp.lt.s32.totalorder %s27, 1
          %s420 = scalar_select %p419, %s27, 1
          %s421 = smul.addr %s420, 8
          %s422 = scalar_lea.vmem %s0, %s421
        $region60: #{pips_conv_block.1} parent=55 // pred_fallthru
          _
        // Predicated region
        $region61: #{pips_conv_block.1} parent=55 // pred_check
          %p423 = pneg %p73
        $region62: #{pips_conv_block.1} parent=55 // pred_check_branch
          %425 = sbr.rel (%p423) target = $region64
        $region63: #{pips_conv_block.1} parent=55 // pred_region
          %p426 = scmp.lt.s32.totalorder %s27, 1
          %s427 = scalar_select %p426, %s27, 1
          %s428 = smul.addr %s427, 2
          %s429 = scalar_lea.vmem %s1, %s428
        $region64: #{pips_conv_block.1} parent=55 // pred_fallthru
          _
        // Predicated region
        $region65: #{pips_conv_block.1} parent=55 // pred_check
          %p430 = pneg %p99
        $region66: #{pips_conv_block.1} parent=55 // pred_check_branch
          %432 = sbr.rel (%p430) target = $region68
        $region67: #{pips_conv_block.1} parent=55 // pred_region
          %p433 = scmp.lt.s32.totalorder %s27, 1
          %s434 = scalar_select %p433, %s27, 1
          %s435 = smul.addr %s434, 2
          %s436 = scalar_lea.vmem %s2, %s435
        $region68: #{pips_conv_block.1} parent=55 // pred_fallthru
          _
      $region56: #{pips_conv_block.1} parent=5 // pred_fallthru
        _
      %p437 = scmp.le.s32.totalorder 1, %s27
      %p438 = scmp.lt.s32.totalorder %s27, 3
      %p439 = pnand %p437, %p438
      %p440 = pneg %p439
      // Predicated region
      $region69: #{pips_conv_block.1} parent=5 // pred_check
        _
      $region70: #{pips_conv_block.1} parent=5 // pred_check_branch
        %442 = sbr.rel (%p439) target = $region72
      $region71: #{pips_conv_block.1} parent=5 // pred_region
        %s443 = ssub.s32 %s27, 1
        %p444 = scmp.lt.s32.totalorder %s32, 1
        %s445 = scalar_select %p444, %s32, 1
        %s446 = smul.addr %s445, 8
        %s447 = scalar_lea.vmem %s0, %s446
        %p448 = pneg %p53
        %p449 = pneg %p50
        %p450 = scmp.lt.s32.totalorder %s32, 1
        %s451 = scalar_select %p450, %s32, 1
        %s452 = smul.addr %s451, 2
        %s453 = scalar_lea.vmem %s1, %s452
        %p454 = pneg %p79
        %p455 = pneg %p76
        %p456 = scmp.lt.s32.totalorder %s32, 1
        %s457 = scalar_select %p456, %s32, 1
        %s458 = smul.addr %s457, 2
        %s459 = scalar_lea.vmem %s2, %s458
        %p460 = pneg %p105
        %p461 = pneg %p102
        %p462 = pneg %p126
        %p463 = pneg %p123
        %p464 = pneg %p147
        %p465 = pneg %p144
        %p466 = pneg %p168
        %p467 = pneg %p165
        %p468 = pneg %p189
        %p469 = pneg %p186
        %p470 = pneg %p210
        %p471 = pneg %p207
        %p472 = pneg %p231
        %p473 = pneg %p228
        %p474 = pneg %p252
        %p475 = pneg %p249
        %p476 = pneg %p273
        %p477 = pneg %p270
        %p478 = pneg %p294
        %p479 = pneg %p291
        %p480 = pneg %p315
        %p481 = pneg %p312
        %p482 = pneg %p341
        %p483 = pneg %p338
        %s484 = sand.u32 %s328, 1
        %s485 = scalar_lea.sflag [#allocation5], %s484
        %s486 = sand.u32 %s328, 1
        %s487 = smul.addr %s486, 8
        %s488 = scalar_lea.vmem [#allocation4], %s487
        %p489 = pneg %p367
        %p490 = pneg %p364
        %s491 = sand.u32 %s354, 1
        %s492 = scalar_lea.sflag [#allocation7], %s491
        %s493 = sand.u32 %s354, 1
        %s494 = smul.addr %s493, 2
        %s495 = scalar_lea.vmem [#allocation6], %s494
        %p496 = scmp.lt.s32.totalorder %s32, 1
        %s497 = scalar_select %p496, %s32, 1
        %s498 = smul.addr %s497, 8
        %s499 = scalar_lea.vmem %s0, %s498
        %p500 = scmp.lt.s32.totalorder %s32, 1
        %s501 = scalar_select %p500, %s32, 1
        %s502 = smul.addr %s501, 2
        %s503 = scalar_lea.vmem %s1, %s502
        %p504 = scmp.lt.s32.totalorder %s32, 1
        %s505 = scalar_select %p504, %s32, 1
        %s506 = smul.addr %s505, 2
        %s507 = scalar_lea.vmem %s2, %s506
        %v509 = vld [vmem:[%s499] sm:$0xff]
        %vm510 = vcmask 130048
        %v511 = vsel %vm510, %v509, 0.0
        %512 = vadd.xlane.f32.xlu0 %v511
        %v513 = vpop.xlane.xlu0 %512
        %v514 = vrcp.pop 16.0
        %v515 = vmul.f32 %v513, %v514
        %v516 = vsub.f32 %v509, %v515
        %v517 = vmul.f32 %v516, %v516
        %v518 = vsel %vm510, %v517, 0.0
        %519 = vadd.xlane.f32.xlu0 %v518
        %v520 = vpop.xlane.xlu0 %519
        %v521 = vmul.f32 %v520, %v514
        %v522 = vadd.f32 %v521, 1e-05
        %v523 = vrsqrt.pop %v522
        %v524 = vmul.f32 %v516, %v523
        %v525 = vld [vmem:[%s3] sm:$0x1]
        %v527 = vlaneseq
        %v528 = vshrl.u32 %v527, 7
        %v529 = vsub.s32 0, %v528
        %v530 = vrot.slane %v525, %v529
        %v532 = vmul.f32 %v524, %v530
        %v533 = vpack.c.bf16 %v532, %v532
        %v534 = vld [vmem:[%s503] sm:$0x3]
        %v535 = vpack.c.bf16 %v534, %v534
        %vm536 = vcmask 122880
        %537 = vst.msk [vmem:[#allocation2] sm:$0x1] %vm536, %v535
        %v539 = vunpack.c.l.b16 %v533
        %v540 = vpack.c.b16 %v539, %v539
        %v541 = vrot.slane %v540, 7
        %v542 = vrot.slane %v541, 4
        %vm545 = vcmask 125953
        %546 = vst.msk [vmem:[#allocation2] sm:$0xe] %vm545, %v541
        %547 = vst.msk [vmem:[#allocation2 + $0x4] sm:$0x1] %vm536, %v542
        %s548 = scalar_lea.vmem %s4, 16
        %v549 = vld [vmem:[%s548] sm:$0xf]
        %v550 = vld [vmem:[%s548 + $0x4] sm:$0xf]
        %v551 = vld [vmem:[#allocation2] sm:$0xf]
        %v552 = vld [vmem:[%s4] sm:$0xf]
        %v553 = vld [vmem:[%s4 + $0x4] sm:$0xf]
        %v556 = vunpack.c.l.b16 %v552
        %v557 = vunpack.c.l.b16 %v553
        %v558 = vpack.c.b16 %v557, %v556
        %v561 = vsel %vm510, %v551, 0
        %563 = vmatprep.subr.bf16.mxu0 0
        %564 = vmatpush1.bf16.msra.mxu0 0
        %565 = vmatprep.subr.bf16.mxu0 0
        %566 = vmatpush1.bf16.msra.mxu0 0
        %567 = vmatprep.subr.bf16.mxu0 0
        %568 = vmatpush1.bf16.msra.mxu0 0
        %569 = vmatprep.subr.bf16.mxu0 0
        %570 = vmatpush1.bf16.msra.mxu0 0
        %571 = vmatprep.subr.bf16.mxu0 0
        %572 = vmatpush1.bf16.msra.mxu0 0
        %573 = vmatprep.subr.bf16.mxu0 0
        %574 = vmatpush1.bf16.msra.mxu0 0
        %575 = vmatprep.subr.bf16.mxu0 0
        %576 = vmatpush1.bf16.msra.mxu0 0
        %577 = vmatprep.subr.bf16.mxu0 0
        %578 = vmatpush1.bf16.msra.mxu0 %v558
        %579 = vmatprep.subr.bf16.mxu0 0
        %580 = vmatpush2.bf16.msra.mxu0 0
        %581 = vmatprep.subr.bf16.mxu0 0
        %582 = vmatpush2.bf16.msra.mxu0 0
        %583 = vmatprep.subr.bf16.mxu0 0
        %584 = vmatpush2.bf16.msra.mxu0 0
        %585 = vmatprep.subr.bf16.mxu0 0
        %586 = vmatpush2.bf16.msra.mxu0 0
        %587 = vmatprep.subr.bf16.mxu0 0
        %588 = vmatpush2.bf16.msra.mxu0 0
        %589 = vmatprep.subr.bf16.mxu0 0
        %590 = vmatpush2.bf16.msra.mxu0 0
        %591 = vmatprep.subr.bf16.mxu0 0
        %592 = vmatpush2.bf16.msra.mxu0 0
        %593 = vmatprep.subr.bf16.mxu0 0
        %594 = vmatpush2.bf16.msra.mxu0 0
        %595 = vmatprep.mubr.bf16.mxu0 0
        %596 = vmatmul.mubr.bf16.gmra.mxu0 %v561
        %v597 = vpop.f32.mrf.mxu0
        %v598 = vadd.f32 0.0, %v597
        %v599 = vpop.f32.mrf.mxu0
        %v600 = vpop.f32.mrf.mxu0
        %v601 = vpop.f32.mrf.mxu0
        %602 = vdwg.mxu0
        %v605 = vunpack.c.l.b16 %v549
        %v606 = vunpack.c.l.b16 %v550
        %v607 = vpack.c.b16 %v606, %v605
        %v610 = vsel %vm510, %v533, 0
        %612 = vmatprep.subr.bf16.mxu0 0
        %613 = vmatpush1.bf16.msra.mxu0 0
        %614 = vmatprep.subr.bf16.mxu0 0
        %615 = vmatpush1.bf16.msra.mxu0 0
        %616 = vmatprep.subr.bf16.mxu0 0
        %617 = vmatpush1.bf16.msra.mxu0 0
        %618 = vmatprep.subr.bf16.mxu0 0
        %619 = vmatpush1.bf16.msra.mxu0 0
        %620 = vmatprep.subr.bf16.mxu0 0
        %621 = vmatpush1.bf16.msra.mxu0 0
        %622 = vmatprep.subr.bf16.mxu0 0
        %623 = vmatpush1.bf16.msra.mxu0 0
        %624 = vmatprep.subr.bf16.mxu0 0
        %625 = vmatpush1.bf16.msra.mxu0 0
        %626 = vmatprep.subr.bf16.mxu0 0
        %627 = vmatpush1.bf16.msra.mxu0 %v607
        %628 = vmatprep.subr.bf16.mxu0 0
        %629 = vmatpush2.bf16.msra.mxu0 0
        %630 = vmatprep.subr.bf16.mxu0 0
        %631 = vmatpush2.bf16.msra.mxu0 0
        %632 = vmatprep.subr.bf16.mxu0 0
        %633 = vmatpush2.bf16.msra.mxu0 0
        %634 = vmatprep.subr.bf16.mxu0 0
        %635 = vmatpush2.bf16.msra.mxu0 0
        %636 = vmatprep.subr.bf16.mxu0 0
        %637 = vmatpush2.bf16.msra.mxu0 0
        %638 = vmatprep.subr.bf16.mxu0 0
        %639 = vmatpush2.bf16.msra.mxu0 0
        %640 = vmatprep.subr.bf16.mxu0 0
        %641 = vmatpush2.bf16.msra.mxu0 0
        %642 = vmatprep.subr.bf16.mxu0 0
        %643 = vmatpush2.bf16.msra.mxu0 0
        %644 = vmatprep.mubr.bf16.mxu0 0
        %645 = vmatmul.mubr.bf16.gmra.mxu0 %v610
        %v646 = vpop.f32.mrf.mxu0
        %v647 = vadd.f32 %v598, %v646
        %v648 = vpop.f32.mrf.mxu0
        %v649 = vpop.f32.mrf.mxu0
        %v650 = vpop.f32.mrf.mxu0
        %651 = vdwg.mxu0
        %v652 = vld [vmem:[#allocation2] sm:$0xf]
        %v653 = vld [vmem:[#allocation2 + $0x4] sm:$0x1]
        %s654 = scalar_lea.vmem %s4, 8
        %v655 = vld [vmem:[%s654] sm:$0xf]
        %v656 = vld [vmem:[%s654 + $0x4] sm:$0xf]
        %v659 = vunpack.c.l.b16 %v652
        %v660 = vunpack.c.l.b16 %v653
        %v661 = vpack.c.b16 %v660, %v659
        %v663 = vshrl.u32 %v661, 16
        %v665 = vshll.u32 %v661, 16
        %v667 = vrot.slane %v665, 1
        %v668 = vor.u32 %v663, %v667
        %v671 = vunpack.c.l.b16 %v655
        %v672 = vunpack.c.l.b16 %v656
        %v673 = vpack.c.b16 %v672, %v671
        %v676 = vsel %vm510, %v668, 0
        %678 = vmatprep.subr.bf16.mxu0 0
        %679 = vmatpush1.bf16.msra.mxu0 0
        %680 = vmatprep.subr.bf16.mxu0 0
        %681 = vmatpush1.bf16.msra.mxu0 0
        %682 = vmatprep.subr.bf16.mxu0 0
        %683 = vmatpush1.bf16.msra.mxu0 0
        %684 = vmatprep.subr.bf16.mxu0 0
        %685 = vmatpush1.bf16.msra.mxu0 0
        %686 = vmatprep.subr.bf16.mxu0 0
        %687 = vmatpush1.bf16.msra.mxu0 0
        %688 = vmatprep.subr.bf16.mxu0 0
        %689 = vmatpush1.bf16.msra.mxu0 0
        %690 = vmatprep.subr.bf16.mxu0 0
        %691 = vmatpush1.bf16.msra.mxu0 0
        %692 = vmatprep.subr.bf16.mxu0 0
        %693 = vmatpush1.bf16.msra.mxu0 %v673
        %694 = vmatprep.subr.bf16.mxu0 0
        %695 = vmatpush2.bf16.msra.mxu0 0
        %696 = vmatprep.subr.bf16.mxu0 0
        %697 = vmatpush2.bf16.msra.mxu0 0
        %698 = vmatprep.subr.bf16.mxu0 0
        %699 = vmatpush2.bf16.msra.mxu0 0
        %700 = vmatprep.subr.bf16.mxu0 0
        %701 = vmatpush2.bf16.msra.mxu0 0
        %702 = vmatprep.subr.bf16.mxu0 0
        %703 = vmatpush2.bf16.msra.mxu0 0
        %704 = vmatprep.subr.bf16.mxu0 0
        %705 = vmatpush2.bf16.msra.mxu0 0
        %706 = vmatprep.subr.bf16.mxu0 0
        %707 = vmatpush2.bf16.msra.mxu0 0
        %708 = vmatprep.subr.bf16.mxu0 0
        %709 = vmatpush2.bf16.msra.mxu0 0
        %710 = vmatprep.mubr.bf16.mxu0 0
        %711 = vmatmul.mubr.bf16.gmra.mxu0 %v676
        %v712 = vpop.f32.mrf.mxu0
        %v713 = vadd.f32 0.0, %v712
        %v714 = vpop.f32.mrf.mxu0
        %v715 = vpop.f32.mrf.mxu0
        %v716 = vpop.f32.mrf.mxu0
        %717 = vdwg.mxu0
        %v718 = vadd.f32 %v647, %v713
        %v719 = vld [vmem:[%s5] sm:$0x1]
        %v721 = vlaneseq
        %v722 = vshrl.u32 %v721, 7
        %v723 = vsub.s32 0, %v722
        %v724 = vrot.slane %v719, %v723
        %v726 = vadd.f32 %v718, %v724
        %v727 = vmul.f32 %v726, 0.5
        %v728 = vmul.f32 %v726, 0.044715
        %v729 = vmul.f32 %v728, %v726
        %v730 = vmul.f32 %v729, %v726
        %v731 = vadd.f32 %v726, %v730
        %v732 = vmul.f32 %v731, 0.7978846
        %v733 = vtanh.pop %v732
        %v734 = vadd.f32 %v733, 1.0
        %v735 = vmul.f32 %v727, %v734
        %v736 = vpack.c.bf16 %v735, %v735
        %v737 = vld [vmem:[%s507] sm:$0x3]
        %v738 = vpack.c.bf16 %v737, %v737
        %vm739 = vcmask 516096
        %740 = vst.msk [vmem:[#allocation3] sm:$0x1] %vm739, %v738
        %v742 = vunpack.c.l.b16 %v736
        %v743 = vpack.c.b16 %v742, %v742
        %v744 = vrot.slane %v743, 7
        %v745 = vrot.slane %v744, 4
        %vm748 = vcmask 519169
        %749 = vst.msk [vmem:[#allocation3] sm:$0xe] %vm748, %v744
        %750 = vst.msk [vmem:[#allocation3 + $0x4] sm:$0x1] %vm739, %v745
        %s751 = scalar_lea.vmem %s6, 64
        %v752 = vld [vmem:[%s751] sm:$0xf]
        %v753 = vld [vmem:[%s751 + $0x4] sm:$0xf]
        %v754 = vld [vmem:[%s751 + $0x8] sm:$0xf]
        %v755 = vld [vmem:[%s751 + $0xc] sm:$0xf]
        %v756 = vld [vmem:[%s751 + $0x10] sm:$0xf]
        %v757 = vld [vmem:[%s751 + $0x14] sm:$0xf]
        %v758 = vld [vmem:[%s751 + $0x18] sm:$0xf]
        %v759 = vld [vmem:[%s751 + $0x1c] sm:$0xf]
        %v760 = vld [vmem:[#allocation3] sm:$0xf]
        %v761 = vld [vmem:[%s6] sm:$0xf]
        %v762 = vld [vmem:[%s6 + $0x4] sm:$0xf]
        %v763 = vld [vmem:[%s6 + $0x8] sm:$0xf]
        %v764 = vld [vmem:[%s6 + $0xc] sm:$0xf]
        %v765 = vld [vmem:[%s6 + $0x10] sm:$0xf]
        %v766 = vld [vmem:[%s6 + $0x14] sm:$0xf]
        %v767 = vld [vmem:[%s6 + $0x18] sm:$0xf]
        %v768 = vld [vmem:[%s6 + $0x1c] sm:$0xf]
        %v777 = vunpack.c.l.b16 %v761
        %v778 = vunpack.c.l.b16 %v762
        %v779 = vunpack.c.l.b16 %v763
        %v780 = vunpack.c.l.b16 %v764
        %v781 = vunpack.c.l.b16 %v765
        %v782 = vunpack.c.l.b16 %v766
        %v783 = vunpack.c.l.b16 %v767
        %v784 = vunpack.c.l.b16 %v768
        %v785 = vpack.c.b16 %v778, %v777
        %v786 = vpack.c.b16 %v780, %v779
        %v787 = vpack.c.b16 %v782, %v781
        %v788 = vpack.c.b16 %v784, %v783
        %vm793 = vcmask 523264
        %v795 = vsel %vm793, %v760, 0
        %797 = vmatprep.subr.bf16.mxu0 0
        %798 = vmatpush1.bf16.msra.mxu0 0
        %799 = vmatprep.subr.bf16.mxu0 0
        %800 = vmatpush1.bf16.msra.mxu0 0
        %801 = vmatprep.subr.bf16.mxu0 0
        %802 = vmatpush1.bf16.msra.mxu0 0
        %803 = vmatprep.subr.bf16.mxu0 0
        %804 = vmatpush1.bf16.msra.mxu0 0
        %805 = vmatprep.subr.bf16.mxu0 0
        %806 = vmatpush1.bf16.msra.mxu0 %v788
        %807 = vmatprep.subr.bf16.mxu0 0
        %808 = vmatpush1.bf16.msra.mxu0 %v787
        %809 = vmatprep.subr.bf16.mxu0 0
        %810 = vmatpush1.bf16.msra.mxu0 %v786
        %811 = vmatprep.subr.bf16.mxu0 0
        %812 = vmatpush1.bf16.msra.mxu0 %v785
        %813 = vmatprep.subr.bf16.mxu0 0
        %814 = vmatpush2.bf16.msra.mxu0 0
        %815 = vmatprep.subr.bf16.mxu0 0
        %816 = vmatpush2.bf16.msra.mxu0 0
        %817 = vmatprep.subr.bf16.mxu0 0
        %818 = vmatpush2.bf16.msra.mxu0 0
        %819 = vmatprep.subr.bf16.mxu0 0
        %820 = vmatpush2.bf16.msra.mxu0 0
        %821 = vmatprep.subr.bf16.mxu0 0
        %822 = vmatpush2.bf16.msra.mxu0 0
        %823 = vmatprep.subr.bf16.mxu0 0
        %824 = vmatpush2.bf16.msra.mxu0 0
        %825 = vmatprep.subr.bf16.mxu0 0
        %826 = vmatpush2.bf16.msra.mxu0 0
        %827 = vmatprep.subr.bf16.mxu0 0
        %828 = vmatpush2.bf16.msra.mxu0 0
        %829 = vmatprep.mubr.bf16.mxu0 0
        %830 = vmatmul.mubr.bf16.gmra.mxu0 %v795
        %v831 = vpop.f32.mrf.mxu0
        %v832 = vadd.f32 0.0, %v831
        %v833 = vpop.f32.mrf.mxu0
        %v834 = vpop.f32.mrf.mxu0
        %v835 = vpop.f32.mrf.mxu0
        %836 = vdwg.mxu0
        %v845 = vunpack.c.l.b16 %v752
        %v846 = vunpack.c.l.b16 %v753
        %v847 = vunpack.c.l.b16 %v754
        %v848 = vunpack.c.l.b16 %v755
        %v849 = vunpack.c.l.b16 %v756
        %v850 = vunpack.c.l.b16 %v757
        %v851 = vunpack.c.l.b16 %v758
        %v852 = vunpack.c.l.b16 %v759
        %v853 = vpack.c.b16 %v846, %v845
        %v854 = vpack.c.b16 %v848, %v847
        %v855 = vpack.c.b16 %v850, %v849
        %v856 = vpack.c.b16 %v852, %v851
        %v862 = vsel %vm793, %v736, 0
        %864 = vmatprep.subr.bf16.mxu0 0
        %865 = vmatpush1.bf16.msra.mxu0 0
        %866 = vmatprep.subr.bf16.mxu0 0
        %867 = vmatpush1.bf16.msra.mxu0 0
        %868 = vmatprep.subr.bf16.mxu0 0
        %869 = vmatpush1.bf16.msra.mxu0 0
        %870 = vmatprep.subr.bf16.mxu0 0
        %871 = vmatpush1.bf16.msra.mxu0 0
        %872 = vmatprep.subr.bf16.mxu0 0
        %873 = vmatpush1.bf16.msra.mxu0 %v856
        %874 = vmatprep.subr.bf16.mxu0 0
        %875 = vmatpush1.bf16.msra.mxu0 %v855
        %876 = vmatprep.subr.bf16.mxu0 0
        %877 = vmatpush1.bf16.msra.mxu0 %v854
        %878 = vmatprep.subr.bf16.mxu0 0
        %879 = vmatpush1.bf16.msra.mxu0 %v853
        %880 = vmatprep.subr.bf16.mxu0 0
        %881 = vmatpush2.bf16.msra.mxu0 0
        %882 = vmatprep.subr.bf16.mxu0 0
        %883 = vmatpush2.bf16.msra.mxu0 0
        %884 = vmatprep.subr.bf16.mxu0 0
        %885 = vmatpush2.bf16.msra.mxu0 0
        %886 = vmatprep.subr.bf16.mxu0 0
        %887 = vmatpush2.bf16.msra.mxu0 0
        %888 = vmatprep.subr.bf16.mxu0 0
        %889 = vmatpush2.bf16.msra.mxu0 0
        %890 = vmatprep.subr.bf16.mxu0 0
        %891 = vmatpush2.bf16.msra.mxu0 0
        %892 = vmatprep.subr.bf16.mxu0 0
        %893 = vmatpush2.bf16.msra.mxu0 0
        %894 = vmatprep.subr.bf16.mxu0 0
        %895 = vmatpush2.bf16.msra.mxu0 0
        %896 = vmatprep.mubr.bf16.mxu0 0
        %897 = vmatmul.mubr.bf16.gmra.mxu0 %v862
        %v898 = vpop.f32.mrf.mxu0
        %v899 = vadd.f32 %v832, %v898
        %v900 = vpop.f32.mrf.mxu0
        %v901 = vpop.f32.mrf.mxu0
        %v902 = vpop.f32.mrf.mxu0
        %903 = vdwg.mxu0
        %v904 = vld [vmem:[#allocation3] sm:$0xf]
        %v905 = vld [vmem:[#allocation3 + $0x4] sm:$0x1]
        %s906 = scalar_lea.vmem %s6, 32
        %v907 = vld [vmem:[%s906] sm:$0xf]
        %v908 = vld [vmem:[%s906 + $0x4] sm:$0xf]
        %v909 = vld [vmem:[%s906 + $0x8] sm:$0xf]
        %v910 = vld [vmem:[%s906 + $0xc] sm:$0xf]
        %v911 = vld [vmem:[%s906 + $0x10] sm:$0xf]
        %v912 = vld [vmem:[%s906 + $0x14] sm:$0xf]
        %v913 = vld [vmem:[%s906 + $0x18] sm:$0xf]
        %v914 = vld [vmem:[%s906 + $0x1c] sm:$0xf]
        %v917 = vunpack.c.l.b16 %v904
        %v918 = vunpack.c.l.b16 %v905
        %v919 = vpack.c.b16 %v918, %v917
        %v921 = vshrl.u32 %v919, 16
        %v923 = vshll.u32 %v919, 16
        %v925 = vrot.slane %v923, 1
        %v926 = vor.u32 %v921, %v925
        %v935 = vunpack.c.l.b16 %v907
        %v936 = vunpack.c.l.b16 %v908
        %v937 = vunpack.c.l.b16 %v909
        %v938 = vunpack.c.l.b16 %v910
        %v939 = vunpack.c.l.b16 %v911
        %v940 = vunpack.c.l.b16 %v912
        %v941 = vunpack.c.l.b16 %v913
        %v942 = vunpack.c.l.b16 %v914
        %v943 = vpack.c.b16 %v936, %v935
        %v944 = vpack.c.b16 %v938, %v937
        %v945 = vpack.c.b16 %v940, %v939
        %v946 = vpack.c.b16 %v942, %v941
        %v952 = vsel %vm793, %v926, 0
        %954 = vmatprep.subr.bf16.mxu0 0
        %955 = vmatpush1.bf16.msra.mxu0 0
        %956 = vmatprep.subr.bf16.mxu0 0
        %957 = vmatpush1.bf16.msra.mxu0 0
        %958 = vmatprep.subr.bf16.mxu0 0
        %959 = vmatpush1.bf16.msra.mxu0 0
        %960 = vmatprep.subr.bf16.mxu0 0
        %961 = vmatpush1.bf16.msra.mxu0 0
        %962 = vmatprep.subr.bf16.mxu0 0
        %963 = vmatpush1.bf16.msra.mxu0 %v946
        %964 = vmatprep.subr.bf16.mxu0 0
        %965 = vmatpush1.bf16.msra.mxu0 %v945
        %966 = vmatprep.subr.bf16.mxu0 0
        %967 = vmatpush1.bf16.msra.mxu0 %v944
        %968 = vmatprep.subr.bf16.mxu0 0
        %969 = vmatpush1.bf16.msra.mxu0 %v943
        %970 = vmatprep.subr.bf16.mxu0 0
        %971 = vmatpush2.bf16.msra.mxu0 0
        %972 = vmatprep.subr.bf16.mxu0 0
        %973 = vmatpush2.bf16.msra.mxu0 0
        %974 = vmatprep.subr.bf16.mxu0 0
        %975 = vmatpush2.bf16.msra.mxu0 0
        %976 = vmatprep.subr.bf16.mxu0 0
        %977 = vmatpush2.bf16.msra.mxu0 0
        %978 = vmatprep.subr.bf16.mxu0 0
        %979 = vmatpush2.bf16.msra.mxu0 0
        %980 = vmatprep.subr.bf16.mxu0 0
        %981 = vmatpush2.bf16.msra.mxu0 0
        %982 = vmatprep.subr.bf16.mxu0 0
        %983 = vmatpush2.bf16.msra.mxu0 0
        %984 = vmatprep.subr.bf16.mxu0 0
        %985 = vmatpush2.bf16.msra.mxu0 0
        %986 = vmatprep.mubr.bf16.mxu0 0
        %987 = vmatmul.mubr.bf16.gmra.mxu0 %v952
        %v988 = vpop.f32.mrf.mxu0
        %v989 = vadd.f32 0.0, %v988
        %v990 = vpop.f32.mrf.mxu0
        %v991 = vpop.f32.mrf.mxu0
        %v992 = vpop.f32.mrf.mxu0
        %993 = vdwg.mxu0
        %v994 = vadd.f32 %v899, %v989
        %v995 = vld [vmem:[%s7] sm:$0x1]
        %v997 = vlaneseq
        %v998 = vshrl.u32 %v997, 7
        %v999 = vsub.s32 0, %v998
        %v1000 = vrot.slane %v995, %v999
        %v1002 = vadd.f32 %v994, %v1000
        %v1003 = vadd.f32 %v1002, %v509
        %vm1004 = vcmask 130054
        %1005 = vst.msk [vmem:[%s495 - $0x6] sm:$0xc0] %vm1004, %v532
        %1007 = vrot.lane.b32.xlu0 %v735, 16
        %v1008 = vpop.permute.xlu0 %1007
        %vm1010 = vcmask 654470
        %1011 = vst.msk [vmem:[%s495 - $0x6] sm:$0xc0] %vm1010, %v1008
        %v1012 = vsel %vm510, %v1003, 0.0
        %1013 = vadd.xlane.f32.xlu0 %v1012
        %v1014 = vpop.xlane.xlu0 %1013
        %v1015 = vmul.f32 %v1014, %v514
        %v1016 = vsub.f32 %v1003, %v1015
        %v1017 = vmul.f32 %v1016, %v1016
        %v1018 = vsel %vm510, %v1017, 0.0
        %1019 = vadd.xlane.f32.xlu0 %v1018
        %v1020 = vpop.xlane.xlu0 %1019
        %v1021 = vmul.f32 %v1020, %v514
        %v1022 = vadd.f32 %v1021, 1e-05
        %v1023 = vrsqrt.pop %v1022
        %v1024 = vmul.f32 %v1016, %v1023
        %v1025 = vld [vmem:[%s8] sm:$0x1]
        %v1027 = vlaneseq
        %v1028 = vshrl.u32 %v1027, 7
        %v1029 = vsub.s32 0, %v1028
        %v1030 = vrot.slane %v1025, %v1029
        %v1032 = vmul.f32 %v1024, %v1030
        %v1033 = vpack.c.bf16 %v1032, %v1032
        %v1034 = vld [vmem:[%s9] sm:$0xf]
        %v1035 = vld [vmem:[%s9 + $0x4] sm:$0xf]
        %v1036 = vld [vmem:[%s10] sm:$0x1]
        %v1038 = vlaneseq
        %v1039 = vshrl.u32 %v1038, 7
        %v1040 = vsub.s32 0, %v1039
        %v1041 = vrot.slane %v1036, %v1040
        %v1045 = vunpack.c.l.b16 %v1034
        %v1046 = vunpack.c.l.b16 %v1035
        %v1047 = vpack.c.b16 %v1046, %v1045
        %v1050 = vsel %vm510, %v1033, 0
        %1052 = vmatprep.subr.bf16.mxu0 0
        %1053 = vmatpush1.bf16.msra.mxu0 0
        %1054 = vmatprep.subr.bf16.mxu0 0
        %1055 = vmatpush1.bf16.msra.mxu0 0
        %1056 = vmatprep.subr.bf16.mxu0 0
        %1057 = vmatpush1.bf16.msra.mxu0 0
        %1058 = vmatprep.subr.bf16.mxu0 0
        %1059 = vmatpush1.bf16.msra.mxu0 0
        %1060 = vmatprep.subr.bf16.mxu0 0
        %1061 = vmatpush1.bf16.msra.mxu0 0
        %1062 = vmatprep.subr.bf16.mxu0 0
        %1063 = vmatpush1.bf16.msra.mxu0 0
        %1064 = vmatprep.subr.bf16.mxu0 0
        %1065 = vmatpush1.bf16.msra.mxu0 0
        %1066 = vmatprep.subr.bf16.mxu0 0
        %1067 = vmatpush1.bf16.msra.mxu0 %v1047
        %1068 = vmatprep.subr.bf16.mxu0 0
        %1069 = vmatpush2.bf16.msra.mxu0 0
        %1070 = vmatprep.subr.bf16.mxu0 0
        %1071 = vmatpush2.bf16.msra.mxu0 0
        %1072 = vmatprep.subr.bf16.mxu0 0
        %1073 = vmatpush2.bf16.msra.mxu0 0
        %1074 = vmatprep.subr.bf16.mxu0 0
        %1075 = vmatpush2.bf16.msra.mxu0 0
        %1076 = vmatprep.subr.bf16.mxu0 0
        %1077 = vmatpush2.bf16.msra.mxu0 0
        %1078 = vmatprep.subr.bf16.mxu0 0
        %1079 = vmatpush2.bf16.msra.mxu0 0
        %1080 = vmatprep.subr.bf16.mxu0 0
        %1081 = vmatpush2.bf16.msra.mxu0 0
        %1082 = vmatprep.subr.bf16.mxu0 0
        %1083 = vmatpush2.bf16.msra.mxu0 0
        %1084 = vmatprep.mubr.bf16.mxu0 0
        %1085 = vmatmul.mubr.bf16.gmra.mxu0 %v1050
        %v1086 = vpop.f32.mrf.mxu0
        %v1087 = vadd.f32 %v1041, %v1086
        %v1088 = vpop.f32.mrf.mxu0
        %v1089 = vpop.f32.mrf.mxu0
        %v1090 = vpop.f32.mrf.mxu0
        %1091 = vdwg.mxu0
        %v1092 = vmul.f32 %v1087, 0.5
        %v1093 = vmul.f32 %v1087, 0.044715
        %v1094 = vmul.f32 %v1093, %v1087
        %v1095 = vmul.f32 %v1094, %v1087
        %v1096 = vadd.f32 %v1087, %v1095
        %v1097 = vmul.f32 %v1096, 0.7978846
        %v1098 = vtanh.pop %v1097
        %v1099 = vadd.f32 %v1098, 1.0
        %v1100 = vmul.f32 %v1092, %v1099
        %v1101 = vpack.c.bf16 %v1100, %v1100
        %v1102 = vld [vmem:[%s11] sm:$0xf]
        %v1103 = vld [vmem:[%s11 + $0x4] sm:$0xf]
        %v1104 = vld [vmem:[%s11 + $0x8] sm:$0xf]
        %v1105 = vld [vmem:[%s11 + $0xc] sm:$0xf]
        %v1106 = vld [vmem:[%s11 + $0x10] sm:$0xf]
        %v1107 = vld [vmem:[%s11 + $0x14] sm:$0xf]
        %v1108 = vld [vmem:[%s11 + $0x18] sm:$0xf]
        %v1109 = vld [vmem:[%s11 + $0x1c] sm:$0xf]
        %v1110 = vld [vmem:[%s12] sm:$0x1]
        %v1112 = vlaneseq
        %v1113 = vshrl.u32 %v1112, 7
        %v1114 = vsub.s32 0, %v1113
        %v1115 = vrot.slane %v1110, %v1114
        %v1125 = vunpack.c.l.b16 %v1102
        %v1126 = vunpack.c.l.b16 %v1103
        %v1127 = vunpack.c.l.b16 %v1104
        %v1128 = vunpack.c.l.b16 %v1105
        %v1129 = vunpack.c.l.b16 %v1106
        %v1130 = vunpack.c.l.b16 %v1107
        %v1131 = vunpack.c.l.b16 %v1108
        %v1132 = vunpack.c.l.b16 %v1109
        %v1133 = vpack.c.b16 %v1126, %v1125
        %v1134 = vpack.c.b16 %v1128, %v1127
        %v1135 = vpack.c.b16 %v1130, %v1129
        %v1136 = vpack.c.b16 %v1132, %v1131
        %v1142 = vsel %vm793, %v1101, 0
        %1144 = vmatprep.subr.bf16.mxu0 0
        %1145 = vmatpush1.bf16.msra.mxu0 0
        %1146 = vmatprep.subr.bf16.mxu0 0
        %1147 = vmatpush1.bf16.msra.mxu0 0
        %1148 = vmatprep.subr.bf16.mxu0 0
        %1149 = vmatpush1.bf16.msra.mxu0 0
        %1150 = vmatprep.subr.bf16.mxu0 0
        %1151 = vmatpush1.bf16.msra.mxu0 0
        %1152 = vmatprep.subr.bf16.mxu0 0
        %1153 = vmatpush1.bf16.msra.mxu0 %v1136
        %1154 = vmatprep.subr.bf16.mxu0 0
        %1155 = vmatpush1.bf16.msra.mxu0 %v1135
        %1156 = vmatprep.subr.bf16.mxu0 0
        %1157 = vmatpush1.bf16.msra.mxu0 %v1134
        %1158 = vmatprep.subr.bf16.mxu0 0
        %1159 = vmatpush1.bf16.msra.mxu0 %v1133
        %1160 = vmatprep.subr.bf16.mxu0 0
        %1161 = vmatpush2.bf16.msra.mxu0 0
        %1162 = vmatprep.subr.bf16.mxu0 0
        %1163 = vmatpush2.bf16.msra.mxu0 0
        %1164 = vmatprep.subr.bf16.mxu0 0
        %1165 = vmatpush2.bf16.msra.mxu0 0
        %1166 = vmatprep.subr.bf16.mxu0 0
        %1167 = vmatpush2.bf16.msra.mxu0 0
        %1168 = vmatprep.subr.bf16.mxu0 0
        %1169 = vmatpush2.bf16.msra.mxu0 0
        %1170 = vmatprep.subr.bf16.mxu0 0
        %1171 = vmatpush2.bf16.msra.mxu0 0
        %1172 = vmatprep.subr.bf16.mxu0 0
        %1173 = vmatpush2.bf16.msra.mxu0 0
        %1174 = vmatprep.subr.bf16.mxu0 0
        %1175 = vmatpush2.bf16.msra.mxu0 0
        %1176 = vmatprep.mubr.bf16.mxu0 0
        %1177 = vmatmul.mubr.bf16.gmra.mxu0 %v1142
        %v1178 = vpop.f32.mrf.mxu0
        %v1179 = vadd.f32 %v1115, %v1178
        %v1180 = vpop.f32.mrf.mxu0
        %v1181 = vpop.f32.mrf.mxu0
        %v1182 = vpop.f32.mrf.mxu0
        %1183 = vdwg.mxu0
        %v1184 = vadd.f32 %v1179, %v1003
        %1185 = vst.msk [vmem:[%s488] sm:$0xff] %vm510, %v1184
        %s1186 = sand.u32 %s328, 1
        %s1187 = scalar_lea.sflag [#allocation5], %s1186
        %s1188 = sand.u32 %s328, 1
        %s1189 = smul.addr %s1188, 8
        %s1190 = scalar_lea.vmem [#allocation4], %s1189
        %s1191 = sand.u32 %s354, 1
        %s1192 = scalar_lea.sflag [#allocation7], %s1191
        %s1193 = sand.u32 %s354, 1
        %s1194 = smul.addr %s1193, 2
        %s1195 = scalar_lea.vmem [#allocation6], %s1194
        // Predicated region
        $region73: #{pips_conv_block.1} parent=71 // pred_check
          %p1196 = pneg %p338
        $region74: #{pips_conv_block.1} parent=71 // pred_check_branch
          %1198 = sbr.rel (%p1196) target = $region76
        $region75: #{pips_conv_block.1} parent=71 // pred_region
          %s1200 = ssub.s32 128, 128
          %1201 = vsyncadd %s1187, %s1200
          %s1202 = smul.addr %s32, 128
          %s1203 = scalar_lea.hbm %s13, %s1202
          %s1205 = sshll.u32 %s1190, 4
          %s1206 = int_to_ptr.vmem [resolvable:$true] %s1205
          %1208 = dma.vmem_to_hbm [thread:$0]  %s1206, 128, %s1203, %s1187
        $region76: #{pips_conv_block.1} parent=71 // pred_fallthru
          _
        // Predicated region
        $region77: #{pips_conv_block.1} parent=71 // pred_check
          %p1209 = pneg %p364
        $region78: #{pips_conv_block.1} parent=71 // pred_check_branch
          %1211 = sbr.rel (%p1209) target = $region80
        $region79: #{pips_conv_block.1} parent=71 // pred_region
          %s1213 = ssub.s32 32, 32
          %1214 = vsyncadd %s1192, %s1213
          %s1215 = smul.addr %s32, 32
          %s1216 = scalar_lea.hbm %s14, %s1215
          %s1218 = sshll.u32 %s1195, 4
          %s1219 = int_to_ptr.vmem [resolvable:$true] %s1218
          %1221 = dma.vmem_to_hbm [thread:$0]  %s1219, 32, %s1216, %s1192
        $region80: #{pips_conv_block.1} parent=71 // pred_fallthru
          _
      $region72: #{pips_conv_block.1} parent=5 // pred_fallthru
        _
      %p1222 = scmp.le.s32.totalorder 2, %s27
      // Predicated region
      $region81: #{pips_conv_block.1} parent=5 // pred_check
        %p1223 = pneg %p1222
      $region82: #{pips_conv_block.1} parent=5 // pred_check_branch
        %1225 = sbr.rel (%p1223) target = $region84
      $region83: #{pips_conv_block.1} parent=5 // pred_region
        %s1226 = ssub.s32 %s27, 2
        // Predicated region
        $region85: #{pips_conv_block.1} parent=83 // pred_check
          %p1227 = pneg %p344
        $region86: #{pips_conv_block.1} parent=83 // pred_check_branch
          %1229 = sbr.rel (%p1227) target = $region88
        $region87: #{pips_conv_block.1} parent=83 // pred_region
          %s1230 = sand.u32 %s329, 1
          %s1231 = scalar_lea.sflag [#allocation5], %s1230
          %s1232 = sand.u32 %s329, 1
          %s1233 = smul.addr %s1232, 8
          %s1234 = scalar_lea.vmem [#allocation4], %s1233
          %1235 = dma.done %s1231, 128
        $region88: #{pips_conv_block.1} parent=83 // pred_fallthru
          _
        // Predicated region
        $region89: #{pips_conv_block.1} parent=83 // pred_check
          %p1236 = pneg %p370
        $region90: #{pips_conv_block.1} parent=83 // pred_check_branch
          %1238 = sbr.rel (%p1236) target = $region92
        $region91: #{pips_conv_block.1} parent=83 // pred_region
          %s1239 = sand.u32 %s355, 1
          %s1240 = scalar_lea.sflag [#allocation7], %s1239
          %s1241 = sand.u32 %s355, 1
          %s1242 = smul.addr %s1241, 2
          %s1243 = scalar_lea.vmem [#allocation6], %s1242
          %1244 = dma.done %s1240, 32
        $region92: #{pips_conv_block.1} parent=83 // pred_fallthru
          _
      $region84: #{pips_conv_block.1} parent=5 // pred_fallthru
        _
    $region6: #{pips_conv_block.1} parent=1 // loop_footer
      %s31 = sadd.s32 1, %s27
    $region7: #{pips_conv_block.1} parent=1 // loop_footer_branch
      %26 = sbr.rel target = $region3
    $region8: #{pips_conv_block.1} parent=1 // loop_exit
      _
    %1245 = vsyncpa [#allocation5], 1
    %s1246 = scalar_lea.sflag [#allocation5], 1
    %1247 = vsyncpa %s1246, 1
    %1248 = vsyncpa [#allocation7], 1
    %s1249 = scalar_lea.sflag [#allocation7], 1
    %1250 = vsyncpa %s1249, 1

// kernel: pips_conv_block.1
$region0: #{pips_conv_block.1}
  #allocation0 [shape = 'u32[]', space=smem, size = 0x4, offset = 0x4, fixed_abs, tag = 'smem constant byte address 0x4 - core index']
  #allocation1 [shape = 'u32[144,128]{1,0:T(1,128)}', space=vmem, size = 0x12000, scoped, tag = 'internal scratch']
  #allocation2 [shape = 'bf16[1,10,16]{2,1,0:T(8,128)(2,1)}', space=vmem, size = 0x1000, scoped, tag = 'scratch operand']
  #allocation3 [shape = 'bf16[1,10,64]{2,1,0:T(8,128)(2,1)}', space=vmem, size = 0x1000, scoped, tag = 'scratch operand']
  %s0 = inlined_call_operand.vmem [shape: f32[2,8,16], index: 0, kind: input, shape index: {}]
  %s1 = inlined_call_operand.vmem [shape: f32[2,2,16], index: 1, kind: input, shape index: {}]
  %s2 = inlined_call_operand.vmem [shape: f32[2,2,64], index: 2, kind: input, shape index: {}]
  %s3 = inlined_call_operand.vmem [shape: f32[1,16], index: 3, kind: input, shape index: {}]
  %s4 = inlined_call_operand.vmem [shape: bf16[3,16,64], index: 4, kind: input, shape index: {}]
  %s5 = inlined_call_operand.vmem [shape: f32[1,64], index: 5, kind: input, shape index: {}]
  %s6 = inlined_call_operand.vmem [shape: bf16[3,64,16], index: 6, kind: input, shape index: {}]
  %s7 = inlined_call_operand.vmem [shape: f32[1,16], index: 7, kind: input, shape index: {}]
  %s8 = inlined_call_operand.vmem [shape: f32[1,16], index: 8, kind: input, shape index: {}]
  %s9 = inlined_call_operand.vmem [shape: bf16[16,64], index: 9, kind: input, shape index: {}]
  %s10 = inlined_call_operand.vmem [shape: f32[1,64], index: 10, kind: input, shape index: {}]
  %s11 = inlined_call_operand.vmem [shape: bf16[64,16], index: 11, kind: input, shape index: {}]
  %s12 = inlined_call_operand.vmem [shape: f32[1,16], index: 12, kind: input, shape index: {}]
  %s13 = inlined_call_operand.hbm [shape: f32[2,8,16], index: 13, kind: output, shape index: {0}]
  %s14 = inlined_call_operand.hbm [shape: f32[2,2,80], index: 14, kind: output, shape index: {1}]
  %15 = xla_tuple %s13, %s14
  %s16 = sld [smem:[#allocation0]]
  $region93: #{pips_conv_block.1} parent=0
    _
  %s18 = ssub.s32 1, %s16
  %s19 = scalar_select 0, %s18, %s16
  $region1: #{pips_conv_block.1} parent=0
    #allocation4 [shape = 'u8[8192]{0}', space=vmem, size = 0x2000, scoped, tag = 'output window, operand 0']
    #allocation5 [shape = 's32[2]{0}', space=sflag, size = 0x8, scoped, tag = 'scoped memory for pips_conv_block.1']
    #allocation6 [shape = 'u8[2048]{0}', space=vmem, size = 0x800, scoped, tag = 'output window, operand 1']
    #allocation7 [shape = 's32[2]{0}', space=sflag, size = 0x8, scoped, tag = 'scoped memory for pips_conv_block.1']
    %20 = vsyncpa [#allocation5], 0
    %s21 = scalar_lea.sflag [#allocation5], 1
    %22 = vsyncpa %s21, 0
    %23 = vsyncpa [#allocation7], 0
    %s24 = scalar_lea.sflag [#allocation7], 1
    %25 = vsyncpa %s24, 0
    loop: start=0, step=1, limit=4
    $region2: #{pips_conv_block.1} parent=1 // loop_pre_header
      _
    $region3: #{pips_conv_block.1} parent=1 // loop_header
      %s27 = sphi 0, %s31
      %p28 = scmp.ge.s32.totalorder %s27, 4
      %s37 = sphi 0, %s39
      %s40 = sphi 0, %s37
      %s41 = sphi 0, %s40
      %s57 = sphi 0, %s41
      %s63 = sphi 0, %s65
      %s66 = sphi 0, %s63
      %s67 = sphi 0, %s66
      %s83 = sphi 0, %s67
      %s89 = sphi 0, %s91
      %s92 = sphi 0, %s89
      %s93 = sphi 0, %s92
      %s109 = sphi 0, %s93
      %s113 = sphi 0, %s113
      %s115 = sphi 0, %s113
      %s116 = sphi 0, %s115
      %s130 = sphi 0, %s116
      %s134 = sphi 0, %s134
      %s136 = sphi 0, %s134
      %s137 = sphi 0, %s136
      %s151 = sphi 0, %s137
      %s155 = sphi 0, %s155
      %s157 = sphi 0, %s155
      %s158 = sphi 0, %s157
      %s172 = sphi 0, %s158
      %s176 = sphi 0, %s176
      %s178 = sphi 0, %s176
      %s179 = sphi 0, %s178
      %s193 = sphi 0, %s179
      %s197 = sphi 0, %s197
      %s199 = sphi 0, %s197
      %s200 = sphi 0, %s199
      %s214 = sphi 0, %s200
      %s218 = sphi 0, %s218
      %s220 = sphi 0, %s218
      %s221 = sphi 0, %s220
      %s235 = sphi 0, %s221
      %s239 = sphi 0, %s239
      %s241 = sphi 0, %s239
      %s242 = sphi 0, %s241
      %s256 = sphi 0, %s242
      %s260 = sphi 0, %s260
      %s262 = sphi 0, %s260
      %s263 = sphi 0, %s262
      %s277 = sphi 0, %s263
      %s281 = sphi 0, %s281
      %s283 = sphi 0, %s281
      %s284 = sphi 0, %s283
      %s298 = sphi 0, %s284
      %s302 = sphi 0, %s302
      %s304 = sphi 0, %s302
      %s305 = sphi 0, %s304
      %s319 = sphi 0, %s305
      %s325 = sphi 0, %s327
      %s328 = sphi 0, %s325
      %s329 = sphi 0, %s328
      %s345 = sphi 0, %s329
      %s351 = sphi 0, %s353
      %s354 = sphi 0, %s351
      %s355 = sphi 0, %s354
      %s371 = sphi 0, %s355
    $region4: #{pips_conv_block.1} parent=1 // loop_header_branch
      %30 = sbr.rel (%p28) target = $region8
    $region5: #{pips_conv_block.1} parent=1 // loop_body
      %s32 = ssub.s32 %s27, 1
      %s33 = ssub.s32 %s27, 2
      %s34 = sadd.s32 %s27, 1
      %s35 = ssub.s32 %s27, %s34
      %p36 = scmp.eq.s32.totalorder %s35, 0
      %s38 = sadd.s32 %s37, 1
      %s39 = scalar_select %p36, %s37, %s38
      %p42 = pneg %p36
      %p43 = scmp.eq.s32.totalorder %s27, 1
      %p44 = por %p42, %p43
      %p45 = scmp.ne.s32.totalorder %s37, %s40
      %p46 = scmp.eq.s32.totalorder %s27, 0
      %p47 = por %p45, %p46
      %p48 = scmp.ne.s32.totalorder %s37, %s40
      %p49 = scmp.eq.s32.totalorder %s32, 1
      %p50 = por %p48, %p49
      %p51 = scmp.ne.s32.totalorder %s40, %s41
      %p52 = scmp.eq.s32.totalorder %s32, 0
      %p53 = por %p51, %p52
      %p54 = scmp.ne.s32.totalorder %s40, %s41
      %p55 = scmp.eq.s32.totalorder %s33, 1
      %p56 = por %p54, %p55
      %p58 = scmp.ne.s32.totalorder %s41, %s57
      %p59 = scmp.eq.s32.totalorder %s33, 0
      %p60 = por %p58, %p59
      %s61 = ssub.s32 %s27, %s34
      %p62 = scmp.eq.s32.totalorder %s61, 0
      %s64 = sadd.s32 %s63, 1
      %s65 = scalar_select %p62, %s63, %s64
      %p68 = pneg %p62
      %p69 = scmp.eq.s32.totalorder %s27, 1
      %p70 = por %p68, %p69
      %p71 = scmp.ne.s32.totalorder %s63, %s66
      %p72 = scmp.eq.s32.totalorder %s27, 0
      %p73 = por %p71, %p72
      %p74 = scmp.ne.s32.totalorder %s63, %s66
      %p75 = scmp.eq.s32.totalorder %s32, 1
      %p76 = por %p74, %p75
      %p77 = scmp.ne.s32.totalorder %s66, %s67
      %p78 = scmp.eq.s32.totalorder %s32, 0
      %p79 = por %p77, %p78
      %p80 = scmp.ne.s32.totalorder %s66, %s67
      %p81 = scmp.eq.s32.totalorder %s33, 1
      %p82 = por %p80, %p81
      %p84 = scmp.ne.s32.totalorder %s67, %s83
      %p85 = scmp.eq.s32.totalorder %s33, 0
      %p86 = por %p84, %p85
      %s87 = ssub.s32 %s27, %s34
      %p88 = scmp.eq.s32.totalorder %s87, 0
      %s90 = sadd.s32 %s89, 1
      %s91 = scalar_select %p88, %s89, %s90
      %p94 = pneg %p88
      %p95 = scmp.eq.s32.totalorder %s27, 1
      %p96 = por %p94, %p95
      %p97 = scmp.ne.s32.totalorder %s89, %s92
      %p98 = scmp.eq.s32.totalorder %s27, 0
      %p99 = por %p97, %p98
      %p100 = scmp.ne.s32.totalorder %s89, %s92
      %p101 = scmp.eq.s32.totalorder %s32, 1
      %p102 = por %p100, %p101
      %p103 = scmp.ne.s32.totalorder %s92, %s93
      %p104 = scmp.eq.s32.totalorder %s32, 0
      %p105 = por %p103, %p104
      %p106 = scmp.ne.s32.totalorder %s92, %s93
      %p107 = scmp.eq.s32.totalorder %s33, 1
      %p108 = por %p106, %p107
      %p110 = scmp.ne.s32.totalorder %s93, %s109
      %p111 = scmp.eq.s32.totalorder %s33, 0
      %p112 = por %p110, %p111
      %s114 = sadd.s32 %s113, 1
      %p117 = scmp.eq.s32.totalorder %s27, 1
      %p118 = scmp.ne.s32.totalorder %s113, %s115
      %p119 = scmp.eq.s32.totalorder %s27, 0
      %p120 = por %p118, %p119
      %p121 = scmp.ne.s32.totalorder %s113, %s115
      %p122 = scmp.eq.s32.totalorder %s32, 1
      %p123 = por %p121, %p122
      %p124 = scmp.ne.s32.totalorder %s115, %s116
      %p125 = scmp.eq.s32.totalorder %s32, 0
      %p126 = por %p124, %p125
      %p127 = scmp.ne.s32.totalorder %s115, %s116
      %p128 = scmp.eq.s32.totalorder %s33, 1
      %p129 = por %p127, %p128
      %p131 = scmp.ne.s32.totalorder %s116, %s130
      %p132 = scmp.eq.s32.totalorder %s33, 0
      %p133 = por %p131, %p132
      %s135 = sadd.s32 %s134, 1
      %p138 = scmp.eq.s32.totalorder %s27, 1
      %p139 = scmp.ne.s32.totalorder %s134, %s136
      %p140 = scmp.eq.s32.totalorder %s27, 0
      %p141 = por %p139, %p140
      %p142 = scmp.ne.s32.totalorder %s134, %s136
      %p143 = scmp.eq.s32.totalorder %s32, 1
      %p144 = por %p142, %p143
      %p145 = scmp.ne.s32.totalorder %s136, %s137
      %p146 = scmp.eq.s32.totalorder %s32, 0
      %p147 = por %p145, %p146
      %p148 = scmp.ne.s32.totalorder %s136, %s137
      %p149 = scmp.eq.s32.totalorder %s33, 1
      %p150 = por %p148, %p149
      %p152 = scmp.ne.s32.totalorder %s137, %s151
      %p153 = scmp.eq.s32.totalorder %s33, 0
      %p154 = por %p152, %p153
      %s156 = sadd.s32 %s155, 1
      %p159 = scmp.eq.s32.totalorder %s27, 1
      %p160 = scmp.ne.s32.totalorder %s155, %s157
      %p161 = scmp.eq.s32.totalorder %s27, 0
      %p162 = por %p160, %p161
      %p163 = scmp.ne.s32.totalorder %s155, %s157
      %p164 = scmp.eq.s32.totalorder %s32, 1
      %p165 = por %p163, %p164
      %p166 = scmp.ne.s32.totalorder %s157, %s158
      %p167 = scmp.eq.s32.totalorder %s32, 0
      %p168 = por %p166, %p167
      %p169 = scmp.ne.s32.totalorder %s157, %s158
      %p170 = scmp.eq.s32.totalorder %s33, 1
      %p171 = por %p169, %p170
      %p173 = scmp.ne.s32.totalorder %s158, %s172
      %p174 = scmp.eq.s32.totalorder %s33, 0
      %p175 = por %p173, %p174
      %s177 = sadd.s32 %s176, 1
      %p180 = scmp.eq.s32.totalorder %s27, 1
      %p181 = scmp.ne.s32.totalorder %s176, %s178
      %p182 = scmp.eq.s32.totalorder %s27, 0
      %p183 = por %p181, %p182
      %p184 = scmp.ne.s32.totalorder %s176, %s178
      %p185 = scmp.eq.s32.totalorder %s32, 1
      %p186 = por %p184, %p185
      %p187 = scmp.ne.s32.totalorder %s178, %s179
      %p188 = scmp.eq.s32.totalorder %s32, 0
      %p189 = por %p187, %p188
      %p190 = scmp.ne.s32.totalorder %s178, %s179
      %p191 = scmp.eq.s32.totalorder %s33, 1
      %p192 = por %p190, %p191
      %p194 = scmp.ne.s32.totalorder %s179, %s193
      %p195 = scmp.eq.s32.totalorder %s33, 0
      %p196 = por %p194, %p195
      %s198 = sadd.s32 %s197, 1
      %p201 = scmp.eq.s32.totalorder %s27, 1
      %p202 = scmp.ne.s32.totalorder %s197, %s199
      %p203 = scmp.eq.s32.totalorder %s27, 0
      %p204 = por %p202, %p203
      %p205 = scmp.ne.s32.totalorder %s197, %s199
      %p206 = scmp.eq.s32.totalorder %s32, 1
      %p207 = por %p205, %p206
      %p208 = scmp.ne.s32.totalorder %s199, %s200
      %p209 = scmp.eq.s32.totalorder %s32, 0
      %p210 = por %p208, %p209
      %p211 = scmp.ne.s32.totalorder %s199, %s200
      %p212 = scmp.eq.s32.totalorder %s33, 1
      %p213 = por %p211, %p212
      %p215 = scmp.ne.s32.totalorder %s200, %s214
      %p216 = scmp.eq.s32.totalorder %s33, 0
      %p217 = por %p215, %p216
      %s219 = sadd.s32 %s218, 1
      %p222 = scmp.eq.s32.totalorder %s27, 1
      %p223 = scmp.ne.s32.totalorder %s218, %s220
      %p224 = scmp.eq.s32.totalorder %s27, 0
      %p225 = por %p223, %p224
      %p226 = scmp.ne.s32.totalorder %s218, %s220
      %p227 = scmp.eq.s32.totalorder %s32, 1
      %p228 = por %p226, %p227
      %p229 = scmp.ne.s32.totalorder %s220, %s221
      %p230 = scmp.eq.s32.totalorder %s32, 0
      %p231 = por %p229, %p230
      %p232 = scmp.ne.s32.totalorder %s220, %s221
      %p233 = scmp.eq.s32.totalorder %s33, 1
      %p234 = por %p232, %p233
      %p236 = scmp.ne.s32.totalorder %s221, %s235
      %p237 = scmp.eq.s32.totalorder %s33, 0
      %p238 = por %p236, %p237
      %s240 = sadd.s32 %s239, 1
      %p243 = scmp.eq.s32.totalorder %s27, 1
      %p244 = scmp.ne.s32.totalorder %s239, %s241
      %p245 = scmp.eq.s32.totalorder %s27, 0
      %p246 = por %p244, %p245
      %p247 = scmp.ne.s32.totalorder %s239, %s241
      %p248 = scmp.eq.s32.totalorder %s32, 1
      %p249 = por %p247, %p248
      %p250 = scmp.ne.s32.totalorder %s241, %s242
      %p251 = scmp.eq.s32.totalorder %s32, 0
      %p252 = por %p250, %p251
      %p253 = scmp.ne.s32.totalorder %s241, %s242
      %p254 = scmp.eq.s32.totalorder %s33, 1
      %p255 = por %p253, %p254
      %p257 = scmp.ne.s32.totalorder %s242, %s256
      %p258 = scmp.eq.s32.totalorder %s33, 0
      %p259 = por %p257, %p258
      %s261 = sadd.s32 %s260, 1
      %p264 = scmp.eq.s32.totalorder %s27, 1
      %p265 = scmp.ne.s32.totalorder %s260, %s262
      %p266 = scmp.eq.s32.totalorder %s27, 0
      %p267 = por %p265, %p266
      %p268 = scmp.ne.s32.totalorder %s260, %s262
      %p269 = scmp.eq.s32.totalorder %s32, 1
      %p270 = por %p268, %p269
      %p271 = scmp.ne.s32.totalorder %s262, %s263
      %p272 = scmp.eq.s32.totalorder %s32, 0
      %p273 = por %p271, %p272
      %p274 = scmp.ne.s32.totalorder %s262, %s263
      %p275 = scmp.eq.s32.totalorder %s33, 1
      %p276 = por %p274, %p275
      %p278 = scmp.ne.s32.totalorder %s263, %s277
      %p279 = scmp.eq.s32.totalorder %s33, 0
      %p280 = por %p278, %p279
      %s282 = sadd.s32 %s281, 1
      %p285 = scmp.eq.s32.totalorder %s27, 1
      %p286 = scmp.ne.s32.totalorder %s281, %s283
      %p287 = scmp.eq.s32.totalorder %s27, 0
      %p288 = por %p286, %p287
      %p289 = scmp.ne.s32.totalorder %s281, %s283
      %p290 = scmp.eq.s32.totalorder %s32, 1
      %p291 = por %p289, %p290
      %p292 = scmp.ne.s32.totalorder %s283, %s284
      %p293 = scmp.eq.s32.totalorder %s32, 0
      %p294 = por %p292, %p293
      %p295 = scmp.ne.s32.totalorder %s283, %s284
      %p296 = scmp.eq.s32.totalorder %s33, 1
      %p297 = por %p295, %p296
      %p299 = scmp.ne.s32.totalorder %s284, %s298
      %p300 = scmp.eq.s32.totalorder %s33, 0
      %p301 = por %p299, %p300
      %s303 = sadd.s32 %s302, 1
      %p306 = scmp.eq.s32.totalorder %s27, 1
      %p307 = scmp.ne.s32.totalorder %s302, %s304
      %p308 = scmp.eq.s32.totalorder %s27, 0
      %p309 = por %p307, %p308
      %p310 = scmp.ne.s32.totalorder %s302, %s304
      %p311 = scmp.eq.s32.totalorder %s32, 1
      %p312 = por %p310, %p311
      %p313 = scmp.ne.s32.totalorder %s304, %s305
      %p314 = scmp.eq.s32.totalorder %s32, 0
      %p315 = por %p313, %p314
      %p316 = scmp.ne.s32.totalorder %s304, %s305
      %p317 = scmp.eq.s32.totalorder %s33, 1
      %p318 = por %p316, %p317
      %p320 = scmp.ne.s32.totalorder %s305, %s319
      %p321 = scmp.eq.s32.totalorder %s33, 0
      %p322 = por %p320, %p321
      %s323 = ssub.s32 %s27, %s34
      %p324 = scmp.eq.s32.totalorder %s323, 0
      %s326 = sadd.s32 %s325, 1
      %s327 = scalar_select %p324, %s325, %s326
      %p330 = pneg %p324
      %p331 = scmp.eq.s32.totalorder %s27, 1
      %p332 = por %p330, %p331
      %p333 = scmp.ne.s32.totalorder %s325, %s328
      %p334 = scmp.eq.s32.totalorder %s27, 0
      %p335 = por %p333, %p334
      %p336 = scmp.ne.s32.totalorder %s325, %s328
      %p337 = scmp.eq.s32.totalorder %s32, 1
      %p338 = por %p336, %p337
      %p339 = scmp.ne.s32.totalorder %s328, %s329
      %p340 = scmp.eq.s32.totalorder %s32, 0
      %p341 = por %p339, %p340
      %p342 = scmp.ne.s32.totalorder %s328, %s329
      %p343 = scmp.eq.s32.totalorder %s33, 1
      %p344 = por %p342, %p343
      %p346 = scmp.ne.s32.totalorder %s329, %s345
      %p347 = scmp.eq.s32.totalorder %s33, 0
      %p348 = por %p346, %p347
      %s349 = ssub.s32 %s27, %s34
      %p350 = scmp.eq.s32.totalorder %s349, 0
      %s352 = sadd.s32 %s351, 1
      %s353 = scalar_select %p350, %s351, %s352
      %p356 = pneg %p350
      %p357 = scmp.eq.s32.totalorder %s27, 1
      %p358 = por %p356, %p357
      %p359 = scmp.ne.s32.totalorder %s351, %s354
      %p360 = scmp.eq.s32.totalorder %s27, 0
      %p361 = por %p359, %p360
      %p362 = scmp.ne.s32.totalorder %s351, %s354
      %p363 = scmp.eq.s32.totalorder %s32, 1
      %p364 = por %p362, %p363
      %p365 = scmp.ne.s32.totalorder %s354, %s355
      %p366 = scmp.eq.s32.totalorder %s32, 0
      %p367 = por %p365, %p366
      %p368 = scmp.ne.s32.totalorder %s354, %s355
      %p369 = scmp.eq.s32.totalorder %s33, 1
      %p370 = por %p368, %p369
      %p372 = scmp.ne.s32.totalorder %s355, %s371
      %p373 = scmp.eq.s32.totalorder %s33, 0
      %p374 = por %p372, %p373
      %p375 = scmp.le.s32.totalorder 1, %s27
      %p376 = scmp.lt.s32.totalorder %s27, 3
      %p377 = pnand %p375, %p376
      %p378 = pneg %p377
      // Predicated region
      $region9: #{pips_conv_block.1} parent=5 // pred_check
        _
      $region10: #{pips_conv_block.1} parent=5 // pred_check_branch
        %380 = sbr.rel (%p377) target = $region12
      $region11: #{pips_conv_block.1} parent=5 // pred_region
        %s381 = ssub.s32 %s27, 1
        // Predicated region
        $region13: #{pips_conv_block.1} parent=11 // pred_check
          %p382 = pneg %p126
        $region14: #{pips_conv_block.1} parent=11 // pred_check_branch
          %384 = sbr.rel (%p382) target = $region16
        $region15: #{pips_conv_block.1} parent=11 // pred_region
          _
        $region16: #{pips_conv_block.1} parent=11 // pred_fallthru
          _
        // Predicated region
        $region17: #{pips_conv_block.1} parent=11 // pred_check
          %p385 = pneg %p147
        $region18: #{pips_conv_block.1} parent=11 // pred_check_branch
          %387 = sbr.rel (%p385) target = $region20
        $region19: #{pips_conv_block.1} parent=11 // pred_region
          _
        $region20: #{pips_conv_block.1} parent=11 // pred_fallthru
          _
        // Predicated region
        $region21: #{pips_conv_block.1} parent=11 // pred_check
          %p388 = pneg %p168
        $region22: #{pips_conv_block.1} parent=11 // pred_check_branch
          %390 = sbr.rel (%p388) target = $region24
        $region23: #{pips_conv_block.1} parent=11 // pred_region
          _
        $region24: #{pips_conv_block.1} parent=11 // pred_fallthru
          _
        // Predicated region
        $region25: #{pips_conv_block.1} parent=11 // pred_check
          %p391 = pneg %p189
        $region26: #{pips_conv_block.1} parent=11 // pred_check_branch
          %393 = sbr.rel (%p391) target = $region28
        $region27: #{pips_conv_block.1} parent=11 // pred_region
          _
        $region28: #{pips_conv_block.1} parent=11 // pred_fallthru
          _
        // Predicated region
        $region29: #{pips_conv_block.1} parent=11 // pred_check
          %p394 = pneg %p210
        $region30: #{pips_conv_block.1} parent=11 // pred_check_branch
          %396 = sbr.rel (%p394) target = $region32
        $region31: #{pips_conv_block.1} parent=11 // pred_region
          _
        $region32: #{pips_conv_block.1} parent=11 // pred_fallthru
          _
        // Predicated region
        $region33: #{pips_conv_block.1} parent=11 // pred_check
          %p397 = pneg %p231
        $region34: #{pips_conv_block.1} parent=11 // pred_check_branch
          %399 = sbr.rel (%p397) target = $region36
        $region35: #{pips_conv_block.1} parent=11 // pred_region
          _
        $region36: #{pips_conv_block.1} parent=11 // pred_fallthru
          _
        // Predicated region
        $region37: #{pips_conv_block.1} parent=11 // pred_check
          %p400 = pneg %p252
        $region38: #{pips_conv_block.1} parent=11 // pred_check_branch
          %402 = sbr.rel (%p400) target = $region40
        $region39: #{pips_conv_block.1} parent=11 // pred_region
          _
        $region40: #{pips_conv_block.1} parent=11 // pred_fallthru
          _
        // Predicated region
        $region41: #{pips_conv_block.1} parent=11 // pred_check
          %p403 = pneg %p273
        $region42: #{pips_conv_block.1} parent=11 // pred_check_branch
          %405 = sbr.rel (%p403) target = $region44
        $region43: #{pips_conv_block.1} parent=11 // pred_region
          _
        $region44: #{pips_conv_block.1} parent=11 // pred_fallthru
          _
        // Predicated region
        $region45: #{pips_conv_block.1} parent=11 // pred_check
          %p406 = pneg %p294
        $region46: #{pips_conv_block.1} parent=11 // pred_check_branch
          %408 = sbr.rel (%p406) target = $region48
        $region47: #{pips_conv_block.1} parent=11 // pred_region
          _
        $region48: #{pips_conv_block.1} parent=11 // pred_fallthru
          _
        // Predicated region
        $region49: #{pips_conv_block.1} parent=11 // pred_check
          %p409 = pneg %p315
        $region50: #{pips_conv_block.1} parent=11 // pred_check_branch
          %411 = sbr.rel (%p409) target = $region52
        $region51: #{pips_conv_block.1} parent=11 // pred_region
          _
        $region52: #{pips_conv_block.1} parent=11 // pred_fallthru
          _
      $region12: #{pips_conv_block.1} parent=5 // pred_fallthru
        _
      %p412 = scmp.lt.s32.totalorder %s27, 2
      // Predicated region
      $region53: #{pips_conv_block.1} parent=5 // pred_check
        %p413 = pneg %p412
      $region54: #{pips_conv_block.1} parent=5 // pred_check_branch
        %415 = sbr.rel (%p413) target = $region56
      $region55: #{pips_conv_block.1} parent=5 // pred_region
        // Predicated region
        $region57: #{pips_conv_block.1} parent=55 // pred_check
          %p416 = pneg %p47
        $region58: #{pips_conv_block.1} parent=55 // pred_check_branch
          %418 = sbr.rel (%p416) target = $region60
        $region59: #{pips_conv_block.1} parent=55 // pred_region
          %p419 = scmp.lt.s32.totalorder %s27, 1
          %s420 = scalar_select %p419, %s27, 1
          %s421 = smul.addr %s420, 8
          %s422 = scalar_lea.vmem %s0, %s421
        $region60: #{pips_conv_block.1} parent=55 // pred_fallthru
          _
        // Predicated region
        $region61: #{pips_conv_block.1} parent=55 // pred_check
          %p423 = pneg %p73
        $region62: #{pips_conv_block.1} parent=55 // pred_check_branch
          %425 = sbr.rel (%p423) target = $region64
        $region63: #{pips_conv_block.1} parent=55 // pred_region
          %p426 = scmp.lt.s32.totalorder %s27, 1
          %s427 = scalar_select %p426, %s27, 1
          %s428 = smul.addr %s427, 2
          %s429 = scalar_lea.vmem %s1, %s428
        $region64: #{pips_conv_block.1} parent=55 // pred_fallthru
          _
        // Predicated region
        $region65: #{pips_conv_block.1} parent=55 // pred_check
          %p430 = pneg %p99
        $region66: #{pips_conv_block.1} parent=55 // pred_check_branch
          %432 = sbr.rel (%p430) target = $region68
        $region67: #{pips_conv_block.1} parent=55 // pred_region
          %p433 = scmp.lt.s32.totalorder %s27, 1
          %s434 = scalar_select %p433, %s27, 1
          %s435 = smul.addr %s434, 2
          %s436 = scalar_lea.vmem %s2, %s435
        $region68: #{pips_conv_block.1} parent=55 // pred_fallthru
          _
      $region56: #{pips_conv_block.1} parent=5 // pred_fallthru
        _
      %p437 = scmp.le.s32.totalorder 1, %s27
      %p438 = scmp.lt.s32.totalorder %s27, 3
      %p439 = pnand %p437, %p438
      %p440 = pneg %p439
      // Predicated region
      $region69: #{pips_conv_block.1} parent=5 // pred_check
        _
      $region70: #{pips_conv_block.1} parent=5 // pred_check_branch
        %442 = sbr.rel (%p439) target = $region72
      $region71: #{pips_conv_block.1} parent=5 // pred_region
        %s443 = ssub.s32 %s27, 1
        %p444 = scmp.lt.s32.totalorder %s32, 1
        %s445 = scalar_select %p444, %s32, 1
        %s446 = smul.addr %s445, 8
        %s447 = scalar_lea.vmem %s0, %s446
        %p448 = pneg %p53
        %p449 = pneg %p50
        %p450 = scmp.lt.s32.totalorder %s32, 1
        %s451 = scalar_select %p450, %s32, 1
        %s452 = smul.addr %s451, 2
        %s453 = scalar_lea.vmem %s1, %s452
        %p454 = pneg %p79
        %p455 = pneg %p76
        %p456 = scmp.lt.s32.totalorder %s32, 1
        %s457 = scalar_select %p456, %s32, 1
        %s458 = smul.addr %s457, 2
        %s459 = scalar_lea.vmem %s2, %s458
        %p460 = pneg %p105
        %p461 = pneg %p102
        %p462 = pneg %p126
        %p463 = pneg %p123
        %p464 = pneg %p147
        %p465 = pneg %p144
        %p466 = pneg %p168
        %p467 = pneg %p165
        %p468 = pneg %p189
        %p469 = pneg %p186
        %p470 = pneg %p210
        %p471 = pneg %p207
        %p472 = pneg %p231
        %p473 = pneg %p228
        %p474 = pneg %p252
        %p475 = pneg %p249
        %p476 = pneg %p273
        %p477 = pneg %p270
        %p478 = pneg %p294
        %p479 = pneg %p291
        %p480 = pneg %p315
        %p481 = pneg %p312
        %p482 = pneg %p341
        %p483 = pneg %p338
        %s484 = sand.u32 %s328, 1
        %s485 = scalar_lea.sflag [#allocation5], %s484
        %s486 = sand.u32 %s328, 1
        %s487 = smul.addr %s486, 8
        %s488 = scalar_lea.vmem [#allocation4], %s487
        %p489 = pneg %p367
        %p490 = pneg %p364
        %s491 = sand.u32 %s354, 1
        %s492 = scalar_lea.sflag [#allocation7], %s491
        %s493 = sand.u32 %s354, 1
        %s494 = smul.addr %s493, 2
        %s495 = scalar_lea.vmem [#allocation6], %s494
        %p496 = scmp.lt.s32.totalorder %s32, 1
        %s497 = scalar_select %p496, %s32, 1
        %s498 = smul.addr %s497, 8
        %s499 = scalar_lea.vmem %s0, %s498
        %p500 = scmp.lt.s32.totalorder %s32, 1
        %s501 = scalar_select %p500, %s32, 1
        %s502 = smul.addr %s501, 2
        %s503 = scalar_lea.vmem %s1, %s502
        %p504 = scmp.lt.s32.totalorder %s32, 1
        %s505 = scalar_select %p504, %s32, 1
        %s506 = smul.addr %s505, 2
        %s507 = scalar_lea.vmem %s2, %s506
        %v509 = vld [vmem:[%s499] sm:$0xff]
        %vm510 = vcmask 130048
        %v511 = vsel %vm510, %v509, 0.0
        %512 = vadd.xlane.f32.xlu0 %v511
        %v513 = vpop.xlane.xlu0 %512
        %v514 = vrcp.pop 16.0
        %v515 = vmul.f32 %v513, %v514
        %v516 = vsub.f32 %v509, %v515
        %v517 = vmul.f32 %v516, %v516
        %v518 = vsel %vm510, %v517, 0.0
        %519 = vadd.xlane.f32.xlu0 %v518
        %v520 = vpop.xlane.xlu0 %519
        %v521 = vmul.f32 %v520, %v514
        %v522 = vadd.f32 %v521, 1e-05
        %v523 = vrsqrt.pop %v522
        %v524 = vmul.f32 %v516, %v523
        %v525 = vld [vmem:[%s3] sm:$0x1]
        %v527 = vlaneseq
        %v528 = vshrl.u32 %v527, 7
        %v529 = vsub.s32 0, %v528
        %v530 = vrot.slane %v525, %v529
        %v532 = vmul.f32 %v524, %v530
        %v533 = vpack.c.bf16 %v532, %v532
        %v534 = vld [vmem:[%s503] sm:$0x3]
        %v535 = vpack.c.bf16 %v534, %v534
        %vm536 = vcmask 122880
        %537 = vst.msk [vmem:[#allocation2] sm:$0x1] %vm536, %v535
        %v539 = vunpack.c.l.b16 %v533
        %v540 = vpack.c.b16 %v539, %v539
        %v541 = vrot.slane %v540, 7
        %v542 = vrot.slane %v541, 4
        %vm545 = vcmask 125953
        %546 = vst.msk [vmem:[#allocation2] sm:$0xe] %vm545, %v541
        %547 = vst.msk [vmem:[#allocation2 + $0x4] sm:$0x1] %vm536, %v542
        %s548 = scalar_lea.vmem %s4, 16
        %v549 = vld [vmem:[%s548] sm:$0xf]
        %v550 = vld [vmem:[%s548 + $0x4] sm:$0xf]
        %v551 = vld [vmem:[#allocation2] sm:$0xf]
        %v552 = vld [vmem:[%s4] sm:$0xf]
        %v553 = vld [vmem:[%s4 + $0x4] sm:$0xf]
        %v556 = vunpack.c.l.b16 %v552
        %v557 = vunpack.c.l.b16 %v553
        %v558 = vpack.c.b16 %v557, %v556
        %v561 = vsel %vm510, %v551, 0
        %563 = vmatprep.subr.bf16.mxu0 0
        %564 = vmatpush1.bf16.msra.mxu0 0
        %565 = vmatprep.subr.bf16.mxu0 0
        %566 = vmatpush1.bf16.msra.mxu0 0
        %567 = vmatprep.subr.bf16.mxu0 0
        %568 = vmatpush1.bf16.msra.mxu0 0
        %569 = vmatprep.subr.bf16.mxu0 0
        %570 = vmatpush1.bf16.msra.mxu0 0
        %571 = vmatprep.subr.bf16.mxu0 0
        %572 = vmatpush1.bf16.msra.mxu0 0
        %573 = vmatprep.subr.bf16.mxu0 0
        %574 = vmatpush1.bf16.msra.mxu0 0
        %575 = vmatprep.subr.bf16.mxu0 0
        %576 = vmatpush1.bf16.msra.mxu0 0
        %577 = vmatprep.subr.bf16.mxu0 0
        %578 = vmatpush1.bf16.msra.mxu0 %v558
        %579 = vmatprep.subr.bf16.mxu0 0
        %580 = vmatpush2.bf16.msra.mxu0 0
        %581 = vmatprep.subr.bf16.mxu0 0
        %582 = vmatpush2.bf16.msra.mxu0 0
        %583 = vmatprep.subr.bf16.mxu0 0
        %584 = vmatpush2.bf16.msra.mxu0 0
        %585 = vmatprep.subr.bf16.mxu0 0
        %586 = vmatpush2.bf16.msra.mxu0 0
        %587 = vmatprep.subr.bf16.mxu0 0
        %588 = vmatpush2.bf16.msra.mxu0 0
        %589 = vmatprep.subr.bf16.mxu0 0
        %590 = vmatpush2.bf16.msra.mxu0 0
        %591 = vmatprep.subr.bf16.mxu0 0
        %592 = vmatpush2.bf16.msra.mxu0 0
        %593 = vmatprep.subr.bf16.mxu0 0
        %594 = vmatpush2.bf16.msra.mxu0 0
        %595 = vmatprep.mubr.bf16.mxu0 0
        %596 = vmatmul.mubr.bf16.gmra.mxu0 %v561
        %v597 = vpop.f32.mrf.mxu0
        %v598 = vadd.f32 0.0, %v597
        %v599 = vpop.f32.mrf.mxu0
        %v600 = vpop.f32.mrf.mxu0
        %v601 = vpop.f32.mrf.mxu0
        %602 = vdwg.mxu0
        %v605 = vunpack.c.l.b16 %v549
        %v606 = vunpack.c.l.b16 %v550
        %v607 = vpack.c.b16 %v606, %v605
        %v610 = vsel %vm510, %v533, 0
        %612 = vmatprep.subr.bf16.mxu0 0
        %613 = vmatpush1.bf16.msra.mxu0 0
        %614 = vmatprep.subr.bf16.mxu0 0
        %615 = vmatpush1.bf16.msra.mxu0 0
        %616 = vmatprep.subr.bf16.mxu0 0
        %617 = vmatpush1.bf16.msra.mxu0 0
        %618 = vmatprep.subr.bf16.mxu0 0
        %619 = vmatpush1.bf16.msra.mxu0 0
        %620 = vmatprep.subr.bf16.mxu0 0
        %621 = vmatpush1.bf16.msra.mxu0 0
        %622 = vmatprep.subr.bf16.mxu0 0
        %623 = vmatpush1.bf16.msra.mxu0 0
        %624 = vmatprep.subr.bf16.mxu0 0
        %625 = vmatpush1.bf16.msra.mxu0 0
        %626 = vmatprep.subr.bf16.mxu0 0
        %627 = vmatpush1.bf16.msra.mxu0 %v607
        %628 = vmatprep.subr.bf16.mxu0 0
        %629 = vmatpush2.bf16.msra.mxu0 0
        %630 = vmatprep.subr.bf16.mxu0 0
        %631 = vmatpush2.bf16.msra.mxu0 0
        %632 = vmatprep.subr.bf16.mxu0 0
        %633 = vmatpush2.bf16.msra.mxu0 0
        %634 = vmatprep.subr.bf16.mxu0 0
        %635 = vmatpush2.bf16.msra.mxu0 0
        %636 = vmatprep.subr.bf16.mxu0 0
        %637 = vmatpush2.bf16.msra.mxu0 0
        %638 = vmatprep.subr.bf16.mxu0 0
        %639 = vmatpush2.bf16.msra.mxu0 0
        %640 = vmatprep.subr.bf16.mxu0 0
        %641 = vmatpush2.bf16.msra.mxu0 0
        %642 = vmatprep.subr.bf16.mxu0 0
        %643 = vmatpush2.bf16.msra.mxu0 0
        %644 = vmatprep.mubr.bf16.mxu0 0
        %645 = vmatmul.mubr.bf16.gmra.mxu0 %v610
        %v646 = vpop.f32.mrf.mxu0
        %v647 = vadd.f32 %v598, %v646
        %v648 = vpop.f32.mrf.mxu0
        %v649 = vpop.f32.mrf.mxu0
        %v650 = vpop.f32.mrf.mxu0
        %651 = vdwg.mxu0
        %v652 = vld [vmem:[#allocation2] sm:$0xf]
        %v653 = vld [vmem:[#allocation2 + $0x4] sm:$0x1]
        %s654 = scalar_lea.vmem %s4, 8
        %v655 = vld [vmem:[%s654] sm:$0xf]
        %v656 = vld [vmem:[%s654 + $0x4] sm:$0xf]
        %v659 = vunpack.c.l.b16 %v652
        %v660 = vunpack.c.l.b16 %v653
        %v661 = vpack.c.b16 %v660, %v659
        %v663 = vshrl.u32 %v661, 16
        %v665 = vshll.u32 %v661, 16
        %v667 = vrot.slane %v665, 1
        %v668 = vor.u32 %v663, %v667
        %v671 = vunpack.c.l.b16 %v655
        %v672 = vunpack.c.l.b16 %v656
        %v673 = vpack.c.b16 %v672, %v671
        %v676 = vsel %vm510, %v668, 0
        %678 = vmatprep.subr.bf16.mxu0 0
        %679 = vmatpush1.bf16.msra.mxu0 0
        %680 = vmatprep.subr.bf16.mxu0 0
        %681 = vmatpush1.bf16.msra.mxu0 0
        %682 = vmatprep.subr.bf16.mxu0 0
        %683 = vmatpush1.bf16.msra.mxu0 0
        %684 = vmatprep.subr.bf16.mxu0 0
        %685 = vmatpush1.bf16.msra.mxu0 0
        %686 = vmatprep.subr.bf16.mxu0 0
        %687 = vmatpush1.bf16.msra.mxu0 0
        %688 = vmatprep.subr.bf16.mxu0 0
        %689 = vmatpush1.bf16.msra.mxu0 0
        %690 = vmatprep.subr.bf16.mxu0 0
        %691 = vmatpush1.bf16.msra.mxu0 0
        %692 = vmatprep.subr.bf16.mxu0 0
        %693 = vmatpush1.bf16.msra.mxu0 %v673
        %694 = vmatprep.subr.bf16.mxu0 0
        %695 = vmatpush2.bf16.msra.mxu0 0
        %696 = vmatprep.subr.bf16.mxu0 0
        %697 = vmatpush2.bf16.msra.mxu0 0
        %698 = vmatprep.subr.bf16.mxu0 0
        %699 = vmatpush2.bf16.msra.mxu0 0
        %700 = vmatprep.subr.bf16.mxu0 0
        %701 = vmatpush2.bf16.msra.mxu0 0
        %702 = vmatprep.subr.bf16.mxu0 0
        %703 = vmatpush2.bf16.msra.mxu0 0
        %704 = vmatprep.subr.bf16.mxu0 0
        %705 = vmatpush2.bf16.msra.mxu0 0
        %706 = vmatprep.subr.bf16.mxu0 0
        %707 = vmatpush2.bf16.msra.mxu0 0
        %708 = vmatprep.subr.bf16.mxu0 0
        %709 = vmatpush2.bf16.msra.mxu0 0
        %710 = vmatprep.mubr.bf16.mxu0 0
        %711 = vmatmul.mubr.bf16.gmra.mxu0 %v676
        %v712 = vpop.f32.mrf.mxu0
        %v713 = vadd.f32 0.0, %v712
        %v714 = vpop.f32.mrf.mxu0
        %v715 = vpop.f32.mrf.mxu0
        %v716 = vpop.f32.mrf.mxu0
        %717 = vdwg.mxu0
        %v718 = vadd.f32 %v647, %v713
        %v719 = vld [vmem:[%s5] sm:$0x1]
        %v721 = vlaneseq
        %v722 = vshrl.u32 %v721, 7
        %v723 = vsub.s32 0, %v722
        %v724 = vrot.slane %v719, %v723
        %v726 = vadd.f32 %v718, %v724
        %v727 = vmul.f32 %v726, 0.5
        %v728 = vmul.f32 %v726, 0.044715
        %v729 = vmul.f32 %v728, %v726
        %v730 = vmul.f32 %v729, %v726
        %v731 = vadd.f32 %v726, %v730
        %v732 = vmul.f32 %v731, 0.7978846
        %v733 = vtanh.pop %v732
        %v734 = vadd.f32 %v733, 1.0
        %v735 = vmul.f32 %v727, %v734
        %v736 = vpack.c.bf16 %v735, %v735
        %v737 = vld [vmem:[%s507] sm:$0x3]
        %v738 = vpack.c.bf16 %v737, %v737
        %vm739 = vcmask 516096
        %740 = vst.msk [vmem:[#allocation3] sm:$0x1] %vm739, %v738
        %v742 = vunpack.c.l.b16 %v736
        %v743 = vpack.c.b16 %v742, %v742
        %v744 = vrot.slane %v743, 7
        %v745 = vrot.slane %v744, 4
        %vm748 = vcmask 519169
        %749 = vst.msk [vmem:[#allocation3] sm:$0xe] %vm748, %v744
        %750 = vst.msk [vmem:[#allocation3 + $0x4] sm:$0x1] %vm739, %v745
        %s751 = scalar_lea.vmem %s6, 64
        %v752 = vld [vmem:[%s751] sm:$0xf]
        %v753 = vld [vmem:[%s751 + $0x4] sm:$0xf]
        %v754 = vld [vmem:[%s751 + $0x8] sm:$0xf]
        %v755 = vld [vmem:[%s751 + $0xc] sm:$0xf]
        %v756 = vld [vmem:[%s751 + $0x10] sm:$0xf]
        %v757 = vld [vmem:[%s751 + $0x14] sm:$0xf]
        %v758 = vld [vmem:[%s751 + $0x18] sm:$0xf]
        %v759 = vld [vmem:[%s751 + $0x1c] sm:$0xf]
        %v760 = vld [vmem:[#allocation3] sm:$0xf]
        %v761 = vld [vmem:[%s6] sm:$0xf]
        %v762 = vld [vmem:[%s6 + $0x4] sm:$0xf]
        %v763 = vld [vmem:[%s6 + $0x8] sm:$0xf]
        %v764 = vld [vmem:[%s6 + $0xc] sm:$0xf]
        %v765 = vld [vmem:[%s6 + $0x10] sm:$0xf]
        %v766 = vld [vmem:[%s6 + $0x14] sm:$0xf]
        %v767 = vld [vmem:[%s6 + $0x18] sm:$0xf]
        %v768 = vld [vmem:[%s6 + $0x1c] sm:$0xf]
        %v777 = vunpack.c.l.b16 %v761
        %v778 = vunpack.c.l.b16 %v762
        %v779 = vunpack.c.l.b16 %v763
        %v780 = vunpack.c.l.b16 %v764
        %v781 = vunpack.c.l.b16 %v765
        %v782 = vunpack.c.l.b16 %v766
        %v783 = vunpack.c.l.b16 %v767
        %v784 = vunpack.c.l.b16 %v768
        %v785 = vpack.c.b16 %v778, %v777
        %v786 = vpack.c.b16 %v780, %v779
        %v787 = vpack.c.b16 %v782, %v781
        %v788 = vpack.c.b16 %v784, %v783
        %vm793 = vcmask 523264
        %v795 = vsel %vm793, %v760, 0
        %797 = vmatprep.subr.bf16.mxu0 0
        %798 = vmatpush1.bf16.msra.mxu0 0
        %799 = vmatprep.subr.bf16.mxu0 0
        %800 = vmatpush1.bf16.msra.mxu0 0
        %801 = vmatprep.subr.bf16.mxu0 0
        %802 = vmatpush1.bf16.msra.mxu0 0
        %803 = vmatprep.subr.bf16.mxu0 0
        %804 = vmatpush1.bf16.msra.mxu0 0
        %805 = vmatprep.subr.bf16.mxu0 0
        %806 = vmatpush1.bf16.msra.mxu0 %v788
        %807 = vmatprep.subr.bf16.mxu0 0
        %808 = vmatpush1.bf16.msra.mxu0 %v787
        %809 = vmatprep.subr.bf16.mxu0 0
        %810 = vmatpush1.bf16.msra.mxu0 %v786
        %811 = vmatprep.subr.bf16.mxu0 0
        %812 = vmatpush1.bf16.msra.mxu0 %v785
        %813 = vmatprep.subr.bf16.mxu0 0
        %814 = vmatpush2.bf16.msra.mxu0 0
        %815 = vmatprep.subr.bf16.mxu0 0
        %816 = vmatpush2.bf16.msra.mxu0 0
        %817 = vmatprep.subr.bf16.mxu0 0
        %818 = vmatpush2.bf16.msra.mxu0 0
        %819 = vmatprep.subr.bf16.mxu0 0
        %820 = vmatpush2.bf16.msra.mxu0 0
        %821 = vmatprep.subr.bf16.mxu0 0
        %822 = vmatpush2.bf16.msra.mxu0 0
        %823 = vmatprep.subr.bf16.mxu0 0
        %824 = vmatpush2.bf16.msra.mxu0 0
        %825 = vmatprep.subr.bf16.mxu0 0
        %826 = vmatpush2.bf16.msra.mxu0 0
        %827 = vmatprep.subr.bf16.mxu0 0
        %828 = vmatpush2.bf16.msra.mxu0 0
        %829 = vmatprep.mubr.bf16.mxu0 0
        %830 = vmatmul.mubr.bf16.gmra.mxu0 %v795
        %v831 = vpop.f32.mrf.mxu0
        %v832 = vadd.f32 0.0, %v831
        %v833 = vpop.f32.mrf.mxu0
        %v834 = vpop.f32.mrf.mxu0
        %v835 = vpop.f32.mrf.mxu0
        %836 = vdwg.mxu0
        %v845 = vunpack.c.l.b16 %v752
        %v846 = vunpack.c.l.b16 %v753
        %v847 = vunpack.c.l.b16 %v754
        %v848 = vunpack.c.l.b16 %v755
        %v849 = vunpack.c.l.b16 %v756
        %v850 = vunpack.c.l.b16 %v757
        %v851 = vunpack.c.l.b16 %v758
        %v852 = vunpack.c.l.b16 %v759
        %v853 = vpack.c.b16 %v846, %v845
        %v854 = vpack.c.b16 %v848, %v847
        %v855 = vpack.c.b16 %v850, %v849
        %v856 = vpack.c.b16 %v852, %v851
        %v862 = vsel %vm793, %v736, 0
        %864 = vmatprep.subr.bf16.mxu0 0
        %865 = vmatpush1.bf16.msra.mxu0 0
        %866 = vmatprep.subr.bf16.mxu0 0
        %867 = vmatpush1.bf16.msra.mxu0 0
        %868 = vmatprep.subr.bf16.mxu0 0
        %869 = vmatpush1.bf16.msra.mxu0 0
        %870 = vmatprep.subr.bf16.mxu0 0
        %871 = vmatpush1.bf16.msra.mxu0 0
        %872 = vmatprep.subr.bf16.mxu0 0
        %873 = vmatpush1.bf16.msra.mxu0 %v856
        %874 = vmatprep.subr.bf16.mxu0 0
        %875 = vmatpush1.bf16.msra.mxu0 %v855
        %876 = vmatprep.subr.bf16.mxu0 0
        %877 = vmatpush1.bf16.msra.mxu0 %v854
        %878 = vmatprep.subr.bf16.mxu0 0
        %879 = vmatpush1.bf16.msra.mxu0 %v853
        %880 = vmatprep.subr.bf16.mxu0 0
        %881 = vmatpush2.bf16.msra.mxu0 0
        %882 = vmatprep.subr.bf16.mxu0 0
        %883 = vmatpush2.bf16.msra.mxu0 0
        %884 = vmatprep.subr.bf16.mxu0 0
        %885 = vmatpush2.bf16.msra.mxu0 0
        %886 = vmatprep.subr.bf16.mxu0 0
        %887 = vmatpush2.bf16.msra.mxu0 0
        %888 = vmatprep.subr.bf16.mxu0 0
        %889 = vmatpush2.bf16.msra.mxu0 0
        %890 = vmatprep.subr.bf16.mxu0 0
        %891 = vmatpush2.bf16.msra.mxu0 0
        %892 = vmatprep.subr.bf16.mxu0 0
        %893 = vmatpush2.bf16.msra.mxu0 0
        %894 = vmatprep.subr.bf16.mxu0 0
        %895 = vmatpush2.bf16.msra.mxu0 0
        %896 = vmatprep.mubr.bf16.mxu0 0
        %897 = vmatmul.mubr.bf16.gmra.mxu0 %v862
        %v898 = vpop.f32.mrf.mxu0
        %v899 = vadd.f32 %v832, %v898
        %v900 = vpop.f32.mrf.mxu0
        %v901 = vpop.f32.mrf.mxu0
        %v902 = vpop.f32.mrf.mxu0
        %903 = vdwg.mxu0
        %v904 = vld [vmem:[#allocation3] sm:$0xf]
        %v905 = vld [vmem:[#allocation3 + $0x4] sm:$0x1]
        %s906 = scalar_lea.vmem %s6, 32
        %v907 = vld [vmem:[%s906] sm:$0xf]
        %v908 = vld [vmem:[%s906 + $0x4] sm:$0xf]
        %v909 = vld [vmem:[%s906 + $0x8] sm:$0xf]
        %v910 = vld [vmem:[%s906 + $0xc] sm:$0xf]
        %v911 = vld [vmem:[%s906 + $0x10] sm:$0xf]
        %v912 = vld [vmem:[%s906 + $0x14] sm:$0xf]
        %v913 = vld [vmem:[%s906 + $0x18] sm:$0xf]
        %v914 = vld [vmem:[%s906 + $0x1c] sm:$0xf]
        %v917 = vunpack.c.l.b16 %v904
        %v918 = vunpack.c.l.b16 %v905
        %v919 = vpack.c.b16 %v918, %v917
        %v921 = vshrl.u32 %v919, 16
        %v923 = vshll.u32 %v919, 16
        %v925 = vrot.slane %v923, 1
        %v926 = vor.u32 %v921, %v925
        %v935 = vunpack.c.l.b16 %v907
        %v936 = vunpack.c.l.b16 %v908
        %v937 = vunpack.c.l.b16 %v909
        %v938 = vunpack.c.l.b16 %v910
        %v939 = vunpack.c.l.b16 %v911
        %v940 = vunpack.c.l.b16 %v912
        %v941 = vunpack.c.l.b16 %v913
        %v942 = vunpack.c.l.b16 %v914
        %v943 = vpack.c.b16 %v936, %v935
        %v944 = vpack.c.b16 %v938, %v937
        %v945 = vpack.c.b16 %v940, %v939
        %v946 = vpack.c.b16 %v942, %v941
        %v952 = vsel %vm793, %v926, 0
        %954 = vmatprep.subr.bf16.mxu0 0
        %955 = vmatpush1.bf16.msra.mxu0 0
        %956 = vmatprep.subr.bf16.mxu0 0
        %957 = vmatpush1.bf16.msra.mxu0 0
        %958 = vmatprep.subr.bf16.mxu0 0
        %959 = vmatpush1.bf16.msra.mxu0 0
        %960 = vmatprep.subr.bf16.mxu0 0
        %961 = vmatpush1.bf16.msra.mxu0 0
        %962 = vmatprep.subr.bf16.mxu0 0
        %963 = vmatpush1.bf16.msra.mxu0 %v946
        %964 = vmatprep.subr.bf16.mxu0 0
        %965 = vmatpush1.bf16.msra.mxu0 %v945
        %966 = vmatprep.subr.bf16.mxu0 0
        %967 = vmatpush1.bf16.msra.mxu0 %v944
        %968 = vmatprep.subr.bf16.mxu0 0
        %969 = vmatpush1.bf16.msra.mxu0 %v943
        %970 = vmatprep.subr.bf16.mxu0 0
        %971 = vmatpush2.bf16.msra.mxu0 0
        %972 = vmatprep.subr.bf16.mxu0 0
        %973 = vmatpush2.bf16.msra.mxu0 0
        %974 = vmatprep.subr.bf16.mxu0 0
        %975 = vmatpush2.bf16.msra.mxu0 0
        %976 = vmatprep.subr.bf16.mxu0 0
        %977 = vmatpush2.bf16.msra.mxu0 0
        %978 = vmatprep.subr.bf16.mxu0 0
        %979 = vmatpush2.bf16.msra.mxu0 0
        %980 = vmatprep.subr.bf16.mxu0 0
        %981 = vmatpush2.bf16.msra.mxu0 0
        %982 = vmatprep.subr.bf16.mxu0 0
        %983 = vmatpush2.bf16.msra.mxu0 0
        %984 = vmatprep.subr.bf16.mxu0 0
        %985 = vmatpush2.bf16.msra.mxu0 0
        %986 = vmatprep.mubr.bf16.mxu0 0
        %987 = vmatmul.mubr.bf16.gmra.mxu0 %v952
        %v988 = vpop.f32.mrf.mxu0
        %v989 = vadd.f32 0.0, %v988
        %v990 = vpop.f32.mrf.mxu0
        %v991 = vpop.f32.mrf.mxu0
        %v992 = vpop.f32.mrf.mxu0
        %993 = vdwg.mxu0
        %v994 = vadd.f32 %v899, %v989
        %v995 = vld [vmem:[%s7] sm:$0x1]
        %v997 = vlaneseq
        %v998 = vshrl.u32 %v997, 7
        %v999 = vsub.s32 0, %v998
        %v1000 = vrot.slane %v995, %v999
        %v1002 = vadd.f32 %v994, %v1000
        %v1003 = vadd.f32 %v1002, %v509
        %vm1004 = vcmask 130054
        %1005 = vst.msk [vmem:[%s495 - $0x6] sm:$0xc0] %vm1004, %v532
        %1007 = vrot.lane.b32.xlu0 %v735, 16
        %v1008 = vpop.permute.xlu0 %1007
        %vm1010 = vcmask 654470
        %1011 = vst.msk [vmem:[%s495 - $0x6] sm:$0xc0] %vm1010, %v1008
        %v1012 = vsel %vm510, %v1003, 0.0
        %1013 = vadd.xlane.f32.xlu0 %v1012
        %v1014 = vpop.xlane.xlu0 %1013
        %v1015 = vmul.f32 %v1014, %v514
        %v1016 = vsub.f32 %v1003, %v1015
        %v1017 = vmul.f32 %v1016, %v1016
        %v1018 = vsel %vm510, %v1017, 0.0
        %1019 = vadd.xlane.f32.xlu0 %v1018
        %v1020 = vpop.xlane.xlu0 %1019
        %v1021 = vmul.f32 %v1020, %v514
        %v1022 = vadd.f32 %v1021, 1e-05
        %v1023 = vrsqrt.pop %v1022
        %v1024 = vmul.f32 %v1016, %v1023
        %v1025 = vld [vmem:[%s8] sm:$0x1]
        %v1027 = vlaneseq
        %v1028 = vshrl.u32 %v1027, 7
        %v1029 = vsub.s32 0, %v1028
        %v1030 = vrot.slane %v1025, %v1029
        %v1032 = vmul.f32 %v1024, %v1030
        %v1033 = vpack.c.bf16 %v1032, %v1032
        %v1034 = vld [vmem:[%s9] sm:$0xf]
        %v1035 = vld [vmem:[%s9 + $0x4] sm:$0xf]
        %v1036 = vld [vmem:[%s10] sm:$0x1]
        %v1038 = vlaneseq
        %v1039 = vshrl.u32 %v1038, 7
        %v1040 = vsub.s32 0, %v1039
        %v1041 = vrot.slane %v1036, %v1040
        %v1045 = vunpack.c.l.b16 %v1034
        %v1046 = vunpack.c.l.b16 %v1035
        %v1047 = vpack.c.b16 %v1046, %v1045
        %v1050 = vsel %vm510, %v1033, 0
        %1052 = vmatprep.subr.bf16.mxu0 0
        %1053 = vmatpush1.bf16.msra.mxu0 0
        %1054 = vmatprep.subr.bf16.mxu0 0
        %1055 = vmatpush1.bf16.msra.mxu0 0
        %1056 = vmatprep.subr.bf16.mxu0 0
        %1057 = vmatpush1.bf16.msra.mxu0 0
        %1058 = vmatprep.subr.bf16.mxu0 0
        %1059 = vmatpush1.bf16.msra.mxu0 0
        %1060 = vmatprep.subr.bf16.mxu0 0
        %1061 = vmatpush1.bf16.msra.mxu0 0
        %1062 = vmatprep.subr.bf16.mxu0 0
        %1063 = vmatpush1.bf16.msra.mxu0 0
        %1064 = vmatprep.subr.bf16.mxu0 0
        %1065 = vmatpush1.bf16.msra.mxu0 0
        %1066 = vmatprep.subr.bf16.mxu0 0
        %1067 = vmatpush1.bf16.msra.mxu0 %v1047
        %1068 = vmatprep.subr.bf16.mxu0 0
        %1069 = vmatpush2.bf16.msra.mxu0 0
        %1070 = vmatprep.subr.bf16.mxu0 0
        %1071 = vmatpush2.bf16.msra.mxu0 0
        %1072 = vmatprep.subr.bf16.mxu0 0
        %1073 = vmatpush2.bf16.msra.mxu0 0
        %1074 = vmatprep.subr.bf16.mxu0 0
        %1075 = vmatpush2.bf16.msra.mxu0 0
        %1076 = vmatprep.subr.bf16.mxu0 0
        %1077 = vmatpush2.bf16.msra.mxu0 0
        %1078 = vmatprep.subr.bf16.mxu0 0
        %1079 = vmatpush2.bf16.msra.mxu0 0
        %1080 = vmatprep.subr.bf16.mxu0 0
        %1081 = vmatpush2.bf16.msra.mxu0 0
        %1082 = vmatprep.subr.bf16.mxu0 0
        %1083 = vmatpush2.bf16.msra.mxu0 0
        %1084 = vmatprep.mubr.bf16.mxu0 0
        %1085 = vmatmul.mubr.bf16.gmra.mxu0 %v1050
        %v1086 = vpop.f32.mrf.mxu0
        %v1087 = vadd.f32 %v1041, %v1086
        %v1088 = vpop.f32.mrf.mxu0
        %v1089 = vpop.f32.mrf.mxu0
        %v1090 = vpop.f32.mrf.mxu0
        %1091 = vdwg.mxu0
        %v1092 = vmul.f32 %v1087, 0.5
        %v1093 = vmul.f32 %v1087, 0.044715
        %v1094 = vmul.f32 %v1093, %v1087
        %v1095 = vmul.f32 %v1094, %v1087
        %v1096 = vadd.f32 %v1087, %v1095
        %v1097 = vmul.f32 %v1096, 0.7978846
        %v1098 = vtanh.pop %v1097
        %v1099 = vadd.f32 %v1098, 1.0
        %v1100 = vmul.f32 %v1092, %v1099
        %v1101 = vpack.c.bf16 %v1100, %v1100
        %v1102 = vld [vmem:[%s11] sm:$0xf]
        %v1103 = vld [vmem:[%s11 + $0x4] sm:$0xf]
        %v1104 = vld [vmem:[%s11 + $0x8] sm:$0xf]
        %v1105 = vld [vmem:[%s11 + $0xc] sm:$0xf]
        %v1106 = vld [vmem:[%s11 + $0x10] sm:$0xf]
        %v1107 = vld [vmem:[%s11 + $0x14] sm:$0xf]
        %v1108 = vld [vmem:[%s11 + $0x18] sm:$0xf]
        %v1109 = vld [vmem:[%s11 + $0x1c] sm:$0xf]
        %v1110 = vld [vmem:[%s12] sm:$0x1]
        %v1112 = vlaneseq
        %v1113 = vshrl.u32 %v1112, 7
        %v1114 = vsub.s32 0, %v1113
        %v1115 = vrot.slane %v1110, %v1114
        %v1125 = vunpack.c.l.b16 %v1102
        %v1126 = vunpack.c.l.b16 %v1103
        %v1127 = vunpack.c.l.b16 %v1104
        %v1128 = vunpack.c.l.b16 %v1105
        %v1129 = vunpack.c.l.b16 %v1106
        %v1130 = vunpack.c.l.b16 %v1107
        %v1131 = vunpack.c.l.b16 %v1108
        %v1132 = vunpack.c.l.b16 %v1109
        %v1133 = vpack.c.b16 %v1126, %v1125
        %v1134 = vpack.c.b16 %v1128, %v1127
        %v1135 = vpack.c.b16 %v1130, %v1129
        %v1136 = vpack.c.b16 %v1132, %v1131
        %v1142 = vsel %vm793, %v1101, 0
        %1144 = vmatprep.subr.bf16.mxu0 0
        %1145 = vmatpush1.bf16.msra.mxu0 0
        %1146 = vmatprep.subr.bf16.mxu0 0
        %1147 = vmatpush1.bf16.msra.mxu0 0
        %1148 = vmatprep.subr.bf16.mxu0 0
        %1149 = vmatpush1.bf16.msra.mxu0 0
        %1150 = vmatprep.subr.bf16.mxu0 0
        %1151 = vmatpush1.bf16.msra.mxu0 0
        %1152 = vmatprep.subr.bf16.mxu0 0
        %1153 = vmatpush1.bf16.msra.mxu0 %v1136
        %1154 = vmatprep.subr.bf16.mxu0 0
        %1155 = vmatpush1.bf16.msra.mxu0 %v1135
        %1156 = vmatprep.subr.bf16.mxu0 0
        %1157 = vmatpush1.bf16.msra.mxu0 %v1134
        %1158 = vmatprep.subr.bf16.mxu0 0
        %1159 = vmatpush1.bf16.msra.mxu0 %v1133
        %1160 = vmatprep.subr.bf16.mxu0 0
        %1161 = vmatpush2.bf16.msra.mxu0 0
        %1162 = vmatprep.subr.bf16.mxu0 0
        %1163 = vmatpush2.bf16.msra.mxu0 0
        %1164 = vmatprep.subr.bf16.mxu0 0
        %1165 = vmatpush2.bf16.msra.mxu0 0
        %1166 = vmatprep.subr.bf16.mxu0 0
        %1167 = vmatpush2.bf16.msra.mxu0 0
        %1168 = vmatprep.subr.bf16.mxu0 0
        %1169 = vmatpush2.bf16.msra.mxu0 0
        %1170 = vmatprep.subr.bf16.mxu0 0
        %1171 = vmatpush2.bf16.msra.mxu0 0
        %1172 = vmatprep.subr.bf16.mxu0 0
        %1173 = vmatpush2.bf16.msra.mxu0 0
        %1174 = vmatprep.subr.bf16.mxu0 0
        %1175 = vmatpush2.bf16.msra.mxu0 0
        %1176 = vmatprep.mubr.bf16.mxu0 0
        %1177 = vmatmul.mubr.bf16.gmra.mxu0 %v1142
        %v1178 = vpop.f32.mrf.mxu0
        %v1179 = vadd.f32 %v1115, %v1178
        %v1180 = vpop.f32.mrf.mxu0
        %v1181 = vpop.f32.mrf.mxu0
        %v1182 = vpop.f32.mrf.mxu0
        %1183 = vdwg.mxu0
        %v1184 = vadd.f32 %v1179, %v1003
        %1185 = vst.msk [vmem:[%s488] sm:$0xff] %vm510, %v1184
        %s1186 = sand.u32 %s328, 1
        %s1187 = scalar_lea.sflag [#allocation5], %s1186
        %s1188 = sand.u32 %s328, 1
        %s1189 = smul.addr %s1188, 8
        %s1190 = scalar_lea.vmem [#allocation4], %s1189
        %s1191 = sand.u32 %s354, 1
        %s1192 = scalar_lea.sflag [#allocation7], %s1191
        %s1193 = sand.u32 %s354, 1
        %s1194 = smul.addr %s1193, 2
        %s1195 = scalar_lea.vmem [#allocation6], %s1194
        // Predicated region
        $region73: #{pips_conv_block.1} parent=71 // pred_check
          %p1196 = pneg %p338
        $region74: #{pips_conv_block.1} parent=71 // pred_check_branch
          %1198 = sbr.rel (%p1196) target = $region76
        $region75: #{pips_conv_block.1} parent=71 // pred_region
          %s1200 = ssub.s32 128, 128
          %1201 = vsyncadd %s1187, %s1200
          %s1202 = smul.addr %s32, 128
          %s1203 = scalar_lea.hbm %s13, %s1202
          %s1205 = sshll.u32 %s1190, 4
          %s1206 = int_to_ptr.vmem [resolvable:$true] %s1205
          %1208 = dma.vmem_to_hbm [thread:$0]  %s1206, 128, %s1203, %s1187
        $region76: #{pips_conv_block.1} parent=71 // pred_fallthru
          _
        // Predicated region
        $region77: #{pips_conv_block.1} parent=71 // pred_check
          %p1209 = pneg %p364
        $region78: #{pips_conv_block.1} parent=71 // pred_check_branch
          %1211 = sbr.rel (%p1209) target = $region80
        $region79: #{pips_conv_block.1} parent=71 // pred_region
          %s1213 = ssub.s32 32, 32
          %1214 = vsyncadd %s1192, %s1213
          %s1215 = smul.addr %s32, 32
          %s1216 = scalar_lea.hbm %s14, %s1215
          %s1218 = sshll.u32 %s1195, 4
          %s1219 = int_to_ptr.vmem [resolvable:$true] %s1218
          %1221 = dma.vmem_to_hbm [thread:$0]  %s1219, 32, %s1216, %s1192
        $region80: #{pips_conv_block.1} parent=71 // pred_fallthru
          _
      $region72: #{pips_conv_block.1} parent=5 // pred_fallthru
        _
      %p1222 = scmp.le.s32.totalorder 2, %s27
      // Predicated region
      $region81: #{pips_conv_block.1} parent=5 // pred_check
        %p1223 = pneg %p1222
      $region82: #{pips_conv_block.1} parent=5 // pred_check_branch
        %1225 = sbr.rel (%p1223) target = $region84
      $region83: #{pips_conv_block.1} parent=5 // pred_region
        %s1226 = ssub.s32 %s27, 2
        // Predicated region
        $region85: #{pips_conv_block.1} parent=83 // pred_check
          %p1227 = pneg %p344
        $region86: #{pips_conv_block.1} parent=83 // pred_check_branch
          %1229 = sbr.rel (%p1227) target = $region88
        $region87: #{pips_conv_block.1} parent=83 // pred_region
          %s1230 = sand.u32 %s329, 1
          %s1231 = scalar_lea.sflag [#allocation5], %s1230
          %s1232 = sand.u32 %s329, 1
          %s1233 = smul.addr %s1232, 8
          %s1234 = scalar_lea.vmem [#allocation4], %s1233
          %1235 = dma.done %s1231, 128
        $region88: #{pips_conv_block.1} parent=83 // pred_fallthru
          _
        // Predicated region
        $region89: #{pips_conv_block.1} parent=83 // pred_check
          %p1236 = pneg %p370
        $region90: #{pips_conv_block.1} parent=83 // pred_check_branch
          %1238 = sbr.rel (%p1236) target = $region92
        $region91: #{pips_conv_block.1} parent=83 // pred_region
          %s1239 = sand.u32 %s355, 1
          %s1240 = scalar_lea.sflag [#allocation7], %s1239
          %s1241 = sand.u32 %s355, 1
          %s1242 = smul.addr %s1241, 2
          %s1243 = scalar_lea.vmem [#allocation6], %s1242
          %1244 = dma.done %s1240, 32
        $region92: #{pips_conv_block.1} parent=83 // pred_fallthru
          _
      $region84: #{pips_conv_block.1} parent=5 // pred_fallthru
        _
    $region6: #{pips_conv_block.1} parent=1 // loop_footer
      %s31 = sadd.s32 1, %s27
    $region7: #{pips_conv_block.1} parent=1 // loop_footer_branch
      %26 = sbr.rel target = $region3
    $region8: #{pips_conv_block.1} parent=1 // loop_exit
      _
    %1245 = vsyncpa [#allocation5], 1
    %s1246 = scalar_lea.sflag [#allocation5], 1
    %1247 = vsyncpa %s1246, 1
    %1248 = vsyncpa [#allocation7], 1
    %s1249 = scalar_lea.sflag [#allocation7], 1
    %1250 = vsyncpa %s1249, 1

</llo_original>
